<compile_context>
chip_gen: v5e
topology: v5e:2x2
jax: 0.10.0
libtpu: 0.0.40
codegen_flags: <defaults>
</compile_context>

<pallas_src>
import numpy as np
import jax
import jax.numpy as jnp
from jax.experimental import pallas as pl
from jax.experimental.pallas import tpu as pltpu

NUM_CLASSES = 10
NZ = 100
NZ_PAD = 128                       # pad noise features to a full lane tile
INPUT_SIZE = (1, 28, 28)
OUT_DIM = int(np.prod(INPUT_SIZE))  # 784
OUT_PAD = 896                       # 7 * 128 -> lane-dense output stores
DIMS = [NZ, 128, 256, 512, 1024, OUT_DIM]
DIMS_PAD = [NZ_PAD, 128, 256, 512, 1024, OUT_PAD]
BN_EPS = 1e-5


def _leaky_relu(x, slope=0.2):
    return jnp.where(x > 0, x, slope * x)


def _batch_norm_folded(x, gamma, beta):
    # Training-mode BatchNorm1d folded to one scale/shift per feature:
    #   scale = gamma * rsqrt(var + eps), shift = beta - scale * mu
    mu = jnp.mean(x, axis=0, keepdims=True)
    d = x - mu
    var = jnp.mean(d * d, axis=0, keepdims=True)
    scale = gamma * jax.lax.rsqrt(var + BN_EPS)
    shift = beta - scale * mu
    return x * scale + shift


def generator_kernel(
    noise_ref,
    w1_ref, b1_ref,
    w2_ref, g2_ref, be2_ref,
    w3_ref, g3_ref, be3_ref,
    w4_ref, g4_ref, be4_ref,
    w5_ref, b5_ref,
    out_ref,
):
    # Activations kept in f32; cast to bf16 only at the MXU input (weights are
    # already bf16), accumulate in f32.
    x = noise_ref[...].astype(jnp.bfloat16)

    # Layer 1: Linear(nz, 128) + LeakyReLU
    h = jnp.dot(x, w1_ref[...], preferred_element_type=jnp.float32) + b1_ref[...]
    h = _leaky_relu(h)

    # Layer 2: Linear(128, 256) (bias canceled by BN) + BN + LeakyReLU
    h = jnp.dot(h.astype(jnp.bfloat16), w2_ref[...],
                preferred_element_type=jnp.float32)
    h = _leaky_relu(_batch_norm_folded(h, g2_ref[...], be2_ref[...]))

    # Layer 3: Linear(256, 512) (bias canceled by BN) + BN + LeakyReLU
    h = jnp.dot(h.astype(jnp.bfloat16), w3_ref[...],
                preferred_element_type=jnp.float32)
    h = _leaky_relu(_batch_norm_folded(h, g3_ref[...], be3_ref[...]))

    # Layer 4: Linear(512, 1024) (bias canceled by BN) + BN + LeakyReLU
    h = jnp.dot(h.astype(jnp.bfloat16), w4_ref[...],
                preferred_element_type=jnp.float32)
    h = _leaky_relu(_batch_norm_folded(h, g4_ref[...], be4_ref[...]))

    # Layer 5: Linear(1024, 784->896 padded) + Tanh (padded lanes are tanh(0)=0)
    h = jnp.dot(h.astype(jnp.bfloat16), w5_ref[...],
                preferred_element_type=jnp.float32) + b5_ref[...]
    out_ref[...] = jnp.tanh(h)


def init_params(key):
    """PyTorch-style init U(-1/sqrt(fan_in), 1/sqrt(fan_in)); weights padded to
    lane-friendly shapes (zero rows/cols) and stored as bfloat16."""
    lin = []
    for i in range(5):
        fan_in, fan_out = DIMS[i], DIMS[i + 1]
        pad_in, pad_out = DIMS_PAD[i], DIMS_PAD[i + 1]
        key, kw, kb = jax.random.split(key, 3)
        bound = 1.0 / np.sqrt(fan_in)
        w = jax.random.uniform(kw, (fan_in, fan_out), jnp.float32, -bound, bound)
        b = jax.random.uniform(kb, (1, fan_out), jnp.float32, -bound, bound)
        # Zero-pad to (pad_in, pad_out) / (1, pad_out): padded rows multiply
        # zero-padded activations, padded cols produce zero outputs -> exact.
        w = jnp.pad(w, ((0, pad_in - fan_in), (0, pad_out - fan_out)))
        b = jnp.pad(b, ((0, 0), (0, pad_out - fan_out)))
        lin.append((w.astype(jnp.bfloat16), b))
    # BatchNorm affine params (gamma=1, beta=0) for layers 2, 3, 4 outputs.
    bn = []
    for d in (256, 512, 1024):
        bn.append((jnp.ones((1, d), jnp.float32), jnp.zeros((1, d), jnp.float32)))
    return lin, bn


def generator_forward(noise, lin_params, bn_params):
    B = noise.shape[0]
    # b2/b3/b4 are exactly canceled by the BN batch-mean subtraction -> dropped.
    (w1, b1), (w2, _b2), (w3, _b3), (w4, _b4), (w5, b5) = lin_params
    (g2, be2), (g3, be3), (g4, be4) = bn_params

    # Lane-dense noise: pad feature dim 100 -> 128 with zeros.
    noise_p = jnp.pad(noise.astype(jnp.float32), ((0, 0), (0, NZ_PAD - NZ)))

    args = (noise_p,
            w1, b1,
            w2, g2, be2,
            w3, g3, be3,
            w4, g4, be4,
            w5, b5)

    # Everything fits comfortably in VMEM (~3 MiB of bf16 weights), so run the
    # whole MLP in a single grid point with full-array blocks.
    in_specs = [pl.BlockSpec(memory_space=pltpu.VMEM) for _ in args]

    flops = 2 * B * sum(DIMS_PAD[i] * DIMS_PAD[i + 1] for i in range(5))
    weight_bytes = 2 * sum(DIMS_PAD[i] * DIMS_PAD[i + 1] for i in range(5))  # bf16
    small_bytes = 4 * (2 * DIMS_PAD[1] + 2 * OUT_PAD          # b1, b5 (+slack)
                       + 2 * (256 + 512 + 1024))              # gamma/beta
    io_bytes = 4 * B * (NZ_PAD + OUT_PAD)
    cost = pl.CostEstimate(
        flops=flops,
        transcendentals=B * OUT_PAD,                          # tanh epilogue
        bytes_accessed=weight_bytes + small_bytes + io_bytes,
    )

    flat = pl.pallas_call(
        generator_kernel,
        out_shape=jax.ShapeDtypeStruct((B, OUT_PAD), jnp.float32),
        in_specs=in_specs,
        out_specs=pl.BlockSpec(memory_space=pltpu.VMEM),
        compiler_params=pltpu.CompilerParams(vmem_limit_bytes=32 << 20),
        cost_estimate=cost,
    )(*args)

    # Drop the zero-padded lanes, then reshape to NCHW like the PyTorch view.
    return flat[:, :OUT_DIM].reshape(B, *INPUT_SIZE)


if __name__ == "__main__":
    key = jax.random.PRNGKey(0)
    key, knoise = jax.random.split(key)

    B = 8  # small batch; >1 so training-mode BatchNorm is well-defined
    noise = jax.random.normal(knoise, (B, NZ), dtype=jnp.float32)

    lin_params, bn_params = init_params(key)

    out = generator_forward(noise, lin_params, bn_params)
    out = jax.block_until_ready(out)

    assert out.shape == (B, 1, 28, 28), out.shape
    assert out.dtype == jnp.float32
    assert bool(jnp.all(jnp.isfinite(out)))
    assert bool(jnp.all(jnp.abs(out) <= 1.0 + 1e-6))  # tanh range

    print("KERNEL_OK")
</pallas_src>

<mosaic_0001>
module attributes {stable_mosaic.version = 11 : i64} {
  func.func @generator_kernel(%arg0: memref<8x128xf32, #tpu.memory_space<vmem>>, %arg1: memref<128x128xbf16, #tpu.memory_space<vmem>>, %arg2: memref<1x128xf32, #tpu.memory_space<vmem>>, %arg3: memref<128x256xbf16, #tpu.memory_space<vmem>>, %arg4: memref<1x256xf32, #tpu.memory_space<vmem>>, %arg5: memref<1x256xf32, #tpu.memory_space<vmem>>, %arg6: memref<256x512xbf16, #tpu.memory_space<vmem>>, %arg7: memref<1x512xf32, #tpu.memory_space<vmem>>, %arg8: memref<1x512xf32, #tpu.memory_space<vmem>>, %arg9: memref<512x1024xbf16, #tpu.memory_space<vmem>>, %arg10: memref<1x1024xf32, #tpu.memory_space<vmem>>, %arg11: memref<1x1024xf32, #tpu.memory_space<vmem>>, %arg12: memref<1024x896xbf16, #tpu.memory_space<vmem>>, %arg13: memref<1x896xf32, #tpu.memory_space<vmem>>, %arg14: memref<8x896xf32, #tpu.memory_space<vmem>>) attributes {dimension_semantics = [], scalar_prefetch = 0 : i64, scratch_operands = 0 : i64, tpu.core_type = #tpu.core_type<tc>} {
    %c0 = arith.constant 0 : index
    %c0_0 = arith.constant 0 : index
    %0 = vector.load %arg0[%c0, %c0_0] : memref<8x128xf32, #tpu.memory_space<vmem>>, vector<8x128xf32>
    %1 = arith.truncf %0 : vector<8x128xf32> to vector<8x128xbf16>
    %c0_1 = arith.constant 0 : index
    %c0_2 = arith.constant 0 : index
    %2 = vector.load %arg1[%c0_1, %c0_2] : memref<128x128xbf16, #tpu.memory_space<vmem>>, vector<128x128xbf16>
    %cst = arith.constant dense<0.000000e+00> : vector<8x128xf32>
    %3 = tpu.matmul %1, %2, %cst {dimension_numbers = #tpu.dot_dimension_numbers<[1], [0], [0], [1], [0, 0, 1, 1], [], []>} : vector<8x128xbf16>, vector<128x128xbf16>, vector<8x128xf32> -> vector<8x128xf32>
    %c0_3 = arith.constant 0 : index
    %c0_4 = arith.constant 0 : index
    %4 = vector.load %arg2[%c0_3, %c0_4] : memref<1x128xf32, #tpu.memory_space<vmem>>, vector<1x128xf32>
    %5 = vector.broadcast %4 : vector<1x128xf32> to vector<8x128xf32>
    %6 = arith.addf %3, %5 : vector<8x128xf32>
    %cst_5 = arith.constant 0.000000e+00 : f32
    %7 = vector.broadcast %cst_5 : f32 to vector<8x128xf32>
    %8 = arith.cmpf ogt, %6, %7 : vector<8x128xf32>
    %cst_6 = arith.constant 2.000000e-01 : f32
    %9 = vector.broadcast %cst_6 : f32 to vector<8x128xf32>
    %10 = arith.mulf %9, %6 : vector<8x128xf32>
    %11 = arith.select %8, %6, %10 : vector<8x128xi1>, vector<8x128xf32>
    %12 = arith.truncf %11 : vector<8x128xf32> to vector<8x128xbf16>
    %c0_7 = arith.constant 0 : index
    %c0_8 = arith.constant 0 : index
    %13 = vector.load %arg3[%c0_7, %c0_8] : memref<128x256xbf16, #tpu.memory_space<vmem>>, vector<128x256xbf16>
    %cst_9 = arith.constant dense<0.000000e+00> : vector<8x256xf32>
    %14 = tpu.matmul %12, %13, %cst_9 {dimension_numbers = #tpu.dot_dimension_numbers<[1], [0], [0], [1], [0, 0, 1, 1], [], []>} : vector<8x128xbf16>, vector<128x256xbf16>, vector<8x256xf32> -> vector<8x256xf32>
    %c0_10 = arith.constant 0 : index
    %c0_11 = arith.constant 0 : index
    %15 = vector.load %arg4[%c0_10, %c0_11] : memref<1x256xf32, #tpu.memory_space<vmem>>, vector<1x256xf32>
    %c0_12 = arith.constant 0 : index
    %c0_13 = arith.constant 0 : index
    %16 = vector.load %arg5[%c0_12, %c0_13] : memref<1x256xf32, #tpu.memory_space<vmem>>, vector<1x256xf32>
    %cst_14 = arith.constant dense<0.000000e+00> : vector<256xf32>
    %17 = vector.multi_reduction <add>, %14, %cst_14 [0] : vector<8x256xf32> to vector<256xf32>
    %18 = vector.shape_cast %17 : vector<256xf32> to vector<1x256xf32>
    %cst_15 = arith.constant 8.000000e+00 : f32
    %19 = vector.broadcast %cst_15 : f32 to vector<1x256xf32>
    %20 = arith.divf %18, %19 : vector<1x256xf32>
    %21 = vector.broadcast %20 : vector<1x256xf32> to vector<8x256xf32>
    %22 = arith.subf %14, %21 : vector<8x256xf32>
    %23 = arith.mulf %22, %22 : vector<8x256xf32>
    %cst_16 = arith.constant dense<0.000000e+00> : vector<256xf32>
    %24 = vector.multi_reduction <add>, %23, %cst_16 [0] : vector<8x256xf32> to vector<256xf32>
    %25 = vector.shape_cast %24 : vector<256xf32> to vector<1x256xf32>
    %cst_17 = arith.constant 8.000000e+00 : f32
    %26 = vector.broadcast %cst_17 : f32 to vector<1x256xf32>
    %27 = arith.divf %25, %26 : vector<1x256xf32>
    %cst_18 = arith.constant 9.99999974E-6 : f32
    %28 = vector.broadcast %cst_18 : f32 to vector<1x256xf32>
    %29 = arith.addf %27, %28 : vector<1x256xf32>
    %30 = math.rsqrt %29 : vector<1x256xf32>
    %31 = arith.mulf %15, %30 : vector<1x256xf32>
    %32 = arith.mulf %31, %20 : vector<1x256xf32>
    %33 = arith.subf %16, %32 : vector<1x256xf32>
    %34 = vector.broadcast %31 : vector<1x256xf32> to vector<8x256xf32>
    %35 = arith.mulf %14, %34 : vector<8x256xf32>
    %36 = vector.broadcast %33 : vector<1x256xf32> to vector<8x256xf32>
    %37 = arith.addf %35, %36 : vector<8x256xf32>
    %cst_19 = arith.constant 0.000000e+00 : f32
    %38 = vector.broadcast %cst_19 : f32 to vector<8x256xf32>
    %39 = arith.cmpf ogt, %37, %38 : vector<8x256xf32>
    %cst_20 = arith.constant 2.000000e-01 : f32
    %40 = vector.broadcast %cst_20 : f32 to vector<8x256xf32>
    %41 = arith.mulf %40, %37 : vector<8x256xf32>
    %42 = arith.select %39, %37, %41 : vector<8x256xi1>, vector<8x256xf32>
    %43 = arith.truncf %42 : vector<8x256xf32> to vector<8x256xbf16>
    %c0_21 = arith.constant 0 : index
    %c0_22 = arith.constant 0 : index
    %44 = vector.load %arg6[%c0_21, %c0_22] : memref<256x512xbf16, #tpu.memory_space<vmem>>, vector<256x512xbf16>
    %cst_23 = arith.constant dense<0.000000e+00> : vector<8x512xf32>
    %45 = tpu.matmul %43, %44, %cst_23 {dimension_numbers = #tpu.dot_dimension_numbers<[1], [0], [0], [1], [0, 0, 1, 1], [], []>} : vector<8x256xbf16>, vector<256x512xbf16>, vector<8x512xf32> -> vector<8x512xf32>
    %c0_24 = arith.constant 0 : index
    %c0_25 = arith.constant 0 : index
    %46 = vector.load %arg7[%c0_24, %c0_25] : memref<1x512xf32, #tpu.memory_space<vmem>>, vector<1x512xf32>
    %c0_26 = arith.constant 0 : index
    %c0_27 = arith.constant 0 : index
    %47 = vector.load %arg8[%c0_26, %c0_27] : memref<1x512xf32, #tpu.memory_space<vmem>>, vector<1x512xf32>
    %cst_28 = arith.constant dense<0.000000e+00> : vector<512xf32>
    %48 = vector.multi_reduction <add>, %45, %cst_28 [0] : vector<8x512xf32> to vector<512xf32>
    %49 = vector.shape_cast %48 : vector<512xf32> to vector<1x512xf32>
    %cst_29 = arith.constant 8.000000e+00 : f32
    %50 = vector.broadcast %cst_29 : f32 to vector<1x512xf32>
    %51 = arith.divf %49, %50 : vector<1x512xf32>
    %52 = vector.broadcast %51 : vector<1x512xf32> to vector<8x512xf32>
    %53 = arith.subf %45, %52 : vector<8x512xf32>
    %54 = arith.mulf %53, %53 : vector<8x512xf32>
    %cst_30 = arith.constant dense<0.000000e+00> : vector<512xf32>
    %55 = vector.multi_reduction <add>, %54, %cst_30 [0] : vector<8x512xf32> to vector<512xf32>
    %56 = vector.shape_cast %55 : vector<512xf32> to vector<1x512xf32>
    %cst_31 = arith.constant 8.000000e+00 : f32
    %57 = vector.broadcast %cst_31 : f32 to vector<1x512xf32>
    %58 = arith.divf %56, %57 : vector<1x512xf32>
    %cst_32 = arith.constant 9.99999974E-6 : f32
    %59 = vector.broadcast %cst_32 : f32 to vector<1x512xf32>
    %60 = arith.addf %58, %59 : vector<1x512xf32>
    %61 = math.rsqrt %60 : vector<1x512xf32>
    %62 = arith.mulf %46, %61 : vector<1x512xf32>
    %63 = arith.mulf %62, %51 : vector<1x512xf32>
    %64 = arith.subf %47, %63 : vector<1x512xf32>
    %65 = vector.broadcast %62 : vector<1x512xf32> to vector<8x512xf32>
    %66 = arith.mulf %45, %65 : vector<8x512xf32>
    %67 = vector.broadcast %64 : vector<1x512xf32> to vector<8x512xf32>
    %68 = arith.addf %66, %67 : vector<8x512xf32>
    %cst_33 = arith.constant 0.000000e+00 : f32
    %69 = vector.broadcast %cst_33 : f32 to vector<8x512xf32>
    %70 = arith.cmpf ogt, %68, %69 : vector<8x512xf32>
    %cst_34 = arith.constant 2.000000e-01 : f32
    %71 = vector.broadcast %cst_34 : f32 to vector<8x512xf32>
    %72 = arith.mulf %71, %68 : vector<8x512xf32>
    %73 = arith.select %70, %68, %72 : vector<8x512xi1>, vector<8x512xf32>
    %74 = arith.truncf %73 : vector<8x512xf32> to vector<8x512xbf16>
    %c0_35 = arith.constant 0 : index
    %c0_36 = arith.constant 0 : index
    %75 = vector.load %arg9[%c0_35, %c0_36] : memref<512x1024xbf16, #tpu.memory_space<vmem>>, vector<512x1024xbf16>
    %cst_37 = arith.constant dense<0.000000e+00> : vector<8x1024xf32>
    %76 = tpu.matmul %74, %75, %cst_37 {dimension_numbers = #tpu.dot_dimension_numbers<[1], [0], [0], [1], [0, 0, 1, 1], [], []>} : vector<8x512xbf16>, vector<512x1024xbf16>, vector<8x1024xf32> -> vector<8x1024xf32>
    %c0_38 = arith.constant 0 : index
    %c0_39 = arith.constant 0 : index
    %77 = vector.load %arg10[%c0_38, %c0_39] : memref<1x1024xf32, #tpu.memory_space<vmem>>, vector<1x1024xf32>
    %c0_40 = arith.constant 0 : index
    %c0_41 = arith.constant 0 : index
    %78 = vector.load %arg11[%c0_40, %c0_41] : memref<1x1024xf32, #tpu.memory_space<vmem>>, vector<1x1024xf32>
    %cst_42 = arith.constant dense<0.000000e+00> : vector<1024xf32>
    %79 = vector.multi_reduction <add>, %76, %cst_42 [0] : vector<8x1024xf32> to vector<1024xf32>
    %80 = vector.shape_cast %79 : vector<1024xf32> to vector<1x1024xf32>
    %cst_43 = arith.constant 8.000000e+00 : f32
    %81 = vector.broadcast %cst_43 : f32 to vector<1x1024xf32>
    %82 = arith.divf %80, %81 : vector<1x1024xf32>
    %83 = vector.broadcast %82 : vector<1x1024xf32> to vector<8x1024xf32>
    %84 = arith.subf %76, %83 : vector<8x1024xf32>
    %85 = arith.mulf %84, %84 : vector<8x1024xf32>
    %cst_44 = arith.constant dense<0.000000e+00> : vector<1024xf32>
    %86 = vector.multi_reduction <add>, %85, %cst_44 [0] : vector<8x1024xf32> to vector<1024xf32>
    %87 = vector.shape_cast %86 : vector<1024xf32> to vector<1x1024xf32>
    %cst_45 = arith.constant 8.000000e+00 : f32
    %88 = vector.broadcast %cst_45 : f32 to vector<1x1024xf32>
    %89 = arith.divf %87, %88 : vector<1x1024xf32>
    %cst_46 = arith.constant 9.99999974E-6 : f32
    %90 = vector.broadcast %cst_46 : f32 to vector<1x1024xf32>
    %91 = arith.addf %89, %90 : vector<1x1024xf32>
    %92 = math.rsqrt %91 : vector<1x1024xf32>
    %93 = arith.mulf %77, %92 : vector<1x1024xf32>
    %94 = arith.mulf %93, %82 : vector<1x1024xf32>
    %95 = arith.subf %78, %94 : vector<1x1024xf32>
    %96 = vector.broadcast %93 : vector<1x1024xf32> to vector<8x1024xf32>
    %97 = arith.mulf %76, %96 : vector<8x1024xf32>
    %98 = vector.broadcast %95 : vector<1x1024xf32> to vector<8x1024xf32>
    %99 = arith.addf %97, %98 : vector<8x1024xf32>
    %cst_47 = arith.constant 0.000000e+00 : f32
    %100 = vector.broadcast %cst_47 : f32 to vector<8x1024xf32>
    %101 = arith.cmpf ogt, %99, %100 : vector<8x1024xf32>
    %cst_48 = arith.constant 2.000000e-01 : f32
    %102 = vector.broadcast %cst_48 : f32 to vector<8x1024xf32>
    %103 = arith.mulf %102, %99 : vector<8x1024xf32>
    %104 = arith.select %101, %99, %103 : vector<8x1024xi1>, vector<8x1024xf32>
    %105 = arith.truncf %104 : vector<8x1024xf32> to vector<8x1024xbf16>
    %c0_49 = arith.constant 0 : index
    %c0_50 = arith.constant 0 : index
    %106 = vector.load %arg12[%c0_49, %c0_50] : memref<1024x896xbf16, #tpu.memory_space<vmem>>, vector<1024x896xbf16>
    %cst_51 = arith.constant dense<0.000000e+00> : vector<8x896xf32>
    %107 = tpu.matmul %105, %106, %cst_51 {dimension_numbers = #tpu.dot_dimension_numbers<[1], [0], [0], [1], [0, 0, 1, 1], [], []>} : vector<8x1024xbf16>, vector<1024x896xbf16>, vector<8x896xf32> -> vector<8x896xf32>
    %c0_52 = arith.constant 0 : index
    %c0_53 = arith.constant 0 : index
    %108 = vector.load %arg13[%c0_52, %c0_53] : memref<1x896xf32, #tpu.memory_space<vmem>>, vector<1x896xf32>
    %109 = vector.broadcast %108 : vector<1x896xf32> to vector<8x896xf32>
    %110 = arith.addf %107, %109 : vector<8x896xf32>
    %111 = math.tanh %110 : vector<8x896xf32>
    %c0_54 = arith.constant 0 : index
    %c0_55 = arith.constant 0 : index
    %112 = vector.load %arg14[%c0_54, %c0_55] : memref<8x896xf32, #tpu.memory_space<vmem>>, vector<8x896xf32>
    tpu.vector_store %arg14[%c0_54, %c0_55], %111 {strides = array<i32>} : memref<8x896xf32, #tpu.memory_space<vmem>>, vector<8x896xf32>,
    return
  }
}

</mosaic_0001>

<llo_original>
// kernel: tpu_custom_call.1
$region0: #{tpu_custom_call.1}
  #allocation0 [shape = 'u32[]', space=smem, size = 0x4, offset = 0x4, fixed_abs, tag = 'smem constant byte address 0x4 - core index']
  #allocation1 [shape = 'u32[72,128]{1,0:T(1,128)}', space=vmem, size = 0x9000, scoped, tag = 'internal scratch']
  %s0 = inlined_call_operand.hbm [shape: f32[8,128], index: 0, kind: input, shape index: {}]
  %s1 = inlined_call_operand.hbm [shape: bf16[128,128], index: 1, kind: input, shape index: {}]
  %s2 = inlined_call_operand.hbm [shape: f32[1,128], index: 2, kind: input, shape index: {}]
  %s3 = inlined_call_operand.hbm [shape: bf16[128,256], index: 3, kind: input, shape index: {}]
  %s4 = inlined_call_operand.hbm [shape: f32[1,256], index: 4, kind: input, shape index: {}]
  %s5 = inlined_call_operand.hbm [shape: f32[1,256], index: 5, kind: input, shape index: {}]
  %s6 = inlined_call_operand.hbm [shape: bf16[256,512], index: 6, kind: input, shape index: {}]
  %s7 = inlined_call_operand.hbm [shape: f32[1,512], index: 7, kind: input, shape index: {}]
  %s8 = inlined_call_operand.hbm [shape: f32[1,512], index: 8, kind: input, shape index: {}]
  %s9 = inlined_call_operand.hbm [shape: bf16[512,1024], index: 9, kind: input, shape index: {}]
  %s10 = inlined_call_operand.hbm [shape: f32[1,1024], index: 10, kind: input, shape index: {}]
  %s11 = inlined_call_operand.hbm [shape: f32[1,1024], index: 11, kind: input, shape index: {}]
  %s12 = inlined_call_operand.hbm [shape: bf16[1024,896], index: 12, kind: input, shape index: {}]
  %s13 = inlined_call_operand.hbm [shape: f32[1,896], index: 13, kind: input, shape index: {}]
  %s14 = inlined_call_operand.hbm [shape: f32[8,896], index: 14, kind: output, shape index: {}]
  %s15 = sld [smem:[#allocation0]]
  $region122: #{tpu_custom_call.1} parent=0
    _
  %s17 = ssub.s32 1, %s15
  %s18 = scalar_select 0, %s17, %s15
  $region1: #{tpu_custom_call.1} parent=0
    #allocation2 [shape = 'u8[4096]{0}', space=vmem, size = 0x1000, scoped, tag = 'input window, operand 0, single buffered']
    #allocation3 [shape = 's32[1]{0}', space=sflag, size = 0x4, scoped, tag = 'scoped memory for tpu_custom_call.1']
    #allocation4 [shape = 's32[1]{0}', space=sflag, size = 0x4, scoped, tag = 'scoped memory for tpu_custom_call.1']
    #allocation5 [shape = 'u8[32768]{0}', space=vmem, size = 0x8000, scoped, tag = 'input window, operand 1, single buffered']
    #allocation6 [shape = 's32[1]{0}', space=sflag, size = 0x4, scoped, tag = 'scoped memory for tpu_custom_call.1']
    #allocation7 [shape = 'u8[512]{0}', space=vmem, size = 0x400, scoped, tag = 'input window, operand 2, single buffered']
    #allocation8 [shape = 'u8[65536]{0}', space=vmem, size = 0x10000, scoped, tag = 'input window, operand 3, single buffered']
    #allocation9 [shape = 's32[1]{0}', space=sflag, size = 0x4, scoped, tag = 'scoped memory for tpu_custom_call.1']
    #allocation10 [shape = 'u8[1024]{0}', space=vmem, size = 0x400, scoped, tag = 'input window, operand 4, single buffered']
    #allocation11 [shape = 'u8[1024]{0}', space=vmem, size = 0x400, scoped, tag = 'input window, operand 5, single buffered']
    #allocation12 [shape = 's32[1]{0}', space=sflag, size = 0x4, scoped, tag = 'scoped memory for tpu_custom_call.1']
    #allocation13 [shape = 'u8[262144]{0}', space=vmem, size = 0x40000, scoped, tag = 'input window, operand 6, single buffered']
    #allocation14 [shape = 'u8[2048]{0}', space=vmem, size = 0x800, scoped, tag = 'input window, operand 7, single buffered']
    #allocation15 [shape = 's32[1]{0}', space=sflag, size = 0x4, scoped, tag = 'scoped memory for tpu_custom_call.1']
    #allocation16 [shape = 'u8[2048]{0}', space=vmem, size = 0x800, scoped, tag = 'input window, operand 8, single buffered']
    #allocation17 [shape = 'u8[1048576]{0}', space=vmem, size = 0x100000, scoped, tag = 'input window, operand 9, single buffered']
    #allocation18 [shape = 's32[1]{0}', space=sflag, size = 0x4, scoped, tag = 'scoped memory for tpu_custom_call.1']
    #allocation19 [shape = 'u8[4096]{0}', space=vmem, size = 0x1000, scoped, tag = 'input window, operand 10, single buffered']
    #allocation20 [shape = 'u8[4096]{0}', space=vmem, size = 0x1000, scoped, tag = 'input window, operand 11, single buffered']
    #allocation21 [shape = 's32[1]{0}', space=sflag, size = 0x4, scoped, tag = 'scoped memory for tpu_custom_call.1']
    #allocation22 [shape = 'u8[1835008]{0}', space=vmem, size = 0x1c0000, scoped, tag = 'input window, operand 12, single buffered']
    #allocation23 [shape = 'u8[3584]{0}', space=vmem, size = 0x1000, scoped, tag = 'input window, operand 13, single buffered']
    #allocation24 [shape = 's32[1]{0}', space=sflag, size = 0x4, scoped, tag = 'scoped memory for tpu_custom_call.1']
    #allocation25 [shape = 'u8[28672]{0}', space=vmem, size = 0x7000, scoped, tag = 'output window, operand 0, single buffered']
    %19 = vsyncpa [#allocation3], 0
    %20 = vsyncpa [#allocation6], 0
    %21 = vsyncpa [#allocation9], 0
    %22 = vsyncpa [#allocation12], 0
    %23 = vsyncpa [#allocation15], 0
    %24 = vsyncpa [#allocation18], 0
    %25 = vsyncpa [#allocation21], 0
    %26 = vsyncpa [#allocation24], 0
    %27 = vsyncpa [#allocation4], 0
    // Predicated region
    $region2: #{tpu_custom_call.1} parent=1 // pred_check
      _
    $region3: #{tpu_custom_call.1} parent=1 // pred_check_branch
      %29 = sbr.rel (0) target = $region5
    $region4: #{tpu_custom_call.1} parent=1 // pred_region
      %31 = vsyncadd [#allocation3], 0
      %s33 = sshll.u32 %s0, 4
      %s34 = int_to_ptr.hbm [resolvable:$true] %s33
      %s35 = sshll.u32 [#allocation2], 4
      %s36 = int_to_ptr.vmem [resolvable:$true] %s35
      %38 = dma.hbm_to_vmem [thread:$0]  %s34, 128, %s36, [#allocation3]
    $region5: #{tpu_custom_call.1} parent=1 // pred_fallthru
      _
    // Predicated region
    $region6: #{tpu_custom_call.1} parent=1 // pred_check
      _
    $region7: #{tpu_custom_call.1} parent=1 // pred_check_branch
      %40 = sbr.rel (0) target = $region9
    $region8: #{tpu_custom_call.1} parent=1 // pred_region
      %42 = vsyncadd [#allocation6], 0
      %s43 = sshll.u32 %s1, 4
      %s44 = int_to_ptr.hbm [resolvable:$true] %s43
      %s45 = sshll.u32 [#allocation5], 4
      %s46 = int_to_ptr.vmem [resolvable:$true] %s45
      %51 = dma.hbm_to_vmem [thread:$0]  %s44, 1024, %s46, [#allocation6], 64, 64, 4
    $region9: #{tpu_custom_call.1} parent=1 // pred_fallthru
      _
    // Predicated region
    $region10: #{tpu_custom_call.1} parent=1 // pred_check
      _
    $region11: #{tpu_custom_call.1} parent=1 // pred_check_branch
      %53 = sbr.rel (0) target = $region13
    $region12: #{tpu_custom_call.1} parent=1 // pred_region
      %55 = vsyncadd [#allocation6], 0
      %s57 = sshll.u32 %s2, 4
      %s58 = int_to_ptr.hbm [resolvable:$true] %s57
      %s59 = sshll.u32 [#allocation7], 4
      %s60 = int_to_ptr.vmem [resolvable:$true] %s59
      %62 = dma.hbm_to_vmem [thread:$0]  %s58, 16, %s60, [#allocation6]
    $region13: #{tpu_custom_call.1} parent=1 // pred_fallthru
      _
    // Predicated region
    $region14: #{tpu_custom_call.1} parent=1 // pred_check
      _
    $region15: #{tpu_custom_call.1} parent=1 // pred_check_branch
      %64 = sbr.rel (0) target = $region17
    $region16: #{tpu_custom_call.1} parent=1 // pred_region
      %66 = vsyncadd [#allocation9], 0
      %s67 = sshll.u32 %s3, 4
      %s68 = int_to_ptr.hbm [resolvable:$true] %s67
      %s69 = sshll.u32 [#allocation8], 4
      %s70 = int_to_ptr.vmem [resolvable:$true] %s69
      %75 = dma.hbm_to_vmem [thread:$0]  %s68, 2048, %s70, [#allocation9], 128, 128, 8
    $region17: #{tpu_custom_call.1} parent=1 // pred_fallthru
      _
    // Predicated region
    $region18: #{tpu_custom_call.1} parent=1 // pred_check
      _
    $region19: #{tpu_custom_call.1} parent=1 // pred_check_branch
      %77 = sbr.rel (0) target = $region21
    $region20: #{tpu_custom_call.1} parent=1 // pred_region
      %79 = vsyncadd [#allocation9], 0
      %s81 = sshll.u32 %s4, 4
      %s82 = int_to_ptr.hbm [resolvable:$true] %s81
      %s83 = sshll.u32 [#allocation10], 4
      %s84 = int_to_ptr.vmem [resolvable:$true] %s83
      %86 = dma.hbm_to_vmem [thread:$0]  %s82, 32, %s84, [#allocation9]
    $region21: #{tpu_custom_call.1} parent=1 // pred_fallthru
      _
    // Predicated region
    $region22: #{tpu_custom_call.1} parent=1 // pred_check
      _
    $region23: #{tpu_custom_call.1} parent=1 // pred_check_branch
      %88 = sbr.rel (0) target = $region25
    $region24: #{tpu_custom_call.1} parent=1 // pred_region
      %90 = vsyncadd [#allocation12], 0
      %s92 = sshll.u32 %s5, 4
      %s93 = int_to_ptr.hbm [resolvable:$true] %s92
      %s94 = sshll.u32 [#allocation11], 4
      %s95 = int_to_ptr.vmem [resolvable:$true] %s94
      %97 = dma.hbm_to_vmem [thread:$0]  %s93, 32, %s95, [#allocation12]
    $region25: #{tpu_custom_call.1} parent=1 // pred_fallthru
      _
    // Predicated region
    $region26: #{tpu_custom_call.1} parent=1 // pred_check
      _
    $region27: #{tpu_custom_call.1} parent=1 // pred_check_branch
      %99 = sbr.rel (0) target = $region29
    $region28: #{tpu_custom_call.1} parent=1 // pred_region
      %101 = vsyncadd [#allocation12], 0
      %s102 = sshll.u32 %s6, 4
      %s103 = int_to_ptr.hbm [resolvable:$true] %s102
      %s104 = sshll.u32 [#allocation13], 4
      %s105 = int_to_ptr.vmem [resolvable:$true] %s104
      %110 = dma.hbm_to_vmem [thread:$0]  %s103, 8192, %s105, [#allocation12], 256, 256, 16
    $region29: #{tpu_custom_call.1} parent=1 // pred_fallthru
      _
    // Predicated region
    $region30: #{tpu_custom_call.1} parent=1 // pred_check
      _
    $region31: #{tpu_custom_call.1} parent=1 // pred_check_branch
      %112 = sbr.rel (0) target = $region33
    $region32: #{tpu_custom_call.1} parent=1 // pred_region
      %114 = vsyncadd [#allocation15], 0
      %s116 = sshll.u32 %s7, 4
      %s117 = int_to_ptr.hbm [resolvable:$true] %s116
      %s118 = sshll.u32 [#allocation14], 4
      %s119 = int_to_ptr.vmem [resolvable:$true] %s118
      %121 = dma.hbm_to_vmem [thread:$0]  %s117, 64, %s119, [#allocation15]
    $region33: #{tpu_custom_call.1} parent=1 // pred_fallthru
      _
    // Predicated region
    $region34: #{tpu_custom_call.1} parent=1 // pred_check
      _
    $region35: #{tpu_custom_call.1} parent=1 // pred_check_branch
      %123 = sbr.rel (0) target = $region37
    $region36: #{tpu_custom_call.1} parent=1 // pred_region
      %125 = vsyncadd [#allocation15], 0
      %s127 = sshll.u32 %s8, 4
      %s128 = int_to_ptr.hbm [resolvable:$true] %s127
      %s129 = sshll.u32 [#allocation16], 4
      %s130 = int_to_ptr.vmem [resolvable:$true] %s129
      %132 = dma.hbm_to_vmem [thread:$0]  %s128, 64, %s130, [#allocation15]
    $region37: #{tpu_custom_call.1} parent=1 // pred_fallthru
      _
    // Predicated region
    $region38: #{tpu_custom_call.1} parent=1 // pred_check
      _
    $region39: #{tpu_custom_call.1} parent=1 // pred_check_branch
      %134 = sbr.rel (0) target = $region41
    $region40: #{tpu_custom_call.1} parent=1 // pred_region
      %136 = vsyncadd [#allocation18], 0
      %s137 = sshll.u32 %s9, 4
      %s138 = int_to_ptr.hbm [resolvable:$true] %s137
      %s139 = sshll.u32 [#allocation17], 4
      %s140 = int_to_ptr.vmem [resolvable:$true] %s139
      %145 = dma.hbm_to_vmem [thread:$0]  %s138, 32768, %s140, [#allocation18], 512, 512, 32
    $region41: #{tpu_custom_call.1} parent=1 // pred_fallthru
      _
    // Predicated region
    $region42: #{tpu_custom_call.1} parent=1 // pred_check
      _
    $region43: #{tpu_custom_call.1} parent=1 // pred_check_branch
      %147 = sbr.rel (0) target = $region45
    $region44: #{tpu_custom_call.1} parent=1 // pred_region
      %149 = vsyncadd [#allocation18], 0
      %s151 = sshll.u32 %s10, 4
      %s152 = int_to_ptr.hbm [resolvable:$true] %s151
      %s153 = sshll.u32 [#allocation19], 4
      %s154 = int_to_ptr.vmem [resolvable:$true] %s153
      %156 = dma.hbm_to_vmem [thread:$0]  %s152, 128, %s154, [#allocation18]
    $region45: #{tpu_custom_call.1} parent=1 // pred_fallthru
      _
    // Predicated region
    $region46: #{tpu_custom_call.1} parent=1 // pred_check
      _
    $region47: #{tpu_custom_call.1} parent=1 // pred_check_branch
      %158 = sbr.rel (0) target = $region49
    $region48: #{tpu_custom_call.1} parent=1 // pred_region
      %160 = vsyncadd [#allocation21], 0
      %s162 = sshll.u32 %s11, 4
      %s163 = int_to_ptr.hbm [resolvable:$true] %s162
      %s164 = sshll.u32 [#allocation20], 4
      %s165 = int_to_ptr.vmem [resolvable:$true] %s164
      %167 = dma.hbm_to_vmem [thread:$0]  %s163, 128, %s165, [#allocation21]
    $region49: #{tpu_custom_call.1} parent=1 // pred_fallthru
      _
    // Predicated region
    $region50: #{tpu_custom_call.1} parent=1 // pred_check
      _
    $region51: #{tpu_custom_call.1} parent=1 // pred_check_branch
      %169 = sbr.rel (0) target = $region53
    $region52: #{tpu_custom_call.1} parent=1 // pred_region
      %171 = vsyncadd [#allocation21], 0
      %s172 = sshll.u32 %s12, 4
      %s173 = int_to_ptr.hbm [resolvable:$true] %s172
      %s174 = sshll.u32 [#allocation22], 4
      %s175 = int_to_ptr.vmem [resolvable:$true] %s174
      %180 = dma.hbm_to_vmem [thread:$0]  %s173, 57344, %s175, [#allocation21], 448, 448, 28
    $region53: #{tpu_custom_call.1} parent=1 // pred_fallthru
      _
    // Predicated region
    $region54: #{tpu_custom_call.1} parent=1 // pred_check
      _
    $region55: #{tpu_custom_call.1} parent=1 // pred_check_branch
      %182 = sbr.rel (0) target = $region57
    $region56: #{tpu_custom_call.1} parent=1 // pred_region
      %184 = vsyncadd [#allocation24], 0
      %s186 = sshll.u32 %s13, 4
      %s187 = int_to_ptr.hbm [resolvable:$true] %s186
      %s188 = sshll.u32 [#allocation23], 4
      %s189 = int_to_ptr.vmem [resolvable:$true] %s188
      %191 = dma.hbm_to_vmem [thread:$0]  %s187, 112, %s189, [#allocation24]
    $region57: #{tpu_custom_call.1} parent=1 // pred_fallthru
      _
    // Predicated region
    $region58: #{tpu_custom_call.1} parent=1 // pred_check
      _
    $region59: #{tpu_custom_call.1} parent=1 // pred_check_branch
      %193 = sbr.rel (0) target = $region61
    $region60: #{tpu_custom_call.1} parent=1 // pred_region
      %195 = dma.done [#allocation3], 128
    $region61: #{tpu_custom_call.1} parent=1 // pred_fallthru
      _
    // Predicated region
    $region62: #{tpu_custom_call.1} parent=1 // pred_check
      _
    $region63: #{tpu_custom_call.1} parent=1 // pred_check_branch
      %197 = sbr.rel (0) target = $region65
    $region64: #{tpu_custom_call.1} parent=1 // pred_region
      %199 = dma.done [#allocation6], 1024
    $region65: #{tpu_custom_call.1} parent=1 // pred_fallthru
      _
    // Predicated region
    $region66: #{tpu_custom_call.1} parent=1 // pred_check
      _
    $region67: #{tpu_custom_call.1} parent=1 // pred_check_branch
      %201 = sbr.rel (0) target = $region69
    $region68: #{tpu_custom_call.1} parent=1 // pred_region
      %203 = dma.done [#allocation6], 16
    $region69: #{tpu_custom_call.1} parent=1 // pred_fallthru
      _
    // Predicated region
    $region70: #{tpu_custom_call.1} parent=1 // pred_check
      _
    $region71: #{tpu_custom_call.1} parent=1 // pred_check_branch
      %205 = sbr.rel (0) target = $region73
    $region72: #{tpu_custom_call.1} parent=1 // pred_region
      %207 = dma.done [#allocation9], 2048
    $region73: #{tpu_custom_call.1} parent=1 // pred_fallthru
      _
    // Predicated region
    $region74: #{tpu_custom_call.1} parent=1 // pred_check
      _
    $region75: #{tpu_custom_call.1} parent=1 // pred_check_branch
      %209 = sbr.rel (0) target = $region77
    $region76: #{tpu_custom_call.1} parent=1 // pred_region
      %211 = dma.done [#allocation9], 32
    $region77: #{tpu_custom_call.1} parent=1 // pred_fallthru
      _
    // Predicated region
    $region78: #{tpu_custom_call.1} parent=1 // pred_check
      _
    $region79: #{tpu_custom_call.1} parent=1 // pred_check_branch
      %213 = sbr.rel (0) target = $region81
    $region80: #{tpu_custom_call.1} parent=1 // pred_region
      %215 = dma.done [#allocation12], 32
    $region81: #{tpu_custom_call.1} parent=1 // pred_fallthru
      _
    // Predicated region
    $region82: #{tpu_custom_call.1} parent=1 // pred_check
      _
    $region83: #{tpu_custom_call.1} parent=1 // pred_check_branch
      %217 = sbr.rel (0) target = $region85
    $region84: #{tpu_custom_call.1} parent=1 // pred_region
      %219 = dma.done [#allocation12], 8192
    $region85: #{tpu_custom_call.1} parent=1 // pred_fallthru
      _
    // Predicated region
    $region86: #{tpu_custom_call.1} parent=1 // pred_check
      _
    $region87: #{tpu_custom_call.1} parent=1 // pred_check_branch
      %221 = sbr.rel (0) target = $region89
    $region88: #{tpu_custom_call.1} parent=1 // pred_region
      %223 = dma.done [#allocation15], 64
    $region89: #{tpu_custom_call.1} parent=1 // pred_fallthru
      _
    // Predicated region
    $region90: #{tpu_custom_call.1} parent=1 // pred_check
      _
    $region91: #{tpu_custom_call.1} parent=1 // pred_check_branch
      %225 = sbr.rel (0) target = $region93
    $region92: #{tpu_custom_call.1} parent=1 // pred_region
      %227 = dma.done [#allocation15], 64
    $region93: #{tpu_custom_call.1} parent=1 // pred_fallthru
      _
    // Predicated region
    $region94: #{tpu_custom_call.1} parent=1 // pred_check
      _
    $region95: #{tpu_custom_call.1} parent=1 // pred_check_branch
      %229 = sbr.rel (0) target = $region97
    $region96: #{tpu_custom_call.1} parent=1 // pred_region
      %231 = dma.done [#allocation18], 32768
    $region97: #{tpu_custom_call.1} parent=1 // pred_fallthru
      _
    // Predicated region
    $region98: #{tpu_custom_call.1} parent=1 // pred_check
      _
    $region99: #{tpu_custom_call.1} parent=1 // pred_check_branch
      %233 = sbr.rel (0) target = $region101
    $region100: #{tpu_custom_call.1} parent=1 // pred_region
      %235 = dma.done [#allocation18], 128
    $region101: #{tpu_custom_call.1} parent=1 // pred_fallthru
      _
    // Predicated region
    $region102: #{tpu_custom_call.1} parent=1 // pred_check
      _
    $region103: #{tpu_custom_call.1} parent=1 // pred_check_branch
      %237 = sbr.rel (0) target = $region105
    $region104: #{tpu_custom_call.1} parent=1 // pred_region
      %239 = dma.done [#allocation21], 128
    $region105: #{tpu_custom_call.1} parent=1 // pred_fallthru
      _
    // Predicated region
    $region106: #{tpu_custom_call.1} parent=1 // pred_check
      _
    $region107: #{tpu_custom_call.1} parent=1 // pred_check_branch
      %241 = sbr.rel (0) target = $region109
    $region108: #{tpu_custom_call.1} parent=1 // pred_region
      %243 = dma.done [#allocation21], 57344
    $region109: #{tpu_custom_call.1} parent=1 // pred_fallthru
      _
    // Predicated region
    $region110: #{tpu_custom_call.1} parent=1 // pred_check
      _
    $region111: #{tpu_custom_call.1} parent=1 // pred_check_branch
      %245 = sbr.rel (0) target = $region113
    $region112: #{tpu_custom_call.1} parent=1 // pred_region
      %247 = dma.done [#allocation24], 112
    $region113: #{tpu_custom_call.1} parent=1 // pred_fallthru
      _
    %v248 = vld [vmem:[#allocation2] sm:$0xff]
    %v249 = vpack.c.bf16 %v248, %v248
    %v250 = vld [vmem:[#allocation5] sm:$0xf]
    %v251 = vld [vmem:[#allocation5 + $0x4] sm:$0xf]
    %v252 = vld [vmem:[#allocation5 + $0x8] sm:$0xf]
    %v253 = vld [vmem:[#allocation5 + $0xc] sm:$0xf]
    %v254 = vld [vmem:[#allocation5 + $0x10] sm:$0xf]
    %v255 = vld [vmem:[#allocation5 + $0x14] sm:$0xf]
    %v256 = vld [vmem:[#allocation5 + $0x18] sm:$0xf]
    %v257 = vld [vmem:[#allocation5 + $0x1c] sm:$0xf]
    %v258 = vld [vmem:[#allocation5 + $0x20] sm:$0xf]
    %v259 = vld [vmem:[#allocation5 + $0x24] sm:$0xf]
    %v260 = vld [vmem:[#allocation5 + $0x28] sm:$0xf]
    %v261 = vld [vmem:[#allocation5 + $0x2c] sm:$0xf]
    %v262 = vld [vmem:[#allocation5 + $0x30] sm:$0xf]
    %v263 = vld [vmem:[#allocation5 + $0x34] sm:$0xf]
    %v264 = vld [vmem:[#allocation5 + $0x38] sm:$0xf]
    %v265 = vld [vmem:[#allocation5 + $0x3c] sm:$0xf]
    %v266 = vld [vmem:[#allocation7] sm:$0x1]
    %v268 = vperm.slane %v266, 0
    %v286 = vunpack.c.l.b16 %v250
    %v287 = vunpack.c.l.b16 %v251
    %v288 = vunpack.c.l.b16 %v252
    %v289 = vunpack.c.l.b16 %v253
    %v290 = vunpack.c.l.b16 %v254
    %v291 = vunpack.c.l.b16 %v255
    %v292 = vunpack.c.l.b16 %v256
    %v293 = vunpack.c.l.b16 %v257
    %v294 = vunpack.c.l.b16 %v258
    %v295 = vunpack.c.l.b16 %v259
    %v296 = vunpack.c.l.b16 %v260
    %v297 = vunpack.c.l.b16 %v261
    %v298 = vunpack.c.l.b16 %v262
    %v299 = vunpack.c.l.b16 %v263
    %v300 = vunpack.c.l.b16 %v264
    %v301 = vunpack.c.l.b16 %v265
    %v302 = vpack.c.b16 %v287, %v286
    %v303 = vpack.c.b16 %v289, %v288
    %v304 = vpack.c.b16 %v291, %v290
    %v305 = vpack.c.b16 %v293, %v292
    %v306 = vpack.c.b16 %v295, %v294
    %v307 = vpack.c.b16 %v297, %v296
    %v308 = vpack.c.b16 %v299, %v298
    %v309 = vpack.c.b16 %v301, %v300
    %318 = vmatpush.bf16.msra.mxu0 %v309
    %319 = vmatpush.bf16.msra.mxu0 %v308
    %320 = vmatpush.bf16.msra.mxu0 %v307
    %321 = vmatpush.bf16.msra.mxu0 %v306
    %322 = vmatpush.bf16.msra.mxu0 %v305
    %323 = vmatpush.bf16.msra.mxu0 %v304
    %324 = vmatpush.bf16.msra.mxu0 %v303
    %325 = vmatpush.bf16.msra.mxu0 %v302
    %326 = vmatmul.bf16.gmra.mxu0 %v249
    %v327 = vpop.f32.mrf.mxu0
    %v328 = vadd.f32 %v268, %v327
    %v329 = vpop.f32.mrf.mxu0
    %330 = vdwg.mxu0
    %vm331 = vcmp.gt.f32.partialorder %v328, 0.0
    %v332 = vmul.f32 %v328, 0.2
    %v333 = vsel %vm331, %v328, %v332
    %v334 = vpack.c.bf16 %v333, %v333
    %v335 = vld [vmem:[#allocation8] sm:$0xff]
    %v336 = vld [vmem:[#allocation8 + $0x8] sm:$0xff]
    %v337 = vld [vmem:[#allocation8 + $0x10] sm:$0xff]
    %v338 = vld [vmem:[#allocation8 + $0x18] sm:$0xff]
    %v339 = vld [vmem:[#allocation8 + $0x20] sm:$0xff]
    %v340 = vld [vmem:[#allocation8 + $0x28] sm:$0xff]
    %v341 = vld [vmem:[#allocation8 + $0x30] sm:$0xff]
    %v342 = vld [vmem:[#allocation8 + $0x38] sm:$0xff]
    %v343 = vld [vmem:[#allocation8 + $0x40] sm:$0xff]
    %v344 = vld [vmem:[#allocation8 + $0x48] sm:$0xff]
    %v345 = vld [vmem:[#allocation8 + $0x50] sm:$0xff]
    %v346 = vld [vmem:[#allocation8 + $0x58] sm:$0xff]
    %v347 = vld [vmem:[#allocation8 + $0x60] sm:$0xff]
    %v348 = vld [vmem:[#allocation8 + $0x68] sm:$0xff]
    %v349 = vld [vmem:[#allocation8 + $0x70] sm:$0xff]
    %v350 = vld [vmem:[#allocation8 + $0x78] sm:$0xff]
    %v367 = vunpack.c.l.b16 %v335
    %v368 = vunpack.c.h.b16 %v335
    %v369 = vunpack.c.l.b16 %v336
    %v370 = vunpack.c.h.b16 %v336
    %v371 = vunpack.c.l.b16 %v337
    %v372 = vunpack.c.h.b16 %v337
    %v373 = vunpack.c.l.b16 %v338
    %v374 = vunpack.c.h.b16 %v338
    %v375 = vunpack.c.l.b16 %v339
    %v376 = vunpack.c.h.b16 %v339
    %v377 = vunpack.c.l.b16 %v340
    %v378 = vunpack.c.h.b16 %v340
    %v379 = vunpack.c.l.b16 %v341
    %v380 = vunpack.c.h.b16 %v341
    %v381 = vunpack.c.l.b16 %v342
    %v382 = vunpack.c.h.b16 %v342
    %v383 = vunpack.c.l.b16 %v343
    %v384 = vunpack.c.h.b16 %v343
    %v385 = vunpack.c.l.b16 %v344
    %v386 = vunpack.c.h.b16 %v344
    %v387 = vunpack.c.l.b16 %v345
    %v388 = vunpack.c.h.b16 %v345
    %v389 = vunpack.c.l.b16 %v346
    %v390 = vunpack.c.h.b16 %v346
    %v391 = vunpack.c.l.b16 %v347
    %v392 = vunpack.c.h.b16 %v347
    %v393 = vunpack.c.l.b16 %v348
    %v394 = vunpack.c.h.b16 %v348
    %v395 = vunpack.c.l.b16 %v349
    %v396 = vunpack.c.h.b16 %v349
    %v397 = vunpack.c.l.b16 %v350
    %v398 = vunpack.c.h.b16 %v350
    %v399 = vpack.c.b16 %v369, %v367
    %v400 = vpack.c.b16 %v370, %v368
    %v401 = vpack.c.b16 %v373, %v371
    %v402 = vpack.c.b16 %v374, %v372
    %v403 = vpack.c.b16 %v377, %v375
    %v404 = vpack.c.b16 %v378, %v376
    %v405 = vpack.c.b16 %v381, %v379
    %v406 = vpack.c.b16 %v382, %v380
    %v407 = vpack.c.b16 %v385, %v383
    %v408 = vpack.c.b16 %v386, %v384
    %v409 = vpack.c.b16 %v389, %v387
    %v410 = vpack.c.b16 %v390, %v388
    %v411 = vpack.c.b16 %v393, %v391
    %v412 = vpack.c.b16 %v394, %v392
    %v413 = vpack.c.b16 %v397, %v395
    %v414 = vpack.c.b16 %v398, %v396
    %431 = vmatpush.bf16.msra.mxu0 %v413
    %432 = vmatpush.bf16.msra.mxu0 %v411
    %433 = vmatpush.bf16.msra.mxu0 %v409
    %434 = vmatpush.bf16.msra.mxu0 %v407
    %435 = vmatpush.bf16.msra.mxu0 %v405
    %436 = vmatpush.bf16.msra.mxu0 %v403
    %437 = vmatpush.bf16.msra.mxu0 %v401
    %438 = vmatpush.bf16.msra.mxu0 %v399
    %439 = vmatmul.bf16.gmra.mxu0 %v334
    %v440 = vpop.f32.mrf.mxu0
    %v441 = vadd.f32 0.0, %v440
    %v442 = vpop.f32.mrf.mxu0
    %443 = vdwg.mxu0
    %444 = vmatpush.bf16.msra.mxu0 %v414
    %445 = vmatpush.bf16.msra.mxu0 %v412
    %446 = vmatpush.bf16.msra.mxu0 %v410
    %447 = vmatpush.bf16.msra.mxu0 %v408
    %448 = vmatpush.bf16.msra.mxu0 %v406
    %449 = vmatpush.bf16.msra.mxu0 %v404
    %450 = vmatpush.bf16.msra.mxu0 %v402
    %451 = vmatpush.bf16.msra.mxu0 %v400
    %452 = vmatmul.bf16.gmra.mxu0 %v334
    %v453 = vpop.f32.mrf.mxu0
    %v454 = vadd.f32 0.0, %v453
    %v455 = vpop.f32.mrf.mxu0
    %456 = vdwg.mxu0
    %v457 = vld [vmem:[#allocation10] sm:$0x3]
    %v458 = vld [vmem:[#allocation11] sm:$0x3]
    %v459 = vrot.slane %v441, 4
    %v460 = vadd.f32 %v441, %v459
    %v461 = vrot.slane %v460, 2
    %v462 = vadd.f32 %v460, %v461
    %v463 = vrot.slane %v462, 1
    %v464 = vadd.f32 %v462, %v463
    %v465 = vrot.slane %v454, 4
    %v466 = vadd.f32 %v454, %v465
    %v467 = vrot.slane %v466, 2
    %v468 = vadd.f32 %v466, %v467
    %v469 = vrot.slane %v468, 1
    %v470 = vadd.f32 %v468, %v469
    %v471 = vrcp.pop 8.0
    %v472 = vmul.f32 8.0, %v471
    %v473 = vsub.f32 1.0, %v472
    %v474 = vmul.f32 %v471, %v473
    %v475 = vadd.f32 %v471, %v474
    %vm476 = vweird.f32 %v471
    %v477 = vsel %vm476, %v471, %v475
    %v478 = vmul.f32 %v464, %v477
    %v479 = vmul.f32 %v470, %v477
    %v480 = vsub.f32 %v441, %v478
    %v481 = vsub.f32 %v454, %v479
    %v482 = vmul.f32 %v480, %v480
    %v483 = vmul.f32 %v481, %v481
    %v484 = vrot.slane %v482, 4
    %v485 = vadd.f32 %v482, %v484
    %v486 = vrot.slane %v485, 2
    %v487 = vadd.f32 %v485, %v486
    %v488 = vrot.slane %v487, 1
    %v489 = vadd.f32 %v487, %v488
    %v490 = vrot.slane %v483, 4
    %v491 = vadd.f32 %v483, %v490
    %v492 = vrot.slane %v491, 2
    %v493 = vadd.f32 %v491, %v492
    %v494 = vrot.slane %v493, 1
    %v495 = vadd.f32 %v493, %v494
    %v496 = vmul.f32 %v489, %v477
    %v497 = vmul.f32 %v495, %v477
    %v498 = vadd.f32 %v496, 1e-05
    %v499 = vadd.f32 %v497, 1e-05
    %v500 = vrsqrt.pop %v498
    %v501 = vmul.f32 %v500, %v498
    %v502 = vmul.f32 %v501, %v500
    %v503 = vmul.f32 0.5, %v502
    %v504 = vsub.f32 1.5, %v503
    %v505 = vmul.f32 %v500, %v504
    %vm506 = vweird.f32 %v498
    %vm507 = vweird.f32 %v500
    %vm508 = vmor %vm506, %vm507
    %v509 = vsel %vm508, %v500, %v505
    %v510 = vrsqrt.pop %v499
    %v511 = vmul.f32 %v510, %v499
    %v512 = vmul.f32 %v511, %v510
    %v513 = vmul.f32 0.5, %v512
    %v514 = vsub.f32 1.5, %v513
    %v515 = vmul.f32 %v510, %v514
    %vm516 = vweird.f32 %v499
    %vm517 = vweird.f32 %v510
    %vm518 = vmor %vm516, %vm517
    %v519 = vsel %vm518, %v510, %v515
    %v522 = vrot.slane %v519, 7
    %vm523 = vcmask 1040384
    %v524 = vsel %vm523, %v509, %v522
    %v526 = vmul.f32 %v457, %v524
    %v529 = vrot.slane %v479, 7
    %v530 = vsel %vm523, %v478, %v529
    %v532 = vmul.f32 %v526, %v530
    %v533 = vsub.f32 %v458, %v532
    %v535 = vperm.slane %v526, 0
    %v536 = vperm.slane %v526, 1
    %v539 = vmul.f32 %v441, %v535
    %v540 = vmul.f32 %v454, %v536
    %v542 = vperm.slane %v533, 0
    %v543 = vperm.slane %v533, 1
    %v546 = vadd.f32 %v539, %v542
    %v547 = vadd.f32 %v540, %v543
    %vm548 = vcmp.gt.f32.partialorder %v546, 0.0
    %vm549 = vcmp.gt.f32.partialorder %v547, 0.0
    %v550 = vmul.f32 %v546, 0.2
    %v551 = vmul.f32 %v547, 0.2
    %v552 = vsel %vm548, %v546, %v550
    %v553 = vsel %vm549, %v547, %v551
    %v554 = vpack.c.bf16 %v552, %v552
    %v555 = vpack.c.bf16 %v553, %v553
    %v556 = vld [vmem:[#allocation13] sm:$0xff]
    %v557 = vld [vmem:[#allocation13 + $0x8] sm:$0xff]
    %v558 = vld [vmem:[#allocation13 + $0x10] sm:$0xff]
    %v559 = vld [vmem:[#allocation13 + $0x18] sm:$0xff]
    %v560 = vld [vmem:[#allocation13 + $0x20] sm:$0xff]
    %v561 = vld [vmem:[#allocation13 + $0x28] sm:$0xff]
    %v562 = vld [vmem:[#allocation13 + $0x30] sm:$0xff]
    %v563 = vld [vmem:[#allocation13 + $0x38] sm:$0xff]
    %v564 = vld [vmem:[#allocation13 + $0x40] sm:$0xff]
    %v565 = vld [vmem:[#allocation13 + $0x48] sm:$0xff]
    %v566 = vld [vmem:[#allocation13 + $0x50] sm:$0xff]
    %v567 = vld [vmem:[#allocation13 + $0x58] sm:$0xff]
    %v568 = vld [vmem:[#allocation13 + $0x60] sm:$0xff]
    %v569 = vld [vmem:[#allocation13 + $0x68] sm:$0xff]
    %v570 = vld [vmem:[#allocation13 + $0x70] sm:$0xff]
    %v571 = vld [vmem:[#allocation13 + $0x78] sm:$0xff]
    %v572 = vld [vmem:[#allocation13 + $0x80] sm:$0xff]
    %v573 = vld [vmem:[#allocation13 + $0x88] sm:$0xff]
    %v574 = vld [vmem:[#allocation13 + $0x90] sm:$0xff]
    %v575 = vld [vmem:[#allocation13 + $0x98] sm:$0xff]
    %v576 = vld [vmem:[#allocation13 + $0xa0] sm:$0xff]
    %v577 = vld [vmem:[#allocation13 + $0xa8] sm:$0xff]
    %v578 = vld [vmem:[#allocation13 + $0xb0] sm:$0xff]
    %v579 = vld [vmem:[#allocation13 + $0xb8] sm:$0xff]
    %v580 = vld [vmem:[#allocation13 + $0xc0] sm:$0xff]
    %v581 = vld [vmem:[#allocation13 + $0xc8] sm:$0xff]
    %v582 = vld [vmem:[#allocation13 + $0xd0] sm:$0xff]
    %v583 = vld [vmem:[#allocation13 + $0xd8] sm:$0xff]
    %v584 = vld [vmem:[#allocation13 + $0xe0] sm:$0xff]
    %v585 = vld [vmem:[#allocation13 + $0xe8] sm:$0xff]
    %v586 = vld [vmem:[#allocation13 + $0xf0] sm:$0xff]
    %v587 = vld [vmem:[#allocation13 + $0xf8] sm:$0xff]
    %v588 = vld [vmem:[#allocation13 + $0x100] sm:$0xff]
    %v589 = vld [vmem:[#allocation13 + $0x108] sm:$0xff]
    %v590 = vld [vmem:[#allocation13 + $0x110] sm:$0xff]
    %v591 = vld [vmem:[#allocation13 + $0x118] sm:$0xff]
    %v592 = vld [vmem:[#allocation13 + $0x120] sm:$0xff]
    %v593 = vld [vmem:[#allocation13 + $0x128] sm:$0xff]
    %v594 = vld [vmem:[#allocation13 + $0x130] sm:$0xff]
    %v595 = vld [vmem:[#allocation13 + $0x138] sm:$0xff]
    %v596 = vld [vmem:[#allocation13 + $0x140] sm:$0xff]
    %v597 = vld [vmem:[#allocation13 + $0x148] sm:$0xff]
    %v598 = vld [vmem:[#allocation13 + $0x150] sm:$0xff]
    %v599 = vld [vmem:[#allocation13 + $0x158] sm:$0xff]
    %v600 = vld [vmem:[#allocation13 + $0x160] sm:$0xff]
    %v601 = vld [vmem:[#allocation13 + $0x168] sm:$0xff]
    %v602 = vld [vmem:[#allocation13 + $0x170] sm:$0xff]
    %v603 = vld [vmem:[#allocation13 + $0x178] sm:$0xff]
    %v604 = vld [vmem:[#allocation13 + $0x180] sm:$0xff]
    %v605 = vld [vmem:[#allocation13 + $0x188] sm:$0xff]
    %v606 = vld [vmem:[#allocation13 + $0x190] sm:$0xff]
    %v607 = vld [vmem:[#allocation13 + $0x198] sm:$0xff]
    %v608 = vld [vmem:[#allocation13 + $0x1a0] sm:$0xff]
    %v609 = vld [vmem:[#allocation13 + $0x1a8] sm:$0xff]
    %v610 = vld [vmem:[#allocation13 + $0x1b0] sm:$0xff]
    %v611 = vld [vmem:[#allocation13 + $0x1b8] sm:$0xff]
    %v612 = vld [vmem:[#allocation13 + $0x1c0] sm:$0xff]
    %v613 = vld [vmem:[#allocation13 + $0x1c8] sm:$0xff]
    %v614 = vld [vmem:[#allocation13 + $0x1d0] sm:$0xff]
    %v615 = vld [vmem:[#allocation13 + $0x1d8] sm:$0xff]
    %v616 = vld [vmem:[#allocation13 + $0x1e0] sm:$0xff]
    %v617 = vld [vmem:[#allocation13 + $0x1e8] sm:$0xff]
    %v618 = vld [vmem:[#allocation13 + $0x1f0] sm:$0xff]
    %v619 = vld [vmem:[#allocation13 + $0x1f8] sm:$0xff]
    %v684 = vunpack.c.l.b16 %v556
    %v685 = vunpack.c.h.b16 %v556
    %v686 = vunpack.c.l.b16 %v557
    %v687 = vunpack.c.h.b16 %v557
    %v688 = vunpack.c.l.b16 %v558
    %v689 = vunpack.c.h.b16 %v558
    %v690 = vunpack.c.l.b16 %v559
    %v691 = vunpack.c.h.b16 %v559
    %v692 = vunpack.c.l.b16 %v560
    %v693 = vunpack.c.h.b16 %v560
    %v694 = vunpack.c.l.b16 %v561
    %v695 = vunpack.c.h.b16 %v561
    %v696 = vunpack.c.l.b16 %v562
    %v697 = vunpack.c.h.b16 %v562
    %v698 = vunpack.c.l.b16 %v563
    %v699 = vunpack.c.h.b16 %v563
    %v700 = vunpack.c.l.b16 %v564
    %v701 = vunpack.c.h.b16 %v564
    %v702 = vunpack.c.l.b16 %v565
    %v703 = vunpack.c.h.b16 %v565
    %v704 = vunpack.c.l.b16 %v566
    %v705 = vunpack.c.h.b16 %v566
    %v706 = vunpack.c.l.b16 %v567
    %v707 = vunpack.c.h.b16 %v567
    %v708 = vunpack.c.l.b16 %v568
    %v709 = vunpack.c.h.b16 %v568
    %v710 = vunpack.c.l.b16 %v569
    %v711 = vunpack.c.h.b16 %v569
    %v712 = vunpack.c.l.b16 %v570
    %v713 = vunpack.c.h.b16 %v570
    %v714 = vunpack.c.l.b16 %v571
    %v715 = vunpack.c.h.b16 %v571
    %v716 = vunpack.c.l.b16 %v572
    %v717 = vunpack.c.h.b16 %v572
    %v718 = vunpack.c.l.b16 %v573
    %v719 = vunpack.c.h.b16 %v573
    %v720 = vunpack.c.l.b16 %v574
    %v721 = vunpack.c.h.b16 %v574
    %v722 = vunpack.c.l.b16 %v575
    %v723 = vunpack.c.h.b16 %v575
    %v724 = vunpack.c.l.b16 %v576
    %v725 = vunpack.c.h.b16 %v576
    %v726 = vunpack.c.l.b16 %v577
    %v727 = vunpack.c.h.b16 %v577
    %v728 = vunpack.c.l.b16 %v578
    %v729 = vunpack.c.h.b16 %v578
    %v730 = vunpack.c.l.b16 %v579
    %v731 = vunpack.c.h.b16 %v579
    %v732 = vunpack.c.l.b16 %v580
    %v733 = vunpack.c.h.b16 %v580
    %v734 = vunpack.c.l.b16 %v581
    %v735 = vunpack.c.h.b16 %v581
    %v736 = vunpack.c.l.b16 %v582
    %v737 = vunpack.c.h.b16 %v582
    %v738 = vunpack.c.l.b16 %v583
    %v739 = vunpack.c.h.b16 %v583
    %v740 = vunpack.c.l.b16 %v584
    %v741 = vunpack.c.h.b16 %v584
    %v742 = vunpack.c.l.b16 %v585
    %v743 = vunpack.c.h.b16 %v585
    %v744 = vunpack.c.l.b16 %v586
    %v745 = vunpack.c.h.b16 %v586
    %v746 = vunpack.c.l.b16 %v587
    %v747 = vunpack.c.h.b16 %v587
    %v748 = vunpack.c.l.b16 %v588
    %v749 = vunpack.c.h.b16 %v588
    %v750 = vunpack.c.l.b16 %v589
    %v751 = vunpack.c.h.b16 %v589
    %v752 = vunpack.c.l.b16 %v590
    %v753 = vunpack.c.h.b16 %v590
    %v754 = vunpack.c.l.b16 %v591
    %v755 = vunpack.c.h.b16 %v591
    %v756 = vunpack.c.l.b16 %v592
    %v757 = vunpack.c.h.b16 %v592
    %v758 = vunpack.c.l.b16 %v593
    %v759 = vunpack.c.h.b16 %v593
    %v760 = vunpack.c.l.b16 %v594
    %v761 = vunpack.c.h.b16 %v594
    %v762 = vunpack.c.l.b16 %v595
    %v763 = vunpack.c.h.b16 %v595
    %v764 = vunpack.c.l.b16 %v596
    %v765 = vunpack.c.h.b16 %v596
    %v766 = vunpack.c.l.b16 %v597
    %v767 = vunpack.c.h.b16 %v597
    %v768 = vunpack.c.l.b16 %v598
    %v769 = vunpack.c.h.b16 %v598
    %v770 = vunpack.c.l.b16 %v599
    %v771 = vunpack.c.h.b16 %v599
    %v772 = vunpack.c.l.b16 %v600
    %v773 = vunpack.c.h.b16 %v600
    %v774 = vunpack.c.l.b16 %v601
    %v775 = vunpack.c.h.b16 %v601
    %v776 = vunpack.c.l.b16 %v602
    %v777 = vunpack.c.h.b16 %v602
    %v778 = vunpack.c.l.b16 %v603
    %v779 = vunpack.c.h.b16 %v603
    %v780 = vunpack.c.l.b16 %v604
    %v781 = vunpack.c.h.b16 %v604
    %v782 = vunpack.c.l.b16 %v605
    %v783 = vunpack.c.h.b16 %v605
    %v784 = vunpack.c.l.b16 %v606
    %v785 = vunpack.c.h.b16 %v606
    %v786 = vunpack.c.l.b16 %v607
    %v787 = vunpack.c.h.b16 %v607
    %v788 = vunpack.c.l.b16 %v608
    %v789 = vunpack.c.h.b16 %v608
    %v790 = vunpack.c.l.b16 %v609
    %v791 = vunpack.c.h.b16 %v609
    %v792 = vunpack.c.l.b16 %v610
    %v793 = vunpack.c.h.b16 %v610
    %v794 = vunpack.c.l.b16 %v611
    %v795 = vunpack.c.h.b16 %v611
    %v796 = vunpack.c.l.b16 %v612
    %v797 = vunpack.c.h.b16 %v612
    %v798 = vunpack.c.l.b16 %v613
    %v799 = vunpack.c.h.b16 %v613
    %v800 = vunpack.c.l.b16 %v614
    %v801 = vunpack.c.h.b16 %v614
    %v802 = vunpack.c.l.b16 %v615
    %v803 = vunpack.c.h.b16 %v615
    %v804 = vunpack.c.l.b16 %v616
    %v805 = vunpack.c.h.b16 %v616
    %v806 = vunpack.c.l.b16 %v617
    %v807 = vunpack.c.h.b16 %v617
    %v808 = vunpack.c.l.b16 %v618
    %v809 = vunpack.c.h.b16 %v618
    %v810 = vunpack.c.l.b16 %v619
    %v811 = vunpack.c.h.b16 %v619
    %v812 = vpack.c.b16 %v688, %v684
    %v813 = vpack.c.b16 %v689, %v685
    %v814 = vpack.c.b16 %v690, %v686
    %v815 = vpack.c.b16 %v691, %v687
    %v816 = vpack.c.b16 %v696, %v692
    %v817 = vpack.c.b16 %v697, %v693
    %v818 = vpack.c.b16 %v698, %v694
    %v819 = vpack.c.b16 %v699, %v695
    %v820 = vpack.c.b16 %v704, %v700
    %v821 = vpack.c.b16 %v705, %v701
    %v822 = vpack.c.b16 %v706, %v702
    %v823 = vpack.c.b16 %v707, %v703
    %v824 = vpack.c.b16 %v712, %v708
    %v825 = vpack.c.b16 %v713, %v709
    %v826 = vpack.c.b16 %v714, %v710
    %v827 = vpack.c.b16 %v715, %v711
    %v828 = vpack.c.b16 %v720, %v716
    %v829 = vpack.c.b16 %v721, %v717
    %v830 = vpack.c.b16 %v722, %v718
    %v831 = vpack.c.b16 %v723, %v719
    %v832 = vpack.c.b16 %v728, %v724
    %v833 = vpack.c.b16 %v729, %v725
    %v834 = vpack.c.b16 %v730, %v726
    %v835 = vpack.c.b16 %v731, %v727
    %v836 = vpack.c.b16 %v736, %v732
    %v837 = vpack.c.b16 %v737, %v733
    %v838 = vpack.c.b16 %v738, %v734
    %v839 = vpack.c.b16 %v739, %v735
    %v840 = vpack.c.b16 %v744, %v740
    %v841 = vpack.c.b16 %v745, %v741
    %v842 = vpack.c.b16 %v746, %v742
    %v843 = vpack.c.b16 %v747, %v743
    %v844 = vpack.c.b16 %v752, %v748
    %v845 = vpack.c.b16 %v753, %v749
    %v846 = vpack.c.b16 %v754, %v750
    %v847 = vpack.c.b16 %v755, %v751
    %v848 = vpack.c.b16 %v760, %v756
    %v849 = vpack.c.b16 %v761, %v757
    %v850 = vpack.c.b16 %v762, %v758
    %v851 = vpack.c.b16 %v763, %v759
    %v852 = vpack.c.b16 %v768, %v764
    %v853 = vpack.c.b16 %v769, %v765
    %v854 = vpack.c.b16 %v770, %v766
    %v855 = vpack.c.b16 %v771, %v767
    %v856 = vpack.c.b16 %v776, %v772
    %v857 = vpack.c.b16 %v777, %v773
    %v858 = vpack.c.b16 %v778, %v774
    %v859 = vpack.c.b16 %v779, %v775
    %v860 = vpack.c.b16 %v784, %v780
    %v861 = vpack.c.b16 %v785, %v781
    %v862 = vpack.c.b16 %v786, %v782
    %v863 = vpack.c.b16 %v787, %v783
    %v864 = vpack.c.b16 %v792, %v788
    %v865 = vpack.c.b16 %v793, %v789
    %v866 = vpack.c.b16 %v794, %v790
    %v867 = vpack.c.b16 %v795, %v791
    %v868 = vpack.c.b16 %v800, %v796
    %v869 = vpack.c.b16 %v801, %v797
    %v870 = vpack.c.b16 %v802, %v798
    %v871 = vpack.c.b16 %v803, %v799
    %v872 = vpack.c.b16 %v808, %v804
    %v873 = vpack.c.b16 %v809, %v805
    %v874 = vpack.c.b16 %v810, %v806
    %v875 = vpack.c.b16 %v811, %v807
    %940 = vmatpush.bf16.msra.mxu0 %v840
    %941 = vmatpush.bf16.msra.mxu0 %v836
    %942 = vmatpush.bf16.msra.mxu0 %v832
    %943 = vmatpush.bf16.msra.mxu0 %v828
    %944 = vmatpush.bf16.msra.mxu0 %v824
    %945 = vmatpush.bf16.msra.mxu0 %v820
    %946 = vmatpush.bf16.msra.mxu0 %v816
    %947 = vmatpush.bf16.msra.mxu0 %v812
    %948 = vmatmul.bf16.gmra.mxu0 %v554
    %v949 = vpop.f32.mrf.mxu0
    %v950 = vadd.f32 0.0, %v949
    %v951 = vpop.f32.mrf.mxu0
    %952 = vdwg.mxu0
    %953 = vmatpush.bf16.msra.mxu0 %v872
    %954 = vmatpush.bf16.msra.mxu0 %v868
    %955 = vmatpush.bf16.msra.mxu0 %v864
    %956 = vmatpush.bf16.msra.mxu0 %v860
    %957 = vmatpush.bf16.msra.mxu0 %v856
    %958 = vmatpush.bf16.msra.mxu0 %v852
    %959 = vmatpush.bf16.msra.mxu0 %v848
    %960 = vmatpush.bf16.msra.mxu0 %v844
    %961 = vmatmul.bf16.gmra.mxu0 %v555
    %v962 = vpop.f32.mrf.mxu0
    %v963 = vadd.f32 %v950, %v962
    %v964 = vpop.f32.mrf.mxu0
    %965 = vdwg.mxu0
    %966 = vmatpush.bf16.msra.mxu0 %v841
    %967 = vmatpush.bf16.msra.mxu0 %v837
    %968 = vmatpush.bf16.msra.mxu0 %v833
    %969 = vmatpush.bf16.msra.mxu0 %v829
    %970 = vmatpush.bf16.msra.mxu0 %v825
    %971 = vmatpush.bf16.msra.mxu0 %v821
    %972 = vmatpush.bf16.msra.mxu0 %v817
    %973 = vmatpush.bf16.msra.mxu0 %v813
    %974 = vmatmul.bf16.gmra.mxu0 %v554
    %v975 = vpop.f32.mrf.mxu0
    %v976 = vadd.f32 0.0, %v975
    %v977 = vpop.f32.mrf.mxu0
    %978 = vdwg.mxu0
    %979 = vmatpush.bf16.msra.mxu0 %v873
    %980 = vmatpush.bf16.msra.mxu0 %v869
    %981 = vmatpush.bf16.msra.mxu0 %v865
    %982 = vmatpush.bf16.msra.mxu0 %v861
    %983 = vmatpush.bf16.msra.mxu0 %v857
    %984 = vmatpush.bf16.msra.mxu0 %v853
    %985 = vmatpush.bf16.msra.mxu0 %v849
    %986 = vmatpush.bf16.msra.mxu0 %v845
    %987 = vmatmul.bf16.gmra.mxu0 %v555
    %v988 = vpop.f32.mrf.mxu0
    %v989 = vadd.f32 %v976, %v988
    %v990 = vpop.f32.mrf.mxu0
    %991 = vdwg.mxu0
    %992 = vmatpush.bf16.msra.mxu0 %v842
    %993 = vmatpush.bf16.msra.mxu0 %v838
    %994 = vmatpush.bf16.msra.mxu0 %v834
    %995 = vmatpush.bf16.msra.mxu0 %v830
    %996 = vmatpush.bf16.msra.mxu0 %v826
    %997 = vmatpush.bf16.msra.mxu0 %v822
    %998 = vmatpush.bf16.msra.mxu0 %v818
    %999 = vmatpush.bf16.msra.mxu0 %v814
    %1000 = vmatmul.bf16.gmra.mxu0 %v554
    %v1001 = vpop.f32.mrf.mxu0
    %v1002 = vadd.f32 0.0, %v1001
    %v1003 = vpop.f32.mrf.mxu0
    %1004 = vdwg.mxu0
    %1005 = vmatpush.bf16.msra.mxu0 %v874
    %1006 = vmatpush.bf16.msra.mxu0 %v870
    %1007 = vmatpush.bf16.msra.mxu0 %v866
    %1008 = vmatpush.bf16.msra.mxu0 %v862
    %1009 = vmatpush.bf16.msra.mxu0 %v858
    %1010 = vmatpush.bf16.msra.mxu0 %v854
    %1011 = vmatpush.bf16.msra.mxu0 %v850
    %1012 = vmatpush.bf16.msra.mxu0 %v846
    %1013 = vmatmul.bf16.gmra.mxu0 %v555
    %v1014 = vpop.f32.mrf.mxu0
    %v1015 = vadd.f32 %v1002, %v1014
    %v1016 = vpop.f32.mrf.mxu0
    %1017 = vdwg.mxu0
    %1018 = vmatpush.bf16.msra.mxu0 %v843
    %1019 = vmatpush.bf16.msra.mxu0 %v839
    %1020 = vmatpush.bf16.msra.mxu0 %v835
    %1021 = vmatpush.bf16.msra.mxu0 %v831
    %1022 = vmatpush.bf16.msra.mxu0 %v827
    %1023 = vmatpush.bf16.msra.mxu0 %v823
    %1024 = vmatpush.bf16.msra.mxu0 %v819
    %1025 = vmatpush.bf16.msra.mxu0 %v815
    %1026 = vmatmul.bf16.gmra.mxu0 %v554
    %v1027 = vpop.f32.mrf.mxu0
    %v1028 = vadd.f32 0.0, %v1027
    %v1029 = vpop.f32.mrf.mxu0
    %1030 = vdwg.mxu0
    %1031 = vmatpush.bf16.msra.mxu0 %v875
    %1032 = vmatpush.bf16.msra.mxu0 %v871
    %1033 = vmatpush.bf16.msra.mxu0 %v867
    %1034 = vmatpush.bf16.msra.mxu0 %v863
    %1035 = vmatpush.bf16.msra.mxu0 %v859
    %1036 = vmatpush.bf16.msra.mxu0 %v855
    %1037 = vmatpush.bf16.msra.mxu0 %v851
    %1038 = vmatpush.bf16.msra.mxu0 %v847
    %1039 = vmatmul.bf16.gmra.mxu0 %v555
    %v1040 = vpop.f32.mrf.mxu0
    %v1041 = vadd.f32 %v1028, %v1040
    %v1042 = vpop.f32.mrf.mxu0
    %1043 = vdwg.mxu0
    %v1044 = vld [vmem:[#allocation14] sm:$0xf]
    %v1045 = vld [vmem:[#allocation16] sm:$0xf]
    %v1046 = vrot.slane %v963, 4
    %v1047 = vadd.f32 %v963, %v1046
    %v1048 = vrot.slane %v1047, 2
    %v1049 = vadd.f32 %v1047, %v1048
    %v1050 = vrot.slane %v1049, 1
    %v1051 = vadd.f32 %v1049, %v1050
    %v1052 = vrot.slane %v989, 4
    %v1053 = vadd.f32 %v989, %v1052
    %v1054 = vrot.slane %v1053, 2
    %v1055 = vadd.f32 %v1053, %v1054
    %v1056 = vrot.slane %v1055, 1
    %v1057 = vadd.f32 %v1055, %v1056
    %v1058 = vrot.slane %v1015, 4
    %v1059 = vadd.f32 %v1015, %v1058
    %v1060 = vrot.slane %v1059, 2
    %v1061 = vadd.f32 %v1059, %v1060
    %v1062 = vrot.slane %v1061, 1
    %v1063 = vadd.f32 %v1061, %v1062
    %v1064 = vrot.slane %v1041, 4
    %v1065 = vadd.f32 %v1041, %v1064
    %v1066 = vrot.slane %v1065, 2
    %v1067 = vadd.f32 %v1065, %v1066
    %v1068 = vrot.slane %v1067, 1
    %v1069 = vadd.f32 %v1067, %v1068
    %v1070 = vmul.f32 %v1051, %v477
    %v1071 = vmul.f32 %v1057, %v477
    %v1072 = vmul.f32 %v1063, %v477
    %v1073 = vmul.f32 %v1069, %v477
    %v1074 = vsub.f32 %v963, %v1070
    %v1075 = vsub.f32 %v989, %v1071
    %v1076 = vsub.f32 %v1015, %v1072
    %v1077 = vsub.f32 %v1041, %v1073
    %v1078 = vmul.f32 %v1074, %v1074
    %v1079 = vmul.f32 %v1075, %v1075
    %v1080 = vmul.f32 %v1076, %v1076
    %v1081 = vmul.f32 %v1077, %v1077
    %v1082 = vrot.slane %v1078, 4
    %v1083 = vadd.f32 %v1078, %v1082
    %v1084 = vrot.slane %v1083, 2
    %v1085 = vadd.f32 %v1083, %v1084
    %v1086 = vrot.slane %v1085, 1
    %v1087 = vadd.f32 %v1085, %v1086
    %v1088 = vrot.slane %v1079, 4
    %v1089 = vadd.f32 %v1079, %v1088
    %v1090 = vrot.slane %v1089, 2
    %v1091 = vadd.f32 %v1089, %v1090
    %v1092 = vrot.slane %v1091, 1
    %v1093 = vadd.f32 %v1091, %v1092
    %v1094 = vrot.slane %v1080, 4
    %v1095 = vadd.f32 %v1080, %v1094
    %v1096 = vrot.slane %v1095, 2
    %v1097 = vadd.f32 %v1095, %v1096
    %v1098 = vrot.slane %v1097, 1
    %v1099 = vadd.f32 %v1097, %v1098
    %v1100 = vrot.slane %v1081, 4
    %v1101 = vadd.f32 %v1081, %v1100
    %v1102 = vrot.slane %v1101, 2
    %v1103 = vadd.f32 %v1101, %v1102
    %v1104 = vrot.slane %v1103, 1
    %v1105 = vadd.f32 %v1103, %v1104
    %v1106 = vmul.f32 %v1087, %v477
    %v1107 = vmul.f32 %v1093, %v477
    %v1108 = vmul.f32 %v1099, %v477
    %v1109 = vmul.f32 %v1105, %v477
    %v1110 = vadd.f32 %v1106, 1e-05
    %v1111 = vadd.f32 %v1107, 1e-05
    %v1112 = vadd.f32 %v1108, 1e-05
    %v1113 = vadd.f32 %v1109, 1e-05
    %v1114 = vrsqrt.pop %v1110
    %v1115 = vmul.f32 %v1114, %v1110
    %v1116 = vmul.f32 %v1115, %v1114
    %v1117 = vmul.f32 0.5, %v1116
    %v1118 = vsub.f32 1.5, %v1117
    %v1119 = vmul.f32 %v1114, %v1118
    %vm1120 = vweird.f32 %v1110
    %vm1121 = vweird.f32 %v1114
    %vm1122 = vmor %vm1120, %vm1121
    %v1123 = vsel %vm1122, %v1114, %v1119
    %v1124 = vrsqrt.pop %v1111
    %v1125 = vmul.f32 %v1124, %v1111
    %v1126 = vmul.f32 %v1125, %v1124
    %v1127 = vmul.f32 0.5, %v1126
    %v1128 = vsub.f32 1.5, %v1127
    %v1129 = vmul.f32 %v1124, %v1128
    %vm1130 = vweird.f32 %v1111
    %vm1131 = vweird.f32 %v1124
    %vm1132 = vmor %vm1130, %vm1131
    %v1133 = vsel %vm1132, %v1124, %v1129
    %v1134 = vrsqrt.pop %v1112
    %v1135 = vmul.f32 %v1134, %v1112
    %v1136 = vmul.f32 %v1135, %v1134
    %v1137 = vmul.f32 0.5, %v1136
    %v1138 = vsub.f32 1.5, %v1137
    %v1139 = vmul.f32 %v1134, %v1138
    %vm1140 = vweird.f32 %v1112
    %vm1141 = vweird.f32 %v1134
    %vm1142 = vmor %vm1140, %vm1141
    %v1143 = vsel %vm1142, %v1134, %v1139
    %v1144 = vrsqrt.pop %v1113
    %v1145 = vmul.f32 %v1144, %v1113
    %v1146 = vmul.f32 %v1145, %v1144
    %v1147 = vmul.f32 0.5, %v1146
    %v1148 = vsub.f32 1.5, %v1147
    %v1149 = vmul.f32 %v1144, %v1148
    %vm1150 = vweird.f32 %v1113
    %vm1151 = vweird.f32 %v1144
    %vm1152 = vmor %vm1150, %vm1151
    %v1153 = vsel %vm1152, %v1144, %v1149
    %v1158 = vrot.slane %v1133, 7
    %v1159 = vrot.slane %v1143, 6
    %v1160 = vrot.slane %v1153, 5
    %v1161 = vsel %vm523, %v1123, %v1158
    %vm1162 = vcmask 1042434
    %v1163 = vsel %vm1162, %v1159, %v1160
    %vm1164 = vcmask 1041408
    %v1165 = vsel %vm1164, %v1161, %v1163
    %v1167 = vmul.f32 %v1044, %v1165
    %v1172 = vrot.slane %v1071, 7
    %v1173 = vrot.slane %v1072, 6
    %v1174 = vrot.slane %v1073, 5
    %v1175 = vsel %vm523, %v1070, %v1172
    %v1176 = vsel %vm1162, %v1173, %v1174
    %v1177 = vsel %vm1164, %v1175, %v1176
    %v1179 = vmul.f32 %v1167, %v1177
    %v1180 = vsub.f32 %v1045, %v1179
    %v1182 = vperm.slane %v1167, 0
    %v1183 = vperm.slane %v1167, 1
    %v1184 = vperm.slane %v1167, 2
    %v1185 = vperm.slane %v1167, 3
    %v1190 = vmul.f32 %v963, %v1182
    %v1191 = vmul.f32 %v989, %v1183
    %v1192 = vmul.f32 %v1015, %v1184
    %v1193 = vmul.f32 %v1041, %v1185
    %v1195 = vperm.slane %v1180, 0
    %v1196 = vperm.slane %v1180, 1
    %v1197 = vperm.slane %v1180, 2
    %v1198 = vperm.slane %v1180, 3
    %v1203 = vadd.f32 %v1190, %v1195
    %v1204 = vadd.f32 %v1191, %v1196
    %v1205 = vadd.f32 %v1192, %v1197
    %v1206 = vadd.f32 %v1193, %v1198
    %vm1207 = vcmp.gt.f32.partialorder %v1203, 0.0
    %vm1208 = vcmp.gt.f32.partialorder %v1204, 0.0
    %vm1209 = vcmp.gt.f32.partialorder %v1205, 0.0
    %vm1210 = vcmp.gt.f32.partialorder %v1206, 0.0
    %v1211 = vmul.f32 %v1203, 0.2
    %v1212 = vmul.f32 %v1204, 0.2
    %v1213 = vmul.f32 %v1205, 0.2
    %v1214 = vmul.f32 %v1206, 0.2
    %v1215 = vsel %vm1207, %v1203, %v1211
    %v1216 = vsel %vm1208, %v1204, %v1212
    %v1217 = vsel %vm1209, %v1205, %v1213
    %v1218 = vsel %vm1210, %v1206, %v1214
    %v1219 = vpack.c.bf16 %v1215, %v1215
    %v1220 = vpack.c.bf16 %v1216, %v1216
    %v1221 = vpack.c.bf16 %v1217, %v1217
    %v1222 = vpack.c.bf16 %v1218, %v1218
    %v1223 = vld [vmem:[#allocation17] sm:$0xff]
    %v1224 = vld [vmem:[#allocation17 + $0x8] sm:$0xff]
    %v1225 = vld [vmem:[#allocation17 + $0x10] sm:$0xff]
    %v1226 = vld [vmem:[#allocation17 + $0x18] sm:$0xff]
    %v1227 = vld [vmem:[#allocation17 + $0x20] sm:$0xff]
    %v1228 = vld [vmem:[#allocation17 + $0x28] sm:$0xff]
    %v1229 = vld [vmem:[#allocation17 + $0x30] sm:$0xff]
    %v1230 = vld [vmem:[#allocation17 + $0x38] sm:$0xff]
    %v1231 = vld [vmem:[#allocation17 + $0x40] sm:$0xff]
    %v1232 = vld [vmem:[#allocation17 + $0x48] sm:$0xff]
    %v1233 = vld [vmem:[#allocation17 + $0x50] sm:$0xff]
    %v1234 = vld [vmem:[#allocation17 + $0x58] sm:$0xff]
    %v1235 = vld [vmem:[#allocation17 + $0x60] sm:$0xff]
    %v1236 = vld [vmem:[#allocation17 + $0x68] sm:$0xff]
    %v1237 = vld [vmem:[#allocation17 + $0x70] sm:$0xff]
    %v1238 = vld [vmem:[#allocation17 + $0x78] sm:$0xff]
    %v1239 = vld [vmem:[#allocation17 + $0x80] sm:$0xff]
    %v1240 = vld [vmem:[#allocation17 + $0x88] sm:$0xff]
    %v1241 = vld [vmem:[#allocation17 + $0x90] sm:$0xff]
    %v1242 = vld [vmem:[#allocation17 + $0x98] sm:$0xff]
    %v1243 = vld [vmem:[#allocation17 + $0xa0] sm:$0xff]
    %v1244 = vld [vmem:[#allocation17 + $0xa8] sm:$0xff]
    %v1245 = vld [vmem:[#allocation17 + $0xb0] sm:$0xff]
    %v1246 = vld [vmem:[#allocation17 + $0xb8] sm:$0xff]
    %v1247 = vld [vmem:[#allocation17 + $0xc0] sm:$0xff]
    %v1248 = vld [vmem:[#allocation17 + $0xc8] sm:$0xff]
    %v1249 = vld [vmem:[#allocation17 + $0xd0] sm:$0xff]
    %v1250 = vld [vmem:[#allocation17 + $0xd8] sm:$0xff]
    %v1251 = vld [vmem:[#allocation17 + $0xe0] sm:$0xff]
    %v1252 = vld [vmem:[#allocation17 + $0xe8] sm:$0xff]
    %v1253 = vld [vmem:[#allocation17 + $0xf0] sm:$0xff]
    %v1254 = vld [vmem:[#allocation17 + $0xf8] sm:$0xff]
    %v1255 = vld [vmem:[#allocation17 + $0x100] sm:$0xff]
    %v1256 = vld [vmem:[#allocation17 + $0x108] sm:$0xff]
    %v1257 = vld [vmem:[#allocation17 + $0x110] sm:$0xff]
    %v1258 = vld [vmem:[#allocation17 + $0x118] sm:$0xff]
    %v1259 = vld [vmem:[#allocation17 + $0x120] sm:$0xff]
    %v1260 = vld [vmem:[#allocation17 + $0x128] sm:$0xff]
    %v1261 = vld [vmem:[#allocation17 + $0x130] sm:$0xff]
    %v1262 = vld [vmem:[#allocation17 + $0x138] sm:$0xff]
    %v1263 = vld [vmem:[#allocation17 + $0x140] sm:$0xff]
    %v1264 = vld [vmem:[#allocation17 + $0x148] sm:$0xff]
    %v1265 = vld [vmem:[#allocation17 + $0x150] sm:$0xff]
    %v1266 = vld [vmem:[#allocation17 + $0x158] sm:$0xff]
    %v1267 = vld [vmem:[#allocation17 + $0x160] sm:$0xff]
    %v1268 = vld [vmem:[#allocation17 + $0x168] sm:$0xff]
    %v1269 = vld [vmem:[#allocation17 + $0x170] sm:$0xff]
    %v1270 = vld [vmem:[#allocation17 + $0x178] sm:$0xff]
    %v1271 = vld [vmem:[#allocation17 + $0x180] sm:$0xff]
    %v1272 = vld [vmem:[#allocation17 + $0x188] sm:$0xff]
    %v1273 = vld [vmem:[#allocation17 + $0x190] sm:$0xff]
    %v1274 = vld [vmem:[#allocation17 + $0x198] sm:$0xff]
    %v1275 = vld [vmem:[#allocation17 + $0x1a0] sm:$0xff]
    %v1276 = vld [vmem:[#allocation17 + $0x1a8] sm:$0xff]
    %v1277 = vld [vmem:[#allocation17 + $0x1b0] sm:$0xff]
    %v1278 = vld [vmem:[#allocation17 + $0x1b8] sm:$0xff]
    %v1279 = vld [vmem:[#allocation17 + $0x1c0] sm:$0xff]
    %v1280 = vld [vmem:[#allocation17 + $0x1c8] sm:$0xff]
    %v1281 = vld [vmem:[#allocation17 + $0x1d0] sm:$0xff]
    %v1282 = vld [vmem:[#allocation17 + $0x1d8] sm:$0xff]
    %v1283 = vld [vmem:[#allocation17 + $0x1e0] sm:$0xff]
    %v1284 = vld [vmem:[#allocation17 + $0x1e8] sm:$0xff]
    %v1285 = vld [vmem:[#allocation17 + $0x1f0] sm:$0xff]
    %v1286 = vld [vmem:[#allocation17 + $0x1f8] sm:$0xff]
    %v1287 = vld [vmem:[#allocation17 + $0x200] sm:$0xff]
    %v1288 = vld [vmem:[#allocation17 + $0x208] sm:$0xff]
    %v1289 = vld [vmem:[#allocation17 + $0x210] sm:$0xff]
    %v1290 = vld [vmem:[#allocation17 + $0x218] sm:$0xff]
    %v1291 = vld [vmem:[#allocation17 + $0x220] sm:$0xff]
    %v1292 = vld [vmem:[#allocation17 + $0x228] sm:$0xff]
    %v1293 = vld [vmem:[#allocation17 + $0x230] sm:$0xff]
    %v1294 = vld [vmem:[#allocation17 + $0x238] sm:$0xff]
    %v1295 = vld [vmem:[#allocation17 + $0x240] sm:$0xff]
    %v1296 = vld [vmem:[#allocation17 + $0x248] sm:$0xff]
    %v1297 = vld [vmem:[#allocation17 + $0x250] sm:$0xff]
    %v1298 = vld [vmem:[#allocation17 + $0x258] sm:$0xff]
    %v1299 = vld [vmem:[#allocation17 + $0x260] sm:$0xff]
    %v1300 = vld [vmem:[#allocation17 + $0x268] sm:$0xff]
    %v1301 = vld [vmem:[#allocation17 + $0x270] sm:$0xff]
    %v1302 = vld [vmem:[#allocation17 + $0x278] sm:$0xff]
    %v1303 = vld [vmem:[#allocation17 + $0x280] sm:$0xff]
    %v1304 = vld [vmem:[#allocation17 + $0x288] sm:$0xff]
    %v1305 = vld [vmem:[#allocation17 + $0x290] sm:$0xff]
    %v1306 = vld [vmem:[#allocation17 + $0x298] sm:$0xff]
    %v1307 = vld [vmem:[#allocation17 + $0x2a0] sm:$0xff]
    %v1308 = vld [vmem:[#allocation17 + $0x2a8] sm:$0xff]
    %v1309 = vld [vmem:[#allocation17 + $0x2b0] sm:$0xff]
    %v1310 = vld [vmem:[#allocation17 + $0x2b8] sm:$0xff]
    %v1311 = vld [vmem:[#allocation17 + $0x2c0] sm:$0xff]
    %v1312 = vld [vmem:[#allocation17 + $0x2c8] sm:$0xff]
    %v1313 = vld [vmem:[#allocation17 + $0x2d0] sm:$0xff]
    %v1314 = vld [vmem:[#allocation17 + $0x2d8] sm:$0xff]
    %v1315 = vld [vmem:[#allocation17 + $0x2e0] sm:$0xff]
    %v1316 = vld [vmem:[#allocation17 + $0x2e8] sm:$0xff]
    %v1317 = vld [vmem:[#allocation17 + $0x2f0] sm:$0xff]
    %v1318 = vld [vmem:[#allocation17 + $0x2f8] sm:$0xff]
    %v1319 = vld [vmem:[#allocation17 + $0x300] sm:$0xff]
    %v1320 = vld [vmem:[#allocation17 + $0x308] sm:$0xff]
    %v1321 = vld [vmem:[#allocation17 + $0x310] sm:$0xff]
    %v1322 = vld [vmem:[#allocation17 + $0x318] sm:$0xff]
    %v1323 = vld [vmem:[#allocation17 + $0x320] sm:$0xff]
    %v1324 = vld [vmem:[#allocation17 + $0x328] sm:$0xff]
    %v1325 = vld [vmem:[#allocation17 + $0x330] sm:$0xff]
    %v1326 = vld [vmem:[#allocation17 + $0x338] sm:$0xff]
    %v1327 = vld [vmem:[#allocation17 + $0x340] sm:$0xff]
    %v1328 = vld [vmem:[#allocation17 + $0x348] sm:$0xff]
    %v1329 = vld [vmem:[#allocation17 + $0x350] sm:$0xff]
    %v1330 = vld [vmem:[#allocation17 + $0x358] sm:$0xff]
    %v1331 = vld [vmem:[#allocation17 + $0x360] sm:$0xff]
    %v1332 = vld [vmem:[#allocation17 + $0x368] sm:$0xff]
    %v1333 = vld [vmem:[#allocation17 + $0x370] sm:$0xff]
    %v1334 = vld [vmem:[#allocation17 + $0x378] sm:$0xff]
    %v1335 = vld [vmem:[#allocation17 + $0x380] sm:$0xff]
    %v1336 = vld [vmem:[#allocation17 + $0x388] sm:$0xff]
    %v1337 = vld [vmem:[#allocation17 + $0x390] sm:$0xff]
    %v1338 = vld [vmem:[#allocation17 + $0x398] sm:$0xff]
    %v1339 = vld [vmem:[#allocation17 + $0x3a0] sm:$0xff]
    %v1340 = vld [vmem:[#allocation17 + $0x3a8] sm:$0xff]
    %v1341 = vld [vmem:[#allocation17 + $0x3b0] sm:$0xff]
    %v1342 = vld [vmem:[#allocation17 + $0x3b8] sm:$0xff]
    %v1343 = vld [vmem:[#allocation17 + $0x3c0] sm:$0xff]
    %v1344 = vld [vmem:[#allocation17 + $0x3c8] sm:$0xff]
    %v1345 = vld [vmem:[#allocation17 + $0x3d0] sm:$0xff]
    %v1346 = vld [vmem:[#allocation17 + $0x3d8] sm:$0xff]
    %v1347 = vld [vmem:[#allocation17 + $0x3e0] sm:$0xff]
    %v1348 = vld [vmem:[#allocation17 + $0x3e8] sm:$0xff]
    %v1349 = vld [vmem:[#allocation17 + $0x3f0] sm:$0xff]
    %v1350 = vld [vmem:[#allocation17 + $0x3f8] sm:$0xff]
    %v1351 = vld [vmem:[#allocation17 + $0x400] sm:$0xff]
    %v1352 = vld [vmem:[#allocation17 + $0x408] sm:$0xff]
    %v1353 = vld [vmem:[#allocation17 + $0x410] sm:$0xff]
    %v1354 = vld [vmem:[#allocation17 + $0x418] sm:$0xff]
    %v1355 = vld [vmem:[#allocation17 + $0x420] sm:$0xff]
    %v1356 = vld [vmem:[#allocation17 + $0x428] sm:$0xff]
    %v1357 = vld [vmem:[#allocation17 + $0x430] sm:$0xff]
    %v1358 = vld [vmem:[#allocation17 + $0x438] sm:$0xff]
    %v1359 = vld [vmem:[#allocation17 + $0x440] sm:$0xff]
    %v1360 = vld [vmem:[#allocation17 + $0x448] sm:$0xff]
    %v1361 = vld [vmem:[#allocation17 + $0x450] sm:$0xff]
    %v1362 = vld [vmem:[#allocation17 + $0x458] sm:$0xff]
    %v1363 = vld [vmem:[#allocation17 + $0x460] sm:$0xff]
    %v1364 = vld [vmem:[#allocation17 + $0x468] sm:$0xff]
    %v1365 = vld [vmem:[#allocation17 + $0x470] sm:$0xff]
    %v1366 = vld [vmem:[#allocation17 + $0x478] sm:$0xff]
    %v1367 = vld [vmem:[#allocation17 + $0x480] sm:$0xff]
    %v1368 = vld [vmem:[#allocation17 + $0x488] sm:$0xff]
    %v1369 = vld [vmem:[#allocation17 + $0x490] sm:$0xff]
    %v1370 = vld [vmem:[#allocation17 + $0x498] sm:$0xff]
    %v1371 = vld [vmem:[#allocation17 + $0x4a0] sm:$0xff]
    %v1372 = vld [vmem:[#allocation17 + $0x4a8] sm:$0xff]
    %v1373 = vld [vmem:[#allocation17 + $0x4b0] sm:$0xff]
    %v1374 = vld [vmem:[#allocation17 + $0x4b8] sm:$0xff]
    %v1375 = vld [vmem:[#allocation17 + $0x4c0] sm:$0xff]
    %v1376 = vld [vmem:[#allocation17 + $0x4c8] sm:$0xff]
    %v1377 = vld [vmem:[#allocation17 + $0x4d0] sm:$0xff]
    %v1378 = vld [vmem:[#allocation17 + $0x4d8] sm:$0xff]
    %v1379 = vld [vmem:[#allocation17 + $0x4e0] sm:$0xff]
    %v1380 = vld [vmem:[#allocation17 + $0x4e8] sm:$0xff]
    %v1381 = vld [vmem:[#allocation17 + $0x4f0] sm:$0xff]
    %v1382 = vld [vmem:[#allocation17 + $0x4f8] sm:$0xff]
    %v1383 = vld [vmem:[#allocation17 + $0x500] sm:$0xff]
    %v1384 = vld [vmem:[#allocation17 + $0x508] sm:$0xff]
    %v1385 = vld [vmem:[#allocation17 + $0x510] sm:$0xff]
    %v1386 = vld [vmem:[#allocation17 + $0x518] sm:$0xff]
    %v1387 = vld [vmem:[#allocation17 + $0x520] sm:$0xff]
    %v1388 = vld [vmem:[#allocation17 + $0x528] sm:$0xff]
    %v1389 = vld [vmem:[#allocation17 + $0x530] sm:$0xff]
    %v1390 = vld [vmem:[#allocation17 + $0x538] sm:$0xff]
    %v1391 = vld [vmem:[#allocation17 + $0x540] sm:$0xff]
    %v1392 = vld [vmem:[#allocation17 + $0x548] sm:$0xff]
    %v1393 = vld [vmem:[#allocation17 + $0x550] sm:$0xff]
    %v1394 = vld [vmem:[#allocation17 + $0x558] sm:$0xff]
    %v1395 = vld [vmem:[#allocation17 + $0x560] sm:$0xff]
    %v1396 = vld [vmem:[#allocation17 + $0x568] sm:$0xff]
    %v1397 = vld [vmem:[#allocation17 + $0x570] sm:$0xff]
    %v1398 = vld [vmem:[#allocation17 + $0x578] sm:$0xff]
    %v1399 = vld [vmem:[#allocation17 + $0x580] sm:$0xff]
    %v1400 = vld [vmem:[#allocation17 + $0x588] sm:$0xff]
    %v1401 = vld [vmem:[#allocation17 + $0x590] sm:$0xff]
    %v1402 = vld [vmem:[#allocation17 + $0x598] sm:$0xff]
    %v1403 = vld [vmem:[#allocation17 + $0x5a0] sm:$0xff]
    %v1404 = vld [vmem:[#allocation17 + $0x5a8] sm:$0xff]
    %v1405 = vld [vmem:[#allocation17 + $0x5b0] sm:$0xff]
    %v1406 = vld [vmem:[#allocation17 + $0x5b8] sm:$0xff]
    %v1407 = vld [vmem:[#allocation17 + $0x5c0] sm:$0xff]
    %v1408 = vld [vmem:[#allocation17 + $0x5c8] sm:$0xff]
    %v1409 = vld [vmem:[#allocation17 + $0x5d0] sm:$0xff]
    %v1410 = vld [vmem:[#allocation17 + $0x5d8] sm:$0xff]
    %v1411 = vld [vmem:[#allocation17 + $0x5e0] sm:$0xff]
    %v1412 = vld [vmem:[#allocation17 + $0x5e8] sm:$0xff]
    %v1413 = vld [vmem:[#allocation17 + $0x5f0] sm:$0xff]
    %v1414 = vld [vmem:[#allocation17 + $0x5f8] sm:$0xff]
    %v1415 = vld [vmem:[#allocation17 + $0x600] sm:$0xff]
    %v1416 = vld [vmem:[#allocation17 + $0x608] sm:$0xff]
    %v1417 = vld [vmem:[#allocation17 + $0x610] sm:$0xff]
    %v1418 = vld [vmem:[#allocation17 + $0x618] sm:$0xff]
    %v1419 = vld [vmem:[#allocation17 + $0x620] sm:$0xff]
    %v1420 = vld [vmem:[#allocation17 + $0x628] sm:$0xff]
    %v1421 = vld [vmem:[#allocation17 + $0x630] sm:$0xff]
    %v1422 = vld [vmem:[#allocation17 + $0x638] sm:$0xff]
    %v1423 = vld [vmem:[#allocation17 + $0x640] sm:$0xff]
    %v1424 = vld [vmem:[#allocation17 + $0x648] sm:$0xff]
    %v1425 = vld [vmem:[#allocation17 + $0x650] sm:$0xff]
    %v1426 = vld [vmem:[#allocation17 + $0x658] sm:$0xff]
    %v1427 = vld [vmem:[#allocation17 + $0x660] sm:$0xff]
    %v1428 = vld [vmem:[#allocation17 + $0x668] sm:$0xff]
    %v1429 = vld [vmem:[#allocation17 + $0x670] sm:$0xff]
    %v1430 = vld [vmem:[#allocation17 + $0x678] sm:$0xff]
    %v1431 = vld [vmem:[#allocation17 + $0x680] sm:$0xff]
    %v1432 = vld [vmem:[#allocation17 + $0x688] sm:$0xff]
    %v1433 = vld [vmem:[#allocation17 + $0x690] sm:$0xff]
    %v1434 = vld [vmem:[#allocation17 + $0x698] sm:$0xff]
    %v1435 = vld [vmem:[#allocation17 + $0x6a0] sm:$0xff]
    %v1436 = vld [vmem:[#allocation17 + $0x6a8] sm:$0xff]
    %v1437 = vld [vmem:[#allocation17 + $0x6b0] sm:$0xff]
    %v1438 = vld [vmem:[#allocation17 + $0x6b8] sm:$0xff]
    %v1439 = vld [vmem:[#allocation17 + $0x6c0] sm:$0xff]
    %v1440 = vld [vmem:[#allocation17 + $0x6c8] sm:$0xff]
    %v1441 = vld [vmem:[#allocation17 + $0x6d0] sm:$0xff]
    %v1442 = vld [vmem:[#allocation17 + $0x6d8] sm:$0xff]
    %v1443 = vld [vmem:[#allocation17 + $0x6e0] sm:$0xff]
    %v1444 = vld [vmem:[#allocation17 + $0x6e8] sm:$0xff]
    %v1445 = vld [vmem:[#allocation17 + $0x6f0] sm:$0xff]
    %v1446 = vld [vmem:[#allocation17 + $0x6f8] sm:$0xff]
    %v1447 = vld [vmem:[#allocation17 + $0x700] sm:$0xff]
    %v1448 = vld [vmem:[#allocation17 + $0x708] sm:$0xff]
    %v1449 = vld [vmem:[#allocation17 + $0x710] sm:$0xff]
    %v1450 = vld [vmem:[#allocation17 + $0x718] sm:$0xff]
    %v1451 = vld [vmem:[#allocation17 + $0x720] sm:$0xff]
    %v1452 = vld [vmem:[#allocation17 + $0x728] sm:$0xff]
    %v1453 = vld [vmem:[#allocation17 + $0x730] sm:$0xff]
    %v1454 = vld [vmem:[#allocation17 + $0x738] sm:$0xff]
    %v1455 = vld [vmem:[#allocation17 + $0x740] sm:$0xff]
    %v1456 = vld [vmem:[#allocation17 + $0x748] sm:$0xff]
    %v1457 = vld [vmem:[#allocation17 + $0x750] sm:$0xff]
    %v1458 = vld [vmem:[#allocation17 + $0x758] sm:$0xff]
    %v1459 = vld [vmem:[#allocation17 + $0x760] sm:$0xff]
    %v1460 = vld [vmem:[#allocation17 + $0x768] sm:$0xff]
    %v1461 = vld [vmem:[#allocation17 + $0x770] sm:$0xff]
    %v1462 = vld [vmem:[#allocation17 + $0x778] sm:$0xff]
    %v1463 = vld [vmem:[#allocation17 + $0x780] sm:$0xff]
    %v1464 = vld [vmem:[#allocation17 + $0x788] sm:$0xff]
    %v1465 = vld [vmem:[#allocation17 + $0x790] sm:$0xff]
    %v1466 = vld [vmem:[#allocation17 + $0x798] sm:$0xff]
    %v1467 = vld [vmem:[#allocation17 + $0x7a0] sm:$0xff]
    %v1468 = vld [vmem:[#allocation17 + $0x7a8] sm:$0xff]
    %v1469 = vld [vmem:[#allocation17 + $0x7b0] sm:$0xff]
    %v1470 = vld [vmem:[#allocation17 + $0x7b8] sm:$0xff]
    %v1471 = vld [vmem:[#allocation17 + $0x7c0] sm:$0xff]
    %v1472 = vld [vmem:[#allocation17 + $0x7c8] sm:$0xff]
    %v1473 = vld [vmem:[#allocation17 + $0x7d0] sm:$0xff]
    %v1474 = vld [vmem:[#allocation17 + $0x7d8] sm:$0xff]
    %v1475 = vld [vmem:[#allocation17 + $0x7e0] sm:$0xff]
    %v1476 = vld [vmem:[#allocation17 + $0x7e8] sm:$0xff]
    %v1477 = vld [vmem:[#allocation17 + $0x7f0] sm:$0xff]
    %v1478 = vld [vmem:[#allocation17 + $0x7f8] sm:$0xff]
    %v1735 = vunpack.c.l.b16 %v1223
    %v1736 = vunpack.c.h.b16 %v1223
    %v1737 = vunpack.c.l.b16 %v1224
    %v1738 = vunpack.c.h.b16 %v1224
    %v1739 = vunpack.c.l.b16 %v1225
    %v1740 = vunpack.c.h.b16 %v1225
    %v1741 = vunpack.c.l.b16 %v1226
    %v1742 = vunpack.c.h.b16 %v1226
    %v1743 = vunpack.c.l.b16 %v1227
    %v1744 = vunpack.c.h.b16 %v1227
    %v1745 = vunpack.c.l.b16 %v1228
    %v1746 = vunpack.c.h.b16 %v1228
    %v1747 = vunpack.c.l.b16 %v1229
    %v1748 = vunpack.c.h.b16 %v1229
    %v1749 = vunpack.c.l.b16 %v1230
    %v1750 = vunpack.c.h.b16 %v1230
    %v1751 = vunpack.c.l.b16 %v1231
    %v1752 = vunpack.c.h.b16 %v1231
    %v1753 = vunpack.c.l.b16 %v1232
    %v1754 = vunpack.c.h.b16 %v1232
    %v1755 = vunpack.c.l.b16 %v1233
    %v1756 = vunpack.c.h.b16 %v1233
    %v1757 = vunpack.c.l.b16 %v1234
    %v1758 = vunpack.c.h.b16 %v1234
    %v1759 = vunpack.c.l.b16 %v1235
    %v1760 = vunpack.c.h.b16 %v1235
    %v1761 = vunpack.c.l.b16 %v1236
    %v1762 = vunpack.c.h.b16 %v1236
    %v1763 = vunpack.c.l.b16 %v1237
    %v1764 = vunpack.c.h.b16 %v1237
    %v1765 = vunpack.c.l.b16 %v1238
    %v1766 = vunpack.c.h.b16 %v1238
    %v1767 = vunpack.c.l.b16 %v1239
    %v1768 = vunpack.c.h.b16 %v1239
    %v1769 = vunpack.c.l.b16 %v1240
    %v1770 = vunpack.c.h.b16 %v1240
    %v1771 = vunpack.c.l.b16 %v1241
    %v1772 = vunpack.c.h.b16 %v1241
    %v1773 = vunpack.c.l.b16 %v1242
    %v1774 = vunpack.c.h.b16 %v1242
    %v1775 = vunpack.c.l.b16 %v1243
    %v1776 = vunpack.c.h.b16 %v1243
    %v1777 = vunpack.c.l.b16 %v1244
    %v1778 = vunpack.c.h.b16 %v1244
    %v1779 = vunpack.c.l.b16 %v1245
    %v1780 = vunpack.c.h.b16 %v1245
    %v1781 = vunpack.c.l.b16 %v1246
    %v1782 = vunpack.c.h.b16 %v1246
    %v1783 = vunpack.c.l.b16 %v1247
    %v1784 = vunpack.c.h.b16 %v1247
    %v1785 = vunpack.c.l.b16 %v1248
    %v1786 = vunpack.c.h.b16 %v1248
    %v1787 = vunpack.c.l.b16 %v1249
    %v1788 = vunpack.c.h.b16 %v1249
    %v1789 = vunpack.c.l.b16 %v1250
    %v1790 = vunpack.c.h.b16 %v1250
    %v1791 = vunpack.c.l.b16 %v1251
    %v1792 = vunpack.c.h.b16 %v1251
    %v1793 = vunpack.c.l.b16 %v1252
    %v1794 = vunpack.c.h.b16 %v1252
    %v1795 = vunpack.c.l.b16 %v1253
    %v1796 = vunpack.c.h.b16 %v1253
    %v1797 = vunpack.c.l.b16 %v1254
    %v1798 = vunpack.c.h.b16 %v1254
    %v1799 = vunpack.c.l.b16 %v1255
    %v1800 = vunpack.c.h.b16 %v1255
    %v1801 = vunpack.c.l.b16 %v1256
    %v1802 = vunpack.c.h.b16 %v1256
    %v1803 = vunpack.c.l.b16 %v1257
    %v1804 = vunpack.c.h.b16 %v1257
    %v1805 = vunpack.c.l.b16 %v1258
    %v1806 = vunpack.c.h.b16 %v1258
    %v1807 = vunpack.c.l.b16 %v1259
    %v1808 = vunpack.c.h.b16 %v1259
    %v1809 = vunpack.c.l.b16 %v1260
    %v1810 = vunpack.c.h.b16 %v1260
    %v1811 = vunpack.c.l.b16 %v1261
    %v1812 = vunpack.c.h.b16 %v1261
    %v1813 = vunpack.c.l.b16 %v1262
    %v1814 = vunpack.c.h.b16 %v1262
    %v1815 = vunpack.c.l.b16 %v1263
    %v1816 = vunpack.c.h.b16 %v1263
    %v1817 = vunpack.c.l.b16 %v1264
    %v1818 = vunpack.c.h.b16 %v1264
    %v1819 = vunpack.c.l.b16 %v1265
    %v1820 = vunpack.c.h.b16 %v1265
    %v1821 = vunpack.c.l.b16 %v1266
    %v1822 = vunpack.c.h.b16 %v1266
    %v1823 = vunpack.c.l.b16 %v1267
    %v1824 = vunpack.c.h.b16 %v1267
    %v1825 = vunpack.c.l.b16 %v1268
    %v1826 = vunpack.c.h.b16 %v1268
    %v1827 = vunpack.c.l.b16 %v1269
    %v1828 = vunpack.c.h.b16 %v1269
    %v1829 = vunpack.c.l.b16 %v1270
    %v1830 = vunpack.c.h.b16 %v1270
    %v1831 = vunpack.c.l.b16 %v1271
    %v1832 = vunpack.c.h.b16 %v1271
    %v1833 = vunpack.c.l.b16 %v1272
    %v1834 = vunpack.c.h.b16 %v1272
    %v1835 = vunpack.c.l.b16 %v1273
    %v1836 = vunpack.c.h.b16 %v1273
    %v1837 = vunpack.c.l.b16 %v1274
    %v1838 = vunpack.c.h.b16 %v1274
    %v1839 = vunpack.c.l.b16 %v1275
    %v1840 = vunpack.c.h.b16 %v1275
    %v1841 = vunpack.c.l.b16 %v1276
    %v1842 = vunpack.c.h.b16 %v1276
    %v1843 = vunpack.c.l.b16 %v1277
    %v1844 = vunpack.c.h.b16 %v1277
    %v1845 = vunpack.c.l.b16 %v1278
    %v1846 = vunpack.c.h.b16 %v1278
    %v1847 = vunpack.c.l.b16 %v1279
    %v1848 = vunpack.c.h.b16 %v1279
    %v1849 = vunpack.c.l.b16 %v1280
    %v1850 = vunpack.c.h.b16 %v1280
    %v1851 = vunpack.c.l.b16 %v1281
    %v1852 = vunpack.c.h.b16 %v1281
    %v1853 = vunpack.c.l.b16 %v1282
    %v1854 = vunpack.c.h.b16 %v1282
    %v1855 = vunpack.c.l.b16 %v1283
    %v1856 = vunpack.c.h.b16 %v1283
    %v1857 = vunpack.c.l.b16 %v1284
    %v1858 = vunpack.c.h.b16 %v1284
    %v1859 = vunpack.c.l.b16 %v1285
    %v1860 = vunpack.c.h.b16 %v1285
    %v1861 = vunpack.c.l.b16 %v1286
    %v1862 = vunpack.c.h.b16 %v1286
    %v1863 = vunpack.c.l.b16 %v1287
    %v1864 = vunpack.c.h.b16 %v1287
    %v1865 = vunpack.c.l.b16 %v1288
    %v1866 = vunpack.c.h.b16 %v1288
    %v1867 = vunpack.c.l.b16 %v1289
    %v1868 = vunpack.c.h.b16 %v1289
    %v1869 = vunpack.c.l.b16 %v1290
    %v1870 = vunpack.c.h.b16 %v1290
    %v1871 = vunpack.c.l.b16 %v1291
    %v1872 = vunpack.c.h.b16 %v1291
    %v1873 = vunpack.c.l.b16 %v1292
    %v1874 = vunpack.c.h.b16 %v1292
    %v1875 = vunpack.c.l.b16 %v1293
    %v1876 = vunpack.c.h.b16 %v1293
    %v1877 = vunpack.c.l.b16 %v1294
    %v1878 = vunpack.c.h.b16 %v1294
    %v1879 = vunpack.c.l.b16 %v1295
    %v1880 = vunpack.c.h.b16 %v1295
    %v1881 = vunpack.c.l.b16 %v1296
    %v1882 = vunpack.c.h.b16 %v1296
    %v1883 = vunpack.c.l.b16 %v1297
    %v1884 = vunpack.c.h.b16 %v1297
    %v1885 = vunpack.c.l.b16 %v1298
    %v1886 = vunpack.c.h.b16 %v1298
    %v1887 = vunpack.c.l.b16 %v1299
    %v1888 = vunpack.c.h.b16 %v1299
    %v1889 = vunpack.c.l.b16 %v1300
    %v1890 = vunpack.c.h.b16 %v1300
    %v1891 = vunpack.c.l.b16 %v1301
    %v1892 = vunpack.c.h.b16 %v1301
    %v1893 = vunpack.c.l.b16 %v1302
    %v1894 = vunpack.c.h.b16 %v1302
    %v1895 = vunpack.c.l.b16 %v1303
    %v1896 = vunpack.c.h.b16 %v1303
    %v1897 = vunpack.c.l.b16 %v1304
    %v1898 = vunpack.c.h.b16 %v1304
    %v1899 = vunpack.c.l.b16 %v1305
    %v1900 = vunpack.c.h.b16 %v1305
    %v1901 = vunpack.c.l.b16 %v1306
    %v1902 = vunpack.c.h.b16 %v1306
    %v1903 = vunpack.c.l.b16 %v1307
    %v1904 = vunpack.c.h.b16 %v1307
    %v1905 = vunpack.c.l.b16 %v1308
    %v1906 = vunpack.c.h.b16 %v1308
    %v1907 = vunpack.c.l.b16 %v1309
    %v1908 = vunpack.c.h.b16 %v1309
    %v1909 = vunpack.c.l.b16 %v1310
    %v1910 = vunpack.c.h.b16 %v1310
    %v1911 = vunpack.c.l.b16 %v1311
    %v1912 = vunpack.c.h.b16 %v1311
    %v1913 = vunpack.c.l.b16 %v1312
    %v1914 = vunpack.c.h.b16 %v1312
    %v1915 = vunpack.c.l.b16 %v1313
    %v1916 = vunpack.c.h.b16 %v1313
    %v1917 = vunpack.c.l.b16 %v1314
    %v1918 = vunpack.c.h.b16 %v1314
    %v1919 = vunpack.c.l.b16 %v1315
    %v1920 = vunpack.c.h.b16 %v1315
    %v1921 = vunpack.c.l.b16 %v1316
    %v1922 = vunpack.c.h.b16 %v1316
    %v1923 = vunpack.c.l.b16 %v1317
    %v1924 = vunpack.c.h.b16 %v1317
    %v1925 = vunpack.c.l.b16 %v1318
    %v1926 = vunpack.c.h.b16 %v1318
    %v1927 = vunpack.c.l.b16 %v1319
    %v1928 = vunpack.c.h.b16 %v1319
    %v1929 = vunpack.c.l.b16 %v1320
    %v1930 = vunpack.c.h.b16 %v1320
    %v1931 = vunpack.c.l.b16 %v1321
    %v1932 = vunpack.c.h.b16 %v1321
    %v1933 = vunpack.c.l.b16 %v1322
    %v1934 = vunpack.c.h.b16 %v1322
    %v1935 = vunpack.c.l.b16 %v1323
    %v1936 = vunpack.c.h.b16 %v1323
    %v1937 = vunpack.c.l.b16 %v1324
    %v1938 = vunpack.c.h.b16 %v1324
    %v1939 = vunpack.c.l.b16 %v1325
    %v1940 = vunpack.c.h.b16 %v1325
    %v1941 = vunpack.c.l.b16 %v1326
    %v1942 = vunpack.c.h.b16 %v1326
    %v1943 = vunpack.c.l.b16 %v1327
    %v1944 = vunpack.c.h.b16 %v1327
    %v1945 = vunpack.c.l.b16 %v1328
    %v1946 = vunpack.c.h.b16 %v1328
    %v1947 = vunpack.c.l.b16 %v1329
    %v1948 = vunpack.c.h.b16 %v1329
    %v1949 = vunpack.c.l.b16 %v1330
    %v1950 = vunpack.c.h.b16 %v1330
    %v1951 = vunpack.c.l.b16 %v1331
    %v1952 = vunpack.c.h.b16 %v1331
    %v1953 = vunpack.c.l.b16 %v1332
    %v1954 = vunpack.c.h.b16 %v1332
    %v1955 = vunpack.c.l.b16 %v1333
    %v1956 = vunpack.c.h.b16 %v1333
    %v1957 = vunpack.c.l.b16 %v1334
    %v1958 = vunpack.c.h.b16 %v1334
    %v1959 = vunpack.c.l.b16 %v1335
    %v1960 = vunpack.c.h.b16 %v1335
    %v1961 = vunpack.c.l.b16 %v1336
    %v1962 = vunpack.c.h.b16 %v1336
    %v1963 = vunpack.c.l.b16 %v1337
    %v1964 = vunpack.c.h.b16 %v1337
    %v1965 = vunpack.c.l.b16 %v1338
    %v1966 = vunpack.c.h.b16 %v1338
    %v1967 = vunpack.c.l.b16 %v1339
    %v1968 = vunpack.c.h.b16 %v1339
    %v1969 = vunpack.c.l.b16 %v1340
    %v1970 = vunpack.c.h.b16 %v1340
    %v1971 = vunpack.c.l.b16 %v1341
    %v1972 = vunpack.c.h.b16 %v1341
    %v1973 = vunpack.c.l.b16 %v1342
    %v1974 = vunpack.c.h.b16 %v1342
    %v1975 = vunpack.c.l.b16 %v1343
    %v1976 = vunpack.c.h.b16 %v1343
    %v1977 = vunpack.c.l.b16 %v1344
    %v1978 = vunpack.c.h.b16 %v1344
    %v1979 = vunpack.c.l.b16 %v1345
    %v1980 = vunpack.c.h.b16 %v1345
    %v1981 = vunpack.c.l.b16 %v1346
    %v1982 = vunpack.c.h.b16 %v1346
    %v1983 = vunpack.c.l.b16 %v1347
    %v1984 = vunpack.c.h.b16 %v1347
    %v1985 = vunpack.c.l.b16 %v1348
    %v1986 = vunpack.c.h.b16 %v1348
    %v1987 = vunpack.c.l.b16 %v1349
    %v1988 = vunpack.c.h.b16 %v1349
    %v1989 = vunpack.c.l.b16 %v1350
    %v1990 = vunpack.c.h.b16 %v1350
    %v1991 = vunpack.c.l.b16 %v1351
    %v1992 = vunpack.c.h.b16 %v1351
    %v1993 = vunpack.c.l.b16 %v1352
    %v1994 = vunpack.c.h.b16 %v1352
    %v1995 = vunpack.c.l.b16 %v1353
    %v1996 = vunpack.c.h.b16 %v1353
    %v1997 = vunpack.c.l.b16 %v1354
    %v1998 = vunpack.c.h.b16 %v1354
    %v1999 = vunpack.c.l.b16 %v1355
    %v2000 = vunpack.c.h.b16 %v1355
    %v2001 = vunpack.c.l.b16 %v1356
    %v2002 = vunpack.c.h.b16 %v1356
    %v2003 = vunpack.c.l.b16 %v1357
    %v2004 = vunpack.c.h.b16 %v1357
    %v2005 = vunpack.c.l.b16 %v1358
    %v2006 = vunpack.c.h.b16 %v1358
    %v2007 = vunpack.c.l.b16 %v1359
    %v2008 = vunpack.c.h.b16 %v1359
    %v2009 = vunpack.c.l.b16 %v1360
    %v2010 = vunpack.c.h.b16 %v1360
    %v2011 = vunpack.c.l.b16 %v1361
    %v2012 = vunpack.c.h.b16 %v1361
    %v2013 = vunpack.c.l.b16 %v1362
    %v2014 = vunpack.c.h.b16 %v1362
    %v2015 = vunpack.c.l.b16 %v1363
    %v2016 = vunpack.c.h.b16 %v1363
    %v2017 = vunpack.c.l.b16 %v1364
    %v2018 = vunpack.c.h.b16 %v1364
    %v2019 = vunpack.c.l.b16 %v1365
    %v2020 = vunpack.c.h.b16 %v1365
    %v2021 = vunpack.c.l.b16 %v1366
    %v2022 = vunpack.c.h.b16 %v1366
    %v2023 = vunpack.c.l.b16 %v1367
    %v2024 = vunpack.c.h.b16 %v1367
    %v2025 = vunpack.c.l.b16 %v1368
    %v2026 = vunpack.c.h.b16 %v1368
    %v2027 = vunpack.c.l.b16 %v1369
    %v2028 = vunpack.c.h.b16 %v1369
    %v2029 = vunpack.c.l.b16 %v1370
    %v2030 = vunpack.c.h.b16 %v1370
    %v2031 = vunpack.c.l.b16 %v1371
    %v2032 = vunpack.c.h.b16 %v1371
    %v2033 = vunpack.c.l.b16 %v1372
    %v2034 = vunpack.c.h.b16 %v1372
    %v2035 = vunpack.c.l.b16 %v1373
    %v2036 = vunpack.c.h.b16 %v1373
    %v2037 = vunpack.c.l.b16 %v1374
    %v2038 = vunpack.c.h.b16 %v1374
    %v2039 = vunpack.c.l.b16 %v1375
    %v2040 = vunpack.c.h.b16 %v1375
    %v2041 = vunpack.c.l.b16 %v1376
    %v2042 = vunpack.c.h.b16 %v1376
    %v2043 = vunpack.c.l.b16 %v1377
    %v2044 = vunpack.c.h.b16 %v1377
    %v2045 = vunpack.c.l.b16 %v1378
    %v2046 = vunpack.c.h.b16 %v1378
    %v2047 = vunpack.c.l.b16 %v1379
    %v2048 = vunpack.c.h.b16 %v1379
    %v2049 = vunpack.c.l.b16 %v1380
    %v2050 = vunpack.c.h.b16 %v1380
    %v2051 = vunpack.c.l.b16 %v1381
    %v2052 = vunpack.c.h.b16 %v1381
    %v2053 = vunpack.c.l.b16 %v1382
    %v2054 = vunpack.c.h.b16 %v1382
    %v2055 = vunpack.c.l.b16 %v1383
    %v2056 = vunpack.c.h.b16 %v1383
    %v2057 = vunpack.c.l.b16 %v1384
    %v2058 = vunpack.c.h.b16 %v1384
    %v2059 = vunpack.c.l.b16 %v1385
    %v2060 = vunpack.c.h.b16 %v1385
    %v2061 = vunpack.c.l.b16 %v1386
    %v2062 = vunpack.c.h.b16 %v1386
    %v2063 = vunpack.c.l.b16 %v1387
    %v2064 = vunpack.c.h.b16 %v1387
    %v2065 = vunpack.c.l.b16 %v1388
    %v2066 = vunpack.c.h.b16 %v1388
    %v2067 = vunpack.c.l.b16 %v1389
    %v2068 = vunpack.c.h.b16 %v1389
    %v2069 = vunpack.c.l.b16 %v1390
    %v2070 = vunpack.c.h.b16 %v1390
    %v2071 = vunpack.c.l.b16 %v1391
    %v2072 = vunpack.c.h.b16 %v1391
    %v2073 = vunpack.c.l.b16 %v1392
    %v2074 = vunpack.c.h.b16 %v1392
    %v2075 = vunpack.c.l.b16 %v1393
    %v2076 = vunpack.c.h.b16 %v1393
    %v2077 = vunpack.c.l.b16 %v1394
    %v2078 = vunpack.c.h.b16 %v1394
    %v2079 = vunpack.c.l.b16 %v1395
    %v2080 = vunpack.c.h.b16 %v1395
    %v2081 = vunpack.c.l.b16 %v1396
    %v2082 = vunpack.c.h.b16 %v1396
    %v2083 = vunpack.c.l.b16 %v1397
    %v2084 = vunpack.c.h.b16 %v1397
    %v2085 = vunpack.c.l.b16 %v1398
    %v2086 = vunpack.c.h.b16 %v1398
    %v2087 = vunpack.c.l.b16 %v1399
    %v2088 = vunpack.c.h.b16 %v1399
    %v2089 = vunpack.c.l.b16 %v1400
    %v2090 = vunpack.c.h.b16 %v1400
    %v2091 = vunpack.c.l.b16 %v1401
    %v2092 = vunpack.c.h.b16 %v1401
    %v2093 = vunpack.c.l.b16 %v1402
    %v2094 = vunpack.c.h.b16 %v1402
    %v2095 = vunpack.c.l.b16 %v1403
    %v2096 = vunpack.c.h.b16 %v1403
    %v2097 = vunpack.c.l.b16 %v1404
    %v2098 = vunpack.c.h.b16 %v1404
    %v2099 = vunpack.c.l.b16 %v1405
    %v2100 = vunpack.c.h.b16 %v1405
    %v2101 = vunpack.c.l.b16 %v1406
    %v2102 = vunpack.c.h.b16 %v1406
    %v2103 = vunpack.c.l.b16 %v1407
    %v2104 = vunpack.c.h.b16 %v1407
    %v2105 = vunpack.c.l.b16 %v1408
    %v2106 = vunpack.c.h.b16 %v1408
    %v2107 = vunpack.c.l.b16 %v1409
    %v2108 = vunpack.c.h.b16 %v1409
    %v2109 = vunpack.c.l.b16 %v1410
    %v2110 = vunpack.c.h.b16 %v1410
    %v2111 = vunpack.c.l.b16 %v1411
    %v2112 = vunpack.c.h.b16 %v1411
    %v2113 = vunpack.c.l.b16 %v1412
    %v2114 = vunpack.c.h.b16 %v1412
    %v2115 = vunpack.c.l.b16 %v1413
    %v2116 = vunpack.c.h.b16 %v1413
    %v2117 = vunpack.c.l.b16 %v1414
    %v2118 = vunpack.c.h.b16 %v1414
    %v2119 = vunpack.c.l.b16 %v1415
    %v2120 = vunpack.c.h.b16 %v1415
    %v2121 = vunpack.c.l.b16 %v1416
    %v2122 = vunpack.c.h.b16 %v1416
    %v2123 = vunpack.c.l.b16 %v1417
    %v2124 = vunpack.c.h.b16 %v1417
    %v2125 = vunpack.c.l.b16 %v1418
    %v2126 = vunpack.c.h.b16 %v1418
    %v2127 = vunpack.c.l.b16 %v1419
    %v2128 = vunpack.c.h.b16 %v1419
    %v2129 = vunpack.c.l.b16 %v1420
    %v2130 = vunpack.c.h.b16 %v1420
    %v2131 = vunpack.c.l.b16 %v1421
    %v2132 = vunpack.c.h.b16 %v1421
    %v2133 = vunpack.c.l.b16 %v1422
    %v2134 = vunpack.c.h.b16 %v1422
    %v2135 = vunpack.c.l.b16 %v1423
    %v2136 = vunpack.c.h.b16 %v1423
    %v2137 = vunpack.c.l.b16 %v1424
    %v2138 = vunpack.c.h.b16 %v1424
    %v2139 = vunpack.c.l.b16 %v1425
    %v2140 = vunpack.c.h.b16 %v1425
    %v2141 = vunpack.c.l.b16 %v1426
    %v2142 = vunpack.c.h.b16 %v1426
    %v2143 = vunpack.c.l.b16 %v1427
    %v2144 = vunpack.c.h.b16 %v1427
    %v2145 = vunpack.c.l.b16 %v1428
    %v2146 = vunpack.c.h.b16 %v1428
    %v2147 = vunpack.c.l.b16 %v1429
    %v2148 = vunpack.c.h.b16 %v1429
    %v2149 = vunpack.c.l.b16 %v1430
    %v2150 = vunpack.c.h.b16 %v1430
    %v2151 = vunpack.c.l.b16 %v1431
    %v2152 = vunpack.c.h.b16 %v1431
    %v2153 = vunpack.c.l.b16 %v1432
    %v2154 = vunpack.c.h.b16 %v1432
    %v2155 = vunpack.c.l.b16 %v1433
    %v2156 = vunpack.c.h.b16 %v1433
    %v2157 = vunpack.c.l.b16 %v1434
    %v2158 = vunpack.c.h.b16 %v1434
    %v2159 = vunpack.c.l.b16 %v1435
    %v2160 = vunpack.c.h.b16 %v1435
    %v2161 = vunpack.c.l.b16 %v1436
    %v2162 = vunpack.c.h.b16 %v1436
    %v2163 = vunpack.c.l.b16 %v1437
    %v2164 = vunpack.c.h.b16 %v1437
    %v2165 = vunpack.c.l.b16 %v1438
    %v2166 = vunpack.c.h.b16 %v1438
    %v2167 = vunpack.c.l.b16 %v1439
    %v2168 = vunpack.c.h.b16 %v1439
    %v2169 = vunpack.c.l.b16 %v1440
    %v2170 = vunpack.c.h.b16 %v1440
    %v2171 = vunpack.c.l.b16 %v1441
    %v2172 = vunpack.c.h.b16 %v1441
    %v2173 = vunpack.c.l.b16 %v1442
    %v2174 = vunpack.c.h.b16 %v1442
    %v2175 = vunpack.c.l.b16 %v1443
    %v2176 = vunpack.c.h.b16 %v1443
    %v2177 = vunpack.c.l.b16 %v1444
    %v2178 = vunpack.c.h.b16 %v1444
    %v2179 = vunpack.c.l.b16 %v1445
    %v2180 = vunpack.c.h.b16 %v1445
    %v2181 = vunpack.c.l.b16 %v1446
    %v2182 = vunpack.c.h.b16 %v1446
    %v2183 = vunpack.c.l.b16 %v1447
    %v2184 = vunpack.c.h.b16 %v1447
    %v2185 = vunpack.c.l.b16 %v1448
    %v2186 = vunpack.c.h.b16 %v1448
    %v2187 = vunpack.c.l.b16 %v1449
    %v2188 = vunpack.c.h.b16 %v1449
    %v2189 = vunpack.c.l.b16 %v1450
    %v2190 = vunpack.c.h.b16 %v1450
    %v2191 = vunpack.c.l.b16 %v1451
    %v2192 = vunpack.c.h.b16 %v1451
    %v2193 = vunpack.c.l.b16 %v1452
    %v2194 = vunpack.c.h.b16 %v1452
    %v2195 = vunpack.c.l.b16 %v1453
    %v2196 = vunpack.c.h.b16 %v1453
    %v2197 = vunpack.c.l.b16 %v1454
    %v2198 = vunpack.c.h.b16 %v1454
    %v2199 = vunpack.c.l.b16 %v1455
    %v2200 = vunpack.c.h.b16 %v1455
    %v2201 = vunpack.c.l.b16 %v1456
    %v2202 = vunpack.c.h.b16 %v1456
    %v2203 = vunpack.c.l.b16 %v1457
    %v2204 = vunpack.c.h.b16 %v1457
    %v2205 = vunpack.c.l.b16 %v1458
    %v2206 = vunpack.c.h.b16 %v1458
    %v2207 = vunpack.c.l.b16 %v1459
    %v2208 = vunpack.c.h.b16 %v1459
    %v2209 = vunpack.c.l.b16 %v1460
    %v2210 = vunpack.c.h.b16 %v1460
    %v2211 = vunpack.c.l.b16 %v1461
    %v2212 = vunpack.c.h.b16 %v1461
    %v2213 = vunpack.c.l.b16 %v1462
    %v2214 = vunpack.c.h.b16 %v1462
    %v2215 = vunpack.c.l.b16 %v1463
    %v2216 = vunpack.c.h.b16 %v1463
    %v2217 = vunpack.c.l.b16 %v1464
    %v2218 = vunpack.c.h.b16 %v1464
    %v2219 = vunpack.c.l.b16 %v1465
    %v2220 = vunpack.c.h.b16 %v1465
    %v2221 = vunpack.c.l.b16 %v1466
    %v2222 = vunpack.c.h.b16 %v1466
    %v2223 = vunpack.c.l.b16 %v1467
    %v2224 = vunpack.c.h.b16 %v1467
    %v2225 = vunpack.c.l.b16 %v1468
    %v2226 = vunpack.c.h.b16 %v1468
    %v2227 = vunpack.c.l.b16 %v1469
    %v2228 = vunpack.c.h.b16 %v1469
    %v2229 = vunpack.c.l.b16 %v1470
    %v2230 = vunpack.c.h.b16 %v1470
    %v2231 = vunpack.c.l.b16 %v1471
    %v2232 = vunpack.c.h.b16 %v1471
    %v2233 = vunpack.c.l.b16 %v1472
    %v2234 = vunpack.c.h.b16 %v1472
    %v2235 = vunpack.c.l.b16 %v1473
    %v2236 = vunpack.c.h.b16 %v1473
    %v2237 = vunpack.c.l.b16 %v1474
    %v2238 = vunpack.c.h.b16 %v1474
    %v2239 = vunpack.c.l.b16 %v1475
    %v2240 = vunpack.c.h.b16 %v1475
    %v2241 = vunpack.c.l.b16 %v1476
    %v2242 = vunpack.c.h.b16 %v1476
    %v2243 = vunpack.c.l.b16 %v1477
    %v2244 = vunpack.c.h.b16 %v1477
    %v2245 = vunpack.c.l.b16 %v1478
    %v2246 = vunpack.c.h.b16 %v1478
    %v2247 = vpack.c.b16 %v1743, %v1735
    %v2248 = vpack.c.b16 %v1744, %v1736
    %v2249 = vpack.c.b16 %v1745, %v1737
    %v2250 = vpack.c.b16 %v1746, %v1738
    %v2251 = vpack.c.b16 %v1747, %v1739
    %v2252 = vpack.c.b16 %v1748, %v1740
    %v2253 = vpack.c.b16 %v1749, %v1741
    %v2254 = vpack.c.b16 %v1750, %v1742
    %v2255 = vpack.c.b16 %v1759, %v1751
    %v2256 = vpack.c.b16 %v1760, %v1752
    %v2257 = vpack.c.b16 %v1761, %v1753
    %v2258 = vpack.c.b16 %v1762, %v1754
    %v2259 = vpack.c.b16 %v1763, %v1755
    %v2260 = vpack.c.b16 %v1764, %v1756
    %v2261 = vpack.c.b16 %v1765, %v1757
    %v2262 = vpack.c.b16 %v1766, %v1758
    %v2263 = vpack.c.b16 %v1775, %v1767
    %v2264 = vpack.c.b16 %v1776, %v1768
    %v2265 = vpack.c.b16 %v1777, %v1769
    %v2266 = vpack.c.b16 %v1778, %v1770
    %v2267 = vpack.c.b16 %v1779, %v1771
    %v2268 = vpack.c.b16 %v1780, %v1772
    %v2269 = vpack.c.b16 %v1781, %v1773
    %v2270 = vpack.c.b16 %v1782, %v1774
    %v2271 = vpack.c.b16 %v1791, %v1783
    %v2272 = vpack.c.b16 %v1792, %v1784
    %v2273 = vpack.c.b16 %v1793, %v1785
    %v2274 = vpack.c.b16 %v1794, %v1786
    %v2275 = vpack.c.b16 %v1795, %v1787
    %v2276 = vpack.c.b16 %v1796, %v1788
    %v2277 = vpack.c.b16 %v1797, %v1789
    %v2278 = vpack.c.b16 %v1798, %v1790
    %v2279 = vpack.c.b16 %v1807, %v1799
    %v2280 = vpack.c.b16 %v1808, %v1800
    %v2281 = vpack.c.b16 %v1809, %v1801
    %v2282 = vpack.c.b16 %v1810, %v1802
    %v2283 = vpack.c.b16 %v1811, %v1803
    %v2284 = vpack.c.b16 %v1812, %v1804
    %v2285 = vpack.c.b16 %v1813, %v1805
    %v2286 = vpack.c.b16 %v1814, %v1806
    %v2287 = vpack.c.b16 %v1823, %v1815
    %v2288 = vpack.c.b16 %v1824, %v1816
    %v2289 = vpack.c.b16 %v1825, %v1817
    %v2290 = vpack.c.b16 %v1826, %v1818
    %v2291 = vpack.c.b16 %v1827, %v1819
    %v2292 = vpack.c.b16 %v1828, %v1820
    %v2293 = vpack.c.b16 %v1829, %v1821
    %v2294 = vpack.c.b16 %v1830, %v1822
    %v2295 = vpack.c.b16 %v1839, %v1831
    %v2296 = vpack.c.b16 %v1840, %v1832
    %v2297 = vpack.c.b16 %v1841, %v1833
    %v2298 = vpack.c.b16 %v1842, %v1834
    %v2299 = vpack.c.b16 %v1843, %v1835
    %v2300 = vpack.c.b16 %v1844, %v1836
    %v2301 = vpack.c.b16 %v1845, %v1837
    %v2302 = vpack.c.b16 %v1846, %v1838
    %v2303 = vpack.c.b16 %v1855, %v1847
    %v2304 = vpack.c.b16 %v1856, %v1848
    %v2305 = vpack.c.b16 %v1857, %v1849
    %v2306 = vpack.c.b16 %v1858, %v1850
    %v2307 = vpack.c.b16 %v1859, %v1851
    %v2308 = vpack.c.b16 %v1860, %v1852
    %v2309 = vpack.c.b16 %v1861, %v1853
    %v2310 = vpack.c.b16 %v1862, %v1854
    %v2311 = vpack.c.b16 %v1871, %v1863
    %v2312 = vpack.c.b16 %v1872, %v1864
    %v2313 = vpack.c.b16 %v1873, %v1865
    %v2314 = vpack.c.b16 %v1874, %v1866
    %v2315 = vpack.c.b16 %v1875, %v1867
    %v2316 = vpack.c.b16 %v1876, %v1868
    %v2317 = vpack.c.b16 %v1877, %v1869
    %v2318 = vpack.c.b16 %v1878, %v1870
    %v2319 = vpack.c.b16 %v1887, %v1879
    %v2320 = vpack.c.b16 %v1888, %v1880
    %v2321 = vpack.c.b16 %v1889, %v1881
    %v2322 = vpack.c.b16 %v1890, %v1882
    %v2323 = vpack.c.b16 %v1891, %v1883
    %v2324 = vpack.c.b16 %v1892, %v1884
    %v2325 = vpack.c.b16 %v1893, %v1885
    %v2326 = vpack.c.b16 %v1894, %v1886
    %v2327 = vpack.c.b16 %v1903, %v1895
    %v2328 = vpack.c.b16 %v1904, %v1896
    %v2329 = vpack.c.b16 %v1905, %v1897
    %v2330 = vpack.c.b16 %v1906, %v1898
    %v2331 = vpack.c.b16 %v1907, %v1899
    %v2332 = vpack.c.b16 %v1908, %v1900
    %v2333 = vpack.c.b16 %v1909, %v1901
    %v2334 = vpack.c.b16 %v1910, %v1902
    %v2335 = vpack.c.b16 %v1919, %v1911
    %v2336 = vpack.c.b16 %v1920, %v1912
    %v2337 = vpack.c.b16 %v1921, %v1913
    %v2338 = vpack.c.b16 %v1922, %v1914
    %v2339 = vpack.c.b16 %v1923, %v1915
    %v2340 = vpack.c.b16 %v1924, %v1916
    %v2341 = vpack.c.b16 %v1925, %v1917
    %v2342 = vpack.c.b16 %v1926, %v1918
    %v2343 = vpack.c.b16 %v1935, %v1927
    %v2344 = vpack.c.b16 %v1936, %v1928
    %v2345 = vpack.c.b16 %v1937, %v1929
    %v2346 = vpack.c.b16 %v1938, %v1930
    %v2347 = vpack.c.b16 %v1939, %v1931
    %v2348 = vpack.c.b16 %v1940, %v1932
    %v2349 = vpack.c.b16 %v1941, %v1933
    %v2350 = vpack.c.b16 %v1942, %v1934
    %v2351 = vpack.c.b16 %v1951, %v1943
    %v2352 = vpack.c.b16 %v1952, %v1944
    %v2353 = vpack.c.b16 %v1953, %v1945
    %v2354 = vpack.c.b16 %v1954, %v1946
    %v2355 = vpack.c.b16 %v1955, %v1947
    %v2356 = vpack.c.b16 %v1956, %v1948
    %v2357 = vpack.c.b16 %v1957, %v1949
    %v2358 = vpack.c.b16 %v1958, %v1950
    %v2359 = vpack.c.b16 %v1967, %v1959
    %v2360 = vpack.c.b16 %v1968, %v1960
    %v2361 = vpack.c.b16 %v1969, %v1961
    %v2362 = vpack.c.b16 %v1970, %v1962
    %v2363 = vpack.c.b16 %v1971, %v1963
    %v2364 = vpack.c.b16 %v1972, %v1964
    %v2365 = vpack.c.b16 %v1973, %v1965
    %v2366 = vpack.c.b16 %v1974, %v1966
    %v2367 = vpack.c.b16 %v1983, %v1975
    %v2368 = vpack.c.b16 %v1984, %v1976
    %v2369 = vpack.c.b16 %v1985, %v1977
    %v2370 = vpack.c.b16 %v1986, %v1978
    %v2371 = vpack.c.b16 %v1987, %v1979
    %v2372 = vpack.c.b16 %v1988, %v1980
    %v2373 = vpack.c.b16 %v1989, %v1981
    %v2374 = vpack.c.b16 %v1990, %v1982
    %v2375 = vpack.c.b16 %v1999, %v1991
    %v2376 = vpack.c.b16 %v2000, %v1992
    %v2377 = vpack.c.b16 %v2001, %v1993
    %v2378 = vpack.c.b16 %v2002, %v1994
    %v2379 = vpack.c.b16 %v2003, %v1995
    %v2380 = vpack.c.b16 %v2004, %v1996
    %v2381 = vpack.c.b16 %v2005, %v1997
    %v2382 = vpack.c.b16 %v2006, %v1998
    %v2383 = vpack.c.b16 %v2015, %v2007
    %v2384 = vpack.c.b16 %v2016, %v2008
    %v2385 = vpack.c.b16 %v2017, %v2009
    %v2386 = vpack.c.b16 %v2018, %v2010
    %v2387 = vpack.c.b16 %v2019, %v2011
    %v2388 = vpack.c.b16 %v2020, %v2012
    %v2389 = vpack.c.b16 %v2021, %v2013
    %v2390 = vpack.c.b16 %v2022, %v2014
    %v2391 = vpack.c.b16 %v2031, %v2023
    %v2392 = vpack.c.b16 %v2032, %v2024
    %v2393 = vpack.c.b16 %v2033, %v2025
    %v2394 = vpack.c.b16 %v2034, %v2026
    %v2395 = vpack.c.b16 %v2035, %v2027
    %v2396 = vpack.c.b16 %v2036, %v2028
    %v2397 = vpack.c.b16 %v2037, %v2029
    %v2398 = vpack.c.b16 %v2038, %v2030
    %v2399 = vpack.c.b16 %v2047, %v2039
    %v2400 = vpack.c.b16 %v2048, %v2040
    %v2401 = vpack.c.b16 %v2049, %v2041
    %v2402 = vpack.c.b16 %v2050, %v2042
    %v2403 = vpack.c.b16 %v2051, %v2043
    %v2404 = vpack.c.b16 %v2052, %v2044
    %v2405 = vpack.c.b16 %v2053, %v2045
    %v2406 = vpack.c.b16 %v2054, %v2046
    %v2407 = vpack.c.b16 %v2063, %v2055
    %v2408 = vpack.c.b16 %v2064, %v2056
    %v2409 = vpack.c.b16 %v2065, %v2057
    %v2410 = vpack.c.b16 %v2066, %v2058
    %v2411 = vpack.c.b16 %v2067, %v2059
    %v2412 = vpack.c.b16 %v2068, %v2060
    %v2413 = vpack.c.b16 %v2069, %v2061
    %v2414 = vpack.c.b16 %v2070, %v2062
    %v2415 = vpack.c.b16 %v2079, %v2071
    %v2416 = vpack.c.b16 %v2080, %v2072
    %v2417 = vpack.c.b16 %v2081, %v2073
    %v2418 = vpack.c.b16 %v2082, %v2074
    %v2419 = vpack.c.b16 %v2083, %v2075
    %v2420 = vpack.c.b16 %v2084, %v2076
    %v2421 = vpack.c.b16 %v2085, %v2077
    %v2422 = vpack.c.b16 %v2086, %v2078
    %v2423 = vpack.c.b16 %v2095, %v2087
    %v2424 = vpack.c.b16 %v2096, %v2088
    %v2425 = vpack.c.b16 %v2097, %v2089
    %v2426 = vpack.c.b16 %v2098, %v2090
    %v2427 = vpack.c.b16 %v2099, %v2091
    %v2428 = vpack.c.b16 %v2100, %v2092
    %v2429 = vpack.c.b16 %v2101, %v2093
    %v2430 = vpack.c.b16 %v2102, %v2094
    %v2431 = vpack.c.b16 %v2111, %v2103
    %v2432 = vpack.c.b16 %v2112, %v2104
    %v2433 = vpack.c.b16 %v2113, %v2105
    %v2434 = vpack.c.b16 %v2114, %v2106
    %v2435 = vpack.c.b16 %v2115, %v2107
    %v2436 = vpack.c.b16 %v2116, %v2108
    %v2437 = vpack.c.b16 %v2117, %v2109
    %v2438 = vpack.c.b16 %v2118, %v2110
    %v2439 = vpack.c.b16 %v2127, %v2119
    %v2440 = vpack.c.b16 %v2128, %v2120
    %v2441 = vpack.c.b16 %v2129, %v2121
    %v2442 = vpack.c.b16 %v2130, %v2122
    %v2443 = vpack.c.b16 %v2131, %v2123
    %v2444 = vpack.c.b16 %v2132, %v2124
    %v2445 = vpack.c.b16 %v2133, %v2125
    %v2446 = vpack.c.b16 %v2134, %v2126
    %v2447 = vpack.c.b16 %v2143, %v2135
    %v2448 = vpack.c.b16 %v2144, %v2136
    %v2449 = vpack.c.b16 %v2145, %v2137
    %v2450 = vpack.c.b16 %v2146, %v2138
    %v2451 = vpack.c.b16 %v2147, %v2139
    %v2452 = vpack.c.b16 %v2148, %v2140
    %v2453 = vpack.c.b16 %v2149, %v2141
    %v2454 = vpack.c.b16 %v2150, %v2142
    %v2455 = vpack.c.b16 %v2159, %v2151
    %v2456 = vpack.c.b16 %v2160, %v2152
    %v2457 = vpack.c.b16 %v2161, %v2153
    %v2458 = vpack.c.b16 %v2162, %v2154
    %v2459 = vpack.c.b16 %v2163, %v2155
    %v2460 = vpack.c.b16 %v2164, %v2156
    %v2461 = vpack.c.b16 %v2165, %v2157
    %v2462 = vpack.c.b16 %v2166, %v2158
    %v2463 = vpack.c.b16 %v2175, %v2167
    %v2464 = vpack.c.b16 %v2176, %v2168
    %v2465 = vpack.c.b16 %v2177, %v2169
    %v2466 = vpack.c.b16 %v2178, %v2170
    %v2467 = vpack.c.b16 %v2179, %v2171
    %v2468 = vpack.c.b16 %v2180, %v2172
    %v2469 = vpack.c.b16 %v2181, %v2173
    %v2470 = vpack.c.b16 %v2182, %v2174
    %v2471 = vpack.c.b16 %v2191, %v2183
    %v2472 = vpack.c.b16 %v2192, %v2184
    %v2473 = vpack.c.b16 %v2193, %v2185
    %v2474 = vpack.c.b16 %v2194, %v2186
    %v2475 = vpack.c.b16 %v2195, %v2187
    %v2476 = vpack.c.b16 %v2196, %v2188
    %v2477 = vpack.c.b16 %v2197, %v2189
    %v2478 = vpack.c.b16 %v2198, %v2190
    %v2479 = vpack.c.b16 %v2207, %v2199
    %v2480 = vpack.c.b16 %v2208, %v2200
    %v2481 = vpack.c.b16 %v2209, %v2201
    %v2482 = vpack.c.b16 %v2210, %v2202
    %v2483 = vpack.c.b16 %v2211, %v2203
    %v2484 = vpack.c.b16 %v2212, %v2204
    %v2485 = vpack.c.b16 %v2213, %v2205
    %v2486 = vpack.c.b16 %v2214, %v2206
    %v2487 = vpack.c.b16 %v2223, %v2215
    %v2488 = vpack.c.b16 %v2224, %v2216
    %v2489 = vpack.c.b16 %v2225, %v2217
    %v2490 = vpack.c.b16 %v2226, %v2218
    %v2491 = vpack.c.b16 %v2227, %v2219
    %v2492 = vpack.c.b16 %v2228, %v2220
    %v2493 = vpack.c.b16 %v2229, %v2221
    %v2494 = vpack.c.b16 %v2230, %v2222
    %v2495 = vpack.c.b16 %v2239, %v2231
    %v2496 = vpack.c.b16 %v2240, %v2232
    %v2497 = vpack.c.b16 %v2241, %v2233
    %v2498 = vpack.c.b16 %v2242, %v2234
    %v2499 = vpack.c.b16 %v2243, %v2235
    %v2500 = vpack.c.b16 %v2244, %v2236
    %v2501 = vpack.c.b16 %v2245, %v2237
    %v2502 = vpack.c.b16 %v2246, %v2238
    %2759 = vmatpush.bf16.msra.mxu0 %v2303
    %2760 = vmatpush.bf16.msra.mxu0 %v2295
    %2761 = vmatpush.bf16.msra.mxu0 %v2287
    %2762 = vmatpush.bf16.msra.mxu0 %v2279
    %2763 = vmatpush.bf16.msra.mxu0 %v2271
    %2764 = vmatpush.bf16.msra.mxu0 %v2263
    %2765 = vmatpush.bf16.msra.mxu0 %v2255
    %2766 = vmatpush.bf16.msra.mxu0 %v2247
    %2767 = vmatmul.bf16.gmra.mxu0 %v1219
    %v2768 = vpop.f32.mrf.mxu0
    %v2769 = vadd.f32 0.0, %v2768
    %v2770 = vpop.f32.mrf.mxu0
    %2771 = vdwg.mxu0
    %2772 = vmatpush.bf16.msra.mxu0 %v2367
    %2773 = vmatpush.bf16.msra.mxu0 %v2359
    %2774 = vmatpush.bf16.msra.mxu0 %v2351
    %2775 = vmatpush.bf16.msra.mxu0 %v2343
    %2776 = vmatpush.bf16.msra.mxu0 %v2335
    %2777 = vmatpush.bf16.msra.mxu0 %v2327
    %2778 = vmatpush.bf16.msra.mxu0 %v2319
    %2779 = vmatpush.bf16.msra.mxu0 %v2311
    %2780 = vmatmul.bf16.gmra.mxu0 %v1220
    %v2781 = vpop.f32.mrf.mxu0
    %v2782 = vadd.f32 %v2769, %v2781
    %v2783 = vpop.f32.mrf.mxu0
    %2784 = vdwg.mxu0
    %2785 = vmatpush.bf16.msra.mxu0 %v2431
    %2786 = vmatpush.bf16.msra.mxu0 %v2423
    %2787 = vmatpush.bf16.msra.mxu0 %v2415
    %2788 = vmatpush.bf16.msra.mxu0 %v2407
    %2789 = vmatpush.bf16.msra.mxu0 %v2399
    %2790 = vmatpush.bf16.msra.mxu0 %v2391
    %2791 = vmatpush.bf16.msra.mxu0 %v2383
    %2792 = vmatpush.bf16.msra.mxu0 %v2375
    %2793 = vmatmul.bf16.gmra.mxu0 %v1221
    %v2794 = vpop.f32.mrf.mxu0
    %v2795 = vadd.f32 %v2782, %v2794
    %v2796 = vpop.f32.mrf.mxu0
    %2797 = vdwg.mxu0
    %2798 = vmatpush.bf16.msra.mxu0 %v2495
    %2799 = vmatpush.bf16.msra.mxu0 %v2487
    %2800 = vmatpush.bf16.msra.mxu0 %v2479
    %2801 = vmatpush.bf16.msra.mxu0 %v2471
    %2802 = vmatpush.bf16.msra.mxu0 %v2463
    %2803 = vmatpush.bf16.msra.mxu0 %v2455
    %2804 = vmatpush.bf16.msra.mxu0 %v2447
    %2805 = vmatpush.bf16.msra.mxu0 %v2439
    %2806 = vmatmul.bf16.gmra.mxu0 %v1222
    %v2807 = vpop.f32.mrf.mxu0
    %v2808 = vadd.f32 %v2795, %v2807
    %v2809 = vpop.f32.mrf.mxu0
    %2810 = vdwg.mxu0
    %2811 = vmatpush.bf16.msra.mxu0 %v2304
    %2812 = vmatpush.bf16.msra.mxu0 %v2296
    %2813 = vmatpush.bf16.msra.mxu0 %v2288
    %2814 = vmatpush.bf16.msra.mxu0 %v2280
    %2815 = vmatpush.bf16.msra.mxu0 %v2272
    %2816 = vmatpush.bf16.msra.mxu0 %v2264
    %2817 = vmatpush.bf16.msra.mxu0 %v2256
    %2818 = vmatpush.bf16.msra.mxu0 %v2248
    %2819 = vmatmul.bf16.gmra.mxu0 %v1219
    %v2820 = vpop.f32.mrf.mxu0
    %v2821 = vadd.f32 0.0, %v2820
    %v2822 = vpop.f32.mrf.mxu0
    %2823 = vdwg.mxu0
    %2824 = vmatpush.bf16.msra.mxu0 %v2368
    %2825 = vmatpush.bf16.msra.mxu0 %v2360
    %2826 = vmatpush.bf16.msra.mxu0 %v2352
    %2827 = vmatpush.bf16.msra.mxu0 %v2344
    %2828 = vmatpush.bf16.msra.mxu0 %v2336
    %2829 = vmatpush.bf16.msra.mxu0 %v2328
    %2830 = vmatpush.bf16.msra.mxu0 %v2320
    %2831 = vmatpush.bf16.msra.mxu0 %v2312
    %2832 = vmatmul.bf16.gmra.mxu0 %v1220
    %v2833 = vpop.f32.mrf.mxu0
    %v2834 = vadd.f32 %v2821, %v2833
    %v2835 = vpop.f32.mrf.mxu0
    %2836 = vdwg.mxu0
    %2837 = vmatpush.bf16.msra.mxu0 %v2432
    %2838 = vmatpush.bf16.msra.mxu0 %v2424
    %2839 = vmatpush.bf16.msra.mxu0 %v2416
    %2840 = vmatpush.bf16.msra.mxu0 %v2408
    %2841 = vmatpush.bf16.msra.mxu0 %v2400
    %2842 = vmatpush.bf16.msra.mxu0 %v2392
    %2843 = vmatpush.bf16.msra.mxu0 %v2384
    %2844 = vmatpush.bf16.msra.mxu0 %v2376
    %2845 = vmatmul.bf16.gmra.mxu0 %v1221
    %v2846 = vpop.f32.mrf.mxu0
    %v2847 = vadd.f32 %v2834, %v2846
    %v2848 = vpop.f32.mrf.mxu0
    %2849 = vdwg.mxu0
    %2850 = vmatpush.bf16.msra.mxu0 %v2496
    %2851 = vmatpush.bf16.msra.mxu0 %v2488
    %2852 = vmatpush.bf16.msra.mxu0 %v2480
    %2853 = vmatpush.bf16.msra.mxu0 %v2472
    %2854 = vmatpush.bf16.msra.mxu0 %v2464
    %2855 = vmatpush.bf16.msra.mxu0 %v2456
    %2856 = vmatpush.bf16.msra.mxu0 %v2448
    %2857 = vmatpush.bf16.msra.mxu0 %v2440
    %2858 = vmatmul.bf16.gmra.mxu0 %v1222
    %v2859 = vpop.f32.mrf.mxu0
    %v2860 = vadd.f32 %v2847, %v2859
    %v2861 = vpop.f32.mrf.mxu0
    %2862 = vdwg.mxu0
    %2863 = vmatpush.bf16.msra.mxu0 %v2305
    %2864 = vmatpush.bf16.msra.mxu0 %v2297
    %2865 = vmatpush.bf16.msra.mxu0 %v2289
    %2866 = vmatpush.bf16.msra.mxu0 %v2281
    %2867 = vmatpush.bf16.msra.mxu0 %v2273
    %2868 = vmatpush.bf16.msra.mxu0 %v2265
    %2869 = vmatpush.bf16.msra.mxu0 %v2257
    %2870 = vmatpush.bf16.msra.mxu0 %v2249
    %2871 = vmatmul.bf16.gmra.mxu0 %v1219
    %v2872 = vpop.f32.mrf.mxu0
    %v2873 = vadd.f32 0.0, %v2872
    %v2874 = vpop.f32.mrf.mxu0
    %2875 = vdwg.mxu0
    %2876 = vmatpush.bf16.msra.mxu0 %v2369
    %2877 = vmatpush.bf16.msra.mxu0 %v2361
    %2878 = vmatpush.bf16.msra.mxu0 %v2353
    %2879 = vmatpush.bf16.msra.mxu0 %v2345
    %2880 = vmatpush.bf16.msra.mxu0 %v2337
    %2881 = vmatpush.bf16.msra.mxu0 %v2329
    %2882 = vmatpush.bf16.msra.mxu0 %v2321
    %2883 = vmatpush.bf16.msra.mxu0 %v2313
    %2884 = vmatmul.bf16.gmra.mxu0 %v1220
    %v2885 = vpop.f32.mrf.mxu0
    %v2886 = vadd.f32 %v2873, %v2885
    %v2887 = vpop.f32.mrf.mxu0
    %2888 = vdwg.mxu0
    %2889 = vmatpush.bf16.msra.mxu0 %v2433
    %2890 = vmatpush.bf16.msra.mxu0 %v2425
    %2891 = vmatpush.bf16.msra.mxu0 %v2417
    %2892 = vmatpush.bf16.msra.mxu0 %v2409
    %2893 = vmatpush.bf16.msra.mxu0 %v2401
    %2894 = vmatpush.bf16.msra.mxu0 %v2393
    %2895 = vmatpush.bf16.msra.mxu0 %v2385
    %2896 = vmatpush.bf16.msra.mxu0 %v2377
    %2897 = vmatmul.bf16.gmra.mxu0 %v1221
    %v2898 = vpop.f32.mrf.mxu0
    %v2899 = vadd.f32 %v2886, %v2898
    %v2900 = vpop.f32.mrf.mxu0
    %2901 = vdwg.mxu0
    %2902 = vmatpush.bf16.msra.mxu0 %v2497
    %2903 = vmatpush.bf16.msra.mxu0 %v2489
    %2904 = vmatpush.bf16.msra.mxu0 %v2481
    %2905 = vmatpush.bf16.msra.mxu0 %v2473
    %2906 = vmatpush.bf16.msra.mxu0 %v2465
    %2907 = vmatpush.bf16.msra.mxu0 %v2457
    %2908 = vmatpush.bf16.msra.mxu0 %v2449
    %2909 = vmatpush.bf16.msra.mxu0 %v2441
    %2910 = vmatmul.bf16.gmra.mxu0 %v1222
    %v2911 = vpop.f32.mrf.mxu0
    %v2912 = vadd.f32 %v2899, %v2911
    %v2913 = vpop.f32.mrf.mxu0
    %2914 = vdwg.mxu0
    %2915 = vmatpush.bf16.msra.mxu0 %v2306
    %2916 = vmatpush.bf16.msra.mxu0 %v2298
    %2917 = vmatpush.bf16.msra.mxu0 %v2290
    %2918 = vmatpush.bf16.msra.mxu0 %v2282
    %2919 = vmatpush.bf16.msra.mxu0 %v2274
    %2920 = vmatpush.bf16.msra.mxu0 %v2266
    %2921 = vmatpush.bf16.msra.mxu0 %v2258
    %2922 = vmatpush.bf16.msra.mxu0 %v2250
    %2923 = vmatmul.bf16.gmra.mxu0 %v1219
    %v2924 = vpop.f32.mrf.mxu0
    %v2925 = vadd.f32 0.0, %v2924
    %v2926 = vpop.f32.mrf.mxu0
    %2927 = vdwg.mxu0
    %2928 = vmatpush.bf16.msra.mxu0 %v2370
    %2929 = vmatpush.bf16.msra.mxu0 %v2362
    %2930 = vmatpush.bf16.msra.mxu0 %v2354
    %2931 = vmatpush.bf16.msra.mxu0 %v2346
    %2932 = vmatpush.bf16.msra.mxu0 %v2338
    %2933 = vmatpush.bf16.msra.mxu0 %v2330
    %2934 = vmatpush.bf16.msra.mxu0 %v2322
    %2935 = vmatpush.bf16.msra.mxu0 %v2314
    %2936 = vmatmul.bf16.gmra.mxu0 %v1220
    %v2937 = vpop.f32.mrf.mxu0
    %v2938 = vadd.f32 %v2925, %v2937
    %v2939 = vpop.f32.mrf.mxu0
    %2940 = vdwg.mxu0
    %2941 = vmatpush.bf16.msra.mxu0 %v2434
    %2942 = vmatpush.bf16.msra.mxu0 %v2426
    %2943 = vmatpush.bf16.msra.mxu0 %v2418
    %2944 = vmatpush.bf16.msra.mxu0 %v2410
    %2945 = vmatpush.bf16.msra.mxu0 %v2402
    %2946 = vmatpush.bf16.msra.mxu0 %v2394
    %2947 = vmatpush.bf16.msra.mxu0 %v2386
    %2948 = vmatpush.bf16.msra.mxu0 %v2378
    %2949 = vmatmul.bf16.gmra.mxu0 %v1221
    %v2950 = vpop.f32.mrf.mxu0
    %v2951 = vadd.f32 %v2938, %v2950
    %v2952 = vpop.f32.mrf.mxu0
    %2953 = vdwg.mxu0
    %2954 = vmatpush.bf16.msra.mxu0 %v2498
    %2955 = vmatpush.bf16.msra.mxu0 %v2490
    %2956 = vmatpush.bf16.msra.mxu0 %v2482
    %2957 = vmatpush.bf16.msra.mxu0 %v2474
    %2958 = vmatpush.bf16.msra.mxu0 %v2466
    %2959 = vmatpush.bf16.msra.mxu0 %v2458
    %2960 = vmatpush.bf16.msra.mxu0 %v2450
    %2961 = vmatpush.bf16.msra.mxu0 %v2442
    %2962 = vmatmul.bf16.gmra.mxu0 %v1222
    %v2963 = vpop.f32.mrf.mxu0
    %v2964 = vadd.f32 %v2951, %v2963
    %v2965 = vpop.f32.mrf.mxu0
    %2966 = vdwg.mxu0
    %2967 = vmatpush.bf16.msra.mxu0 %v2307
    %2968 = vmatpush.bf16.msra.mxu0 %v2299
    %2969 = vmatpush.bf16.msra.mxu0 %v2291
    %2970 = vmatpush.bf16.msra.mxu0 %v2283
    %2971 = vmatpush.bf16.msra.mxu0 %v2275
    %2972 = vmatpush.bf16.msra.mxu0 %v2267
    %2973 = vmatpush.bf16.msra.mxu0 %v2259
    %2974 = vmatpush.bf16.msra.mxu0 %v2251
    %2975 = vmatmul.bf16.gmra.mxu0 %v1219
    %v2976 = vpop.f32.mrf.mxu0
    %v2977 = vadd.f32 0.0, %v2976
    %v2978 = vpop.f32.mrf.mxu0
    %2979 = vdwg.mxu0
    %2980 = vmatpush.bf16.msra.mxu0 %v2371
    %2981 = vmatpush.bf16.msra.mxu0 %v2363
    %2982 = vmatpush.bf16.msra.mxu0 %v2355
    %2983 = vmatpush.bf16.msra.mxu0 %v2347
    %2984 = vmatpush.bf16.msra.mxu0 %v2339
    %2985 = vmatpush.bf16.msra.mxu0 %v2331
    %2986 = vmatpush.bf16.msra.mxu0 %v2323
    %2987 = vmatpush.bf16.msra.mxu0 %v2315
    %2988 = vmatmul.bf16.gmra.mxu0 %v1220
    %v2989 = vpop.f32.mrf.mxu0
    %v2990 = vadd.f32 %v2977, %v2989
    %v2991 = vpop.f32.mrf.mxu0
    %2992 = vdwg.mxu0
    %2993 = vmatpush.bf16.msra.mxu0 %v2435
    %2994 = vmatpush.bf16.msra.mxu0 %v2427
    %2995 = vmatpush.bf16.msra.mxu0 %v2419
    %2996 = vmatpush.bf16.msra.mxu0 %v2411
    %2997 = vmatpush.bf16.msra.mxu0 %v2403
    %2998 = vmatpush.bf16.msra.mxu0 %v2395
    %2999 = vmatpush.bf16.msra.mxu0 %v2387
    %3000 = vmatpush.bf16.msra.mxu0 %v2379
    %3001 = vmatmul.bf16.gmra.mxu0 %v1221
    %v3002 = vpop.f32.mrf.mxu0
    %v3003 = vadd.f32 %v2990, %v3002
    %v3004 = vpop.f32.mrf.mxu0
    %3005 = vdwg.mxu0
    %3006 = vmatpush.bf16.msra.mxu0 %v2499
    %3007 = vmatpush.bf16.msra.mxu0 %v2491
    %3008 = vmatpush.bf16.msra.mxu0 %v2483
    %3009 = vmatpush.bf16.msra.mxu0 %v2475
    %3010 = vmatpush.bf16.msra.mxu0 %v2467
    %3011 = vmatpush.bf16.msra.mxu0 %v2459
    %3012 = vmatpush.bf16.msra.mxu0 %v2451
    %3013 = vmatpush.bf16.msra.mxu0 %v2443
    %3014 = vmatmul.bf16.gmra.mxu0 %v1222
    %v3015 = vpop.f32.mrf.mxu0
    %v3016 = vadd.f32 %v3003, %v3015
    %v3017 = vpop.f32.mrf.mxu0
    %3018 = vdwg.mxu0
    %3019 = vmatpush.bf16.msra.mxu0 %v2308
    %3020 = vmatpush.bf16.msra.mxu0 %v2300
    %3021 = vmatpush.bf16.msra.mxu0 %v2292
    %3022 = vmatpush.bf16.msra.mxu0 %v2284
    %3023 = vmatpush.bf16.msra.mxu0 %v2276
    %3024 = vmatpush.bf16.msra.mxu0 %v2268
    %3025 = vmatpush.bf16.msra.mxu0 %v2260
    %3026 = vmatpush.bf16.msra.mxu0 %v2252
    %3027 = vmatmul.bf16.gmra.mxu0 %v1219
    %v3028 = vpop.f32.mrf.mxu0
    %v3029 = vadd.f32 0.0, %v3028
    %v3030 = vpop.f32.mrf.mxu0
    %3031 = vdwg.mxu0
    %3032 = vmatpush.bf16.msra.mxu0 %v2372
    %3033 = vmatpush.bf16.msra.mxu0 %v2364
    %3034 = vmatpush.bf16.msra.mxu0 %v2356
    %3035 = vmatpush.bf16.msra.mxu0 %v2348
    %3036 = vmatpush.bf16.msra.mxu0 %v2340
    %3037 = vmatpush.bf16.msra.mxu0 %v2332
    %3038 = vmatpush.bf16.msra.mxu0 %v2324
    %3039 = vmatpush.bf16.msra.mxu0 %v2316
    %3040 = vmatmul.bf16.gmra.mxu0 %v1220
    %v3041 = vpop.f32.mrf.mxu0
    %v3042 = vadd.f32 %v3029, %v3041
    %v3043 = vpop.f32.mrf.mxu0
    %3044 = vdwg.mxu0
    %3045 = vmatpush.bf16.msra.mxu0 %v2436
    %3046 = vmatpush.bf16.msra.mxu0 %v2428
    %3047 = vmatpush.bf16.msra.mxu0 %v2420
    %3048 = vmatpush.bf16.msra.mxu0 %v2412
    %3049 = vmatpush.bf16.msra.mxu0 %v2404
    %3050 = vmatpush.bf16.msra.mxu0 %v2396
    %3051 = vmatpush.bf16.msra.mxu0 %v2388
    %3052 = vmatpush.bf16.msra.mxu0 %v2380
    %3053 = vmatmul.bf16.gmra.mxu0 %v1221
    %v3054 = vpop.f32.mrf.mxu0
    %v3055 = vadd.f32 %v3042, %v3054
    %v3056 = vpop.f32.mrf.mxu0
    %3057 = vdwg.mxu0
    %3058 = vmatpush.bf16.msra.mxu0 %v2500
    %3059 = vmatpush.bf16.msra.mxu0 %v2492
    %3060 = vmatpush.bf16.msra.mxu0 %v2484
    %3061 = vmatpush.bf16.msra.mxu0 %v2476
    %3062 = vmatpush.bf16.msra.mxu0 %v2468
    %3063 = vmatpush.bf16.msra.mxu0 %v2460
    %3064 = vmatpush.bf16.msra.mxu0 %v2452
    %3065 = vmatpush.bf16.msra.mxu0 %v2444
    %3066 = vmatmul.bf16.gmra.mxu0 %v1222
    %v3067 = vpop.f32.mrf.mxu0
    %v3068 = vadd.f32 %v3055, %v3067
    %v3069 = vpop.f32.mrf.mxu0
    %3070 = vdwg.mxu0
    %3071 = vmatpush.bf16.msra.mxu0 %v2309
    %3072 = vmatpush.bf16.msra.mxu0 %v2301
    %3073 = vmatpush.bf16.msra.mxu0 %v2293
    %3074 = vmatpush.bf16.msra.mxu0 %v2285
    %3075 = vmatpush.bf16.msra.mxu0 %v2277
    %3076 = vmatpush.bf16.msra.mxu0 %v2269
    %3077 = vmatpush.bf16.msra.mxu0 %v2261
    %3078 = vmatpush.bf16.msra.mxu0 %v2253
    %3079 = vmatmul.bf16.gmra.mxu0 %v1219
    %v3080 = vpop.f32.mrf.mxu0
    %v3081 = vadd.f32 0.0, %v3080
    %v3082 = vpop.f32.mrf.mxu0
    %3083 = vdwg.mxu0
    %3084 = vmatpush.bf16.msra.mxu0 %v2373
    %3085 = vmatpush.bf16.msra.mxu0 %v2365
    %3086 = vmatpush.bf16.msra.mxu0 %v2357
    %3087 = vmatpush.bf16.msra.mxu0 %v2349
    %3088 = vmatpush.bf16.msra.mxu0 %v2341
    %3089 = vmatpush.bf16.msra.mxu0 %v2333
    %3090 = vmatpush.bf16.msra.mxu0 %v2325
    %3091 = vmatpush.bf16.msra.mxu0 %v2317
    %3092 = vmatmul.bf16.gmra.mxu0 %v1220
    %v3093 = vpop.f32.mrf.mxu0
    %v3094 = vadd.f32 %v3081, %v3093
    %v3095 = vpop.f32.mrf.mxu0
    %3096 = vdwg.mxu0
    %3097 = vmatpush.bf16.msra.mxu0 %v2437
    %3098 = vmatpush.bf16.msra.mxu0 %v2429
    %3099 = vmatpush.bf16.msra.mxu0 %v2421
    %3100 = vmatpush.bf16.msra.mxu0 %v2413
    %3101 = vmatpush.bf16.msra.mxu0 %v2405
    %3102 = vmatpush.bf16.msra.mxu0 %v2397
    %3103 = vmatpush.bf16.msra.mxu0 %v2389
    %3104 = vmatpush.bf16.msra.mxu0 %v2381
    %3105 = vmatmul.bf16.gmra.mxu0 %v1221
    %v3106 = vpop.f32.mrf.mxu0
    %v3107 = vadd.f32 %v3094, %v3106
    %v3108 = vpop.f32.mrf.mxu0
    %3109 = vdwg.mxu0
    %3110 = vmatpush.bf16.msra.mxu0 %v2501
    %3111 = vmatpush.bf16.msra.mxu0 %v2493
    %3112 = vmatpush.bf16.msra.mxu0 %v2485
    %3113 = vmatpush.bf16.msra.mxu0 %v2477
    %3114 = vmatpush.bf16.msra.mxu0 %v2469
    %3115 = vmatpush.bf16.msra.mxu0 %v2461
    %3116 = vmatpush.bf16.msra.mxu0 %v2453
    %3117 = vmatpush.bf16.msra.mxu0 %v2445
    %3118 = vmatmul.bf16.gmra.mxu0 %v1222
    %v3119 = vpop.f32.mrf.mxu0
    %v3120 = vadd.f32 %v3107, %v3119
    %v3121 = vpop.f32.mrf.mxu0
    %3122 = vdwg.mxu0
    %3123 = vmatpush.bf16.msra.mxu0 %v2310
    %3124 = vmatpush.bf16.msra.mxu0 %v2302
    %3125 = vmatpush.bf16.msra.mxu0 %v2294
    %3126 = vmatpush.bf16.msra.mxu0 %v2286
    %3127 = vmatpush.bf16.msra.mxu0 %v2278
    %3128 = vmatpush.bf16.msra.mxu0 %v2270
    %3129 = vmatpush.bf16.msra.mxu0 %v2262
    %3130 = vmatpush.bf16.msra.mxu0 %v2254
    %3131 = vmatmul.bf16.gmra.mxu0 %v1219
    %v3132 = vpop.f32.mrf.mxu0
    %v3133 = vadd.f32 0.0, %v3132
    %v3134 = vpop.f32.mrf.mxu0
    %3135 = vdwg.mxu0
    %3136 = vmatpush.bf16.msra.mxu0 %v2374
    %3137 = vmatpush.bf16.msra.mxu0 %v2366
    %3138 = vmatpush.bf16.msra.mxu0 %v2358
    %3139 = vmatpush.bf16.msra.mxu0 %v2350
    %3140 = vmatpush.bf16.msra.mxu0 %v2342
    %3141 = vmatpush.bf16.msra.mxu0 %v2334
    %3142 = vmatpush.bf16.msra.mxu0 %v2326
    %3143 = vmatpush.bf16.msra.mxu0 %v2318
    %3144 = vmatmul.bf16.gmra.mxu0 %v1220
    %v3145 = vpop.f32.mrf.mxu0
    %v3146 = vadd.f32 %v3133, %v3145
    %v3147 = vpop.f32.mrf.mxu0
    %3148 = vdwg.mxu0
    %3149 = vmatpush.bf16.msra.mxu0 %v2438
    %3150 = vmatpush.bf16.msra.mxu0 %v2430
    %3151 = vmatpush.bf16.msra.mxu0 %v2422
    %3152 = vmatpush.bf16.msra.mxu0 %v2414
    %3153 = vmatpush.bf16.msra.mxu0 %v2406
    %3154 = vmatpush.bf16.msra.mxu0 %v2398
    %3155 = vmatpush.bf16.msra.mxu0 %v2390
    %3156 = vmatpush.bf16.msra.mxu0 %v2382
    %3157 = vmatmul.bf16.gmra.mxu0 %v1221
    %v3158 = vpop.f32.mrf.mxu0
    %v3159 = vadd.f32 %v3146, %v3158
    %v3160 = vpop.f32.mrf.mxu0
    %3161 = vdwg.mxu0
    %3162 = vmatpush.bf16.msra.mxu0 %v2502
    %3163 = vmatpush.bf16.msra.mxu0 %v2494
    %3164 = vmatpush.bf16.msra.mxu0 %v2486
    %3165 = vmatpush.bf16.msra.mxu0 %v2478
    %3166 = vmatpush.bf16.msra.mxu0 %v2470
    %3167 = vmatpush.bf16.msra.mxu0 %v2462
    %3168 = vmatpush.bf16.msra.mxu0 %v2454
    %3169 = vmatpush.bf16.msra.mxu0 %v2446
    %3170 = vmatmul.bf16.gmra.mxu0 %v1222
    %v3171 = vpop.f32.mrf.mxu0
    %v3172 = vadd.f32 %v3159, %v3171
    %v3173 = vpop.f32.mrf.mxu0
    %3174 = vdwg.mxu0
    %v3175 = vld [vmem:[#allocation19] sm:$0xff]
    %v3176 = vld [vmem:[#allocation20] sm:$0xff]
    %v3177 = vrot.slane %v2808, 4
    %v3178 = vadd.f32 %v2808, %v3177
    %v3179 = vrot.slane %v3178, 2
    %v3180 = vadd.f32 %v3178, %v3179
    %v3181 = vrot.slane %v3180, 1
    %v3182 = vadd.f32 %v3180, %v3181
    %v3183 = vrot.slane %v2860, 4
    %v3184 = vadd.f32 %v2860, %v3183
    %v3185 = vrot.slane %v3184, 2
    %v3186 = vadd.f32 %v3184, %v3185
    %v3187 = vrot.slane %v3186, 1
    %v3188 = vadd.f32 %v3186, %v3187
    %v3189 = vrot.slane %v2912, 4
    %v3190 = vadd.f32 %v2912, %v3189
    %v3191 = vrot.slane %v3190, 2
    %v3192 = vadd.f32 %v3190, %v3191
    %v3193 = vrot.slane %v3192, 1
    %v3194 = vadd.f32 %v3192, %v3193
    %v3195 = vrot.slane %v2964, 4
    %v3196 = vadd.f32 %v2964, %v3195
    %v3197 = vrot.slane %v3196, 2
    %v3198 = vadd.f32 %v3196, %v3197
    %v3199 = vrot.slane %v3198, 1
    %v3200 = vadd.f32 %v3198, %v3199
    %v3201 = vrot.slane %v3016, 4
    %v3202 = vadd.f32 %v3016, %v3201
    %v3203 = vrot.slane %v3202, 2
    %v3204 = vadd.f32 %v3202, %v3203
    %v3205 = vrot.slane %v3204, 1
    %v3206 = vadd.f32 %v3204, %v3205
    %v3207 = vrot.slane %v3068, 4
    %v3208 = vadd.f32 %v3068, %v3207
    %v3209 = vrot.slane %v3208, 2
    %v3210 = vadd.f32 %v3208, %v3209
    %v3211 = vrot.slane %v3210, 1
    %v3212 = vadd.f32 %v3210, %v3211
    %v3213 = vrot.slane %v3120, 4
    %v3214 = vadd.f32 %v3120, %v3213
    %v3215 = vrot.slane %v3214, 2
    %v3216 = vadd.f32 %v3214, %v3215
    %v3217 = vrot.slane %v3216, 1
    %v3218 = vadd.f32 %v3216, %v3217
    %v3219 = vrot.slane %v3172, 4
    %v3220 = vadd.f32 %v3172, %v3219
    %v3221 = vrot.slane %v3220, 2
    %v3222 = vadd.f32 %v3220, %v3221
    %v3223 = vrot.slane %v3222, 1
    %v3224 = vadd.f32 %v3222, %v3223
    %v3225 = vmul.f32 %v3182, %v477
    %v3226 = vmul.f32 %v3188, %v477
    %v3227 = vmul.f32 %v3194, %v477
    %v3228 = vmul.f32 %v3200, %v477
    %v3229 = vmul.f32 %v3206, %v477
    %v3230 = vmul.f32 %v3212, %v477
    %v3231 = vmul.f32 %v3218, %v477
    %v3232 = vmul.f32 %v3224, %v477
    %v3233 = vsub.f32 %v2808, %v3225
    %v3234 = vsub.f32 %v2860, %v3226
    %v3235 = vsub.f32 %v2912, %v3227
    %v3236 = vsub.f32 %v2964, %v3228
    %v3237 = vsub.f32 %v3016, %v3229
    %v3238 = vsub.f32 %v3068, %v3230
    %v3239 = vsub.f32 %v3120, %v3231
    %v3240 = vsub.f32 %v3172, %v3232
    %v3241 = vmul.f32 %v3233, %v3233
    %v3242 = vmul.f32 %v3234, %v3234
    %v3243 = vmul.f32 %v3235, %v3235
    %v3244 = vmul.f32 %v3236, %v3236
    %v3245 = vmul.f32 %v3237, %v3237
    %v3246 = vmul.f32 %v3238, %v3238
    %v3247 = vmul.f32 %v3239, %v3239
    %v3248 = vmul.f32 %v3240, %v3240
    %v3249 = vrot.slane %v3241, 4
    %v3250 = vadd.f32 %v3241, %v3249
    %v3251 = vrot.slane %v3250, 2
    %v3252 = vadd.f32 %v3250, %v3251
    %v3253 = vrot.slane %v3252, 1
    %v3254 = vadd.f32 %v3252, %v3253
    %v3255 = vrot.slane %v3242, 4
    %v3256 = vadd.f32 %v3242, %v3255
    %v3257 = vrot.slane %v3256, 2
    %v3258 = vadd.f32 %v3256, %v3257
    %v3259 = vrot.slane %v3258, 1
    %v3260 = vadd.f32 %v3258, %v3259
    %v3261 = vrot.slane %v3243, 4
    %v3262 = vadd.f32 %v3243, %v3261
    %v3263 = vrot.slane %v3262, 2
    %v3264 = vadd.f32 %v3262, %v3263
    %v3265 = vrot.slane %v3264, 1
    %v3266 = vadd.f32 %v3264, %v3265
    %v3267 = vrot.slane %v3244, 4
    %v3268 = vadd.f32 %v3244, %v3267
    %v3269 = vrot.slane %v3268, 2
    %v3270 = vadd.f32 %v3268, %v3269
    %v3271 = vrot.slane %v3270, 1
    %v3272 = vadd.f32 %v3270, %v3271
    %v3273 = vrot.slane %v3245, 4
    %v3274 = vadd.f32 %v3245, %v3273
    %v3275 = vrot.slane %v3274, 2
    %v3276 = vadd.f32 %v3274, %v3275
    %v3277 = vrot.slane %v3276, 1
    %v3278 = vadd.f32 %v3276, %v3277
    %v3279 = vrot.slane %v3246, 4
    %v3280 = vadd.f32 %v3246, %v3279
    %v3281 = vrot.slane %v3280, 2
    %v3282 = vadd.f32 %v3280, %v3281
    %v3283 = vrot.slane %v3282, 1
    %v3284 = vadd.f32 %v3282, %v3283
    %v3285 = vrot.slane %v3247, 4
    %v3286 = vadd.f32 %v3247, %v3285
    %v3287 = vrot.slane %v3286, 2
    %v3288 = vadd.f32 %v3286, %v3287
    %v3289 = vrot.slane %v3288, 1
    %v3290 = vadd.f32 %v3288, %v3289
    %v3291 = vrot.slane %v3248, 4
    %v3292 = vadd.f32 %v3248, %v3291
    %v3293 = vrot.slane %v3292, 2
    %v3294 = vadd.f32 %v3292, %v3293
    %v3295 = vrot.slane %v3294, 1
    %v3296 = vadd.f32 %v3294, %v3295
    %v3297 = vmul.f32 %v3254, %v477
    %v3298 = vmul.f32 %v3260, %v477
    %v3299 = vmul.f32 %v3266, %v477
    %v3300 = vmul.f32 %v3272, %v477
    %v3301 = vmul.f32 %v3278, %v477
    %v3302 = vmul.f32 %v3284, %v477
    %v3303 = vmul.f32 %v3290, %v477
    %v3304 = vmul.f32 %v3296, %v477
    %v3305 = vadd.f32 %v3297, 1e-05
    %v3306 = vadd.f32 %v3298, 1e-05
    %v3307 = vadd.f32 %v3299, 1e-05
    %v3308 = vadd.f32 %v3300, 1e-05
    %v3309 = vadd.f32 %v3301, 1e-05
    %v3310 = vadd.f32 %v3302, 1e-05
    %v3311 = vadd.f32 %v3303, 1e-05
    %v3312 = vadd.f32 %v3304, 1e-05
    %v3313 = vrsqrt.pop %v3305
    %v3314 = vmul.f32 %v3313, %v3305
    %v3315 = vmul.f32 %v3314, %v3313
    %v3316 = vmul.f32 0.5, %v3315
    %v3317 = vsub.f32 1.5, %v3316
    %v3318 = vmul.f32 %v3313, %v3317
    %vm3319 = vweird.f32 %v3305
    %vm3320 = vweird.f32 %v3313
    %vm3321 = vmor %vm3319, %vm3320
    %v3322 = vsel %vm3321, %v3313, %v3318
    %v3323 = vrsqrt.pop %v3306
    %v3324 = vmul.f32 %v3323, %v3306
    %v3325 = vmul.f32 %v3324, %v3323
    %v3326 = vmul.f32 0.5, %v3325
    %v3327 = vsub.f32 1.5, %v3326
    %v3328 = vmul.f32 %v3323, %v3327
    %vm3329 = vweird.f32 %v3306
    %vm3330 = vweird.f32 %v3323
    %vm3331 = vmor %vm3329, %vm3330
    %v3332 = vsel %vm3331, %v3323, %v3328
    %v3333 = vrsqrt.pop %v3307
    %v3334 = vmul.f32 %v3333, %v3307
    %v3335 = vmul.f32 %v3334, %v3333
    %v3336 = vmul.f32 0.5, %v3335
    %v3337 = vsub.f32 1.5, %v3336
    %v3338 = vmul.f32 %v3333, %v3337
    %vm3339 = vweird.f32 %v3307
    %vm3340 = vweird.f32 %v3333
    %vm3341 = vmor %vm3339, %vm3340
    %v3342 = vsel %vm3341, %v3333, %v3338
    %v3343 = vrsqrt.pop %v3308
    %v3344 = vmul.f32 %v3343, %v3308
    %v3345 = vmul.f32 %v3344, %v3343
    %v3346 = vmul.f32 0.5, %v3345
    %v3347 = vsub.f32 1.5, %v3346
    %v3348 = vmul.f32 %v3343, %v3347
    %vm3349 = vweird.f32 %v3308
    %vm3350 = vweird.f32 %v3343
    %vm3351 = vmor %vm3349, %vm3350
    %v3352 = vsel %vm3351, %v3343, %v3348
    %v3353 = vrsqrt.pop %v3309
    %v3354 = vmul.f32 %v3353, %v3309
    %v3355 = vmul.f32 %v3354, %v3353
    %v3356 = vmul.f32 0.5, %v3355
    %v3357 = vsub.f32 1.5, %v3356
    %v3358 = vmul.f32 %v3353, %v3357
    %vm3359 = vweird.f32 %v3309
    %vm3360 = vweird.f32 %v3353
    %vm3361 = vmor %vm3359, %vm3360
    %v3362 = vsel %vm3361, %v3353, %v3358
    %v3363 = vrsqrt.pop %v3310
    %v3364 = vmul.f32 %v3363, %v3310
    %v3365 = vmul.f32 %v3364, %v3363
    %v3366 = vmul.f32 0.5, %v3365
    %v3367 = vsub.f32 1.5, %v3366
    %v3368 = vmul.f32 %v3363, %v3367
    %vm3369 = vweird.f32 %v3310
    %vm3370 = vweird.f32 %v3363
    %vm3371 = vmor %vm3369, %vm3370
    %v3372 = vsel %vm3371, %v3363, %v3368
    %v3373 = vrsqrt.pop %v3311
    %v3374 = vmul.f32 %v3373, %v3311
    %v3375 = vmul.f32 %v3374, %v3373
    %v3376 = vmul.f32 0.5, %v3375
    %v3377 = vsub.f32 1.5, %v3376
    %v3378 = vmul.f32 %v3373, %v3377
    %vm3379 = vweird.f32 %v3311
    %vm3380 = vweird.f32 %v3373
    %vm3381 = vmor %vm3379, %vm3380
    %v3382 = vsel %vm3381, %v3373, %v3378
    %v3383 = vrsqrt.pop %v3312
    %v3384 = vmul.f32 %v3383, %v3312
    %v3385 = vmul.f32 %v3384, %v3383
    %v3386 = vmul.f32 0.5, %v3385
    %v3387 = vsub.f32 1.5, %v3386
    %v3388 = vmul.f32 %v3383, %v3387
    %vm3389 = vweird.f32 %v3312
    %vm3390 = vweird.f32 %v3383
    %vm3391 = vmor %vm3389, %vm3390
    %v3392 = vsel %vm3391, %v3383, %v3388
    %v3401 = vrot.slane %v3332, 7
    %v3402 = vrot.slane %v3342, 6
    %v3403 = vrot.slane %v3352, 5
    %v3404 = vrot.slane %v3362, 4
    %v3405 = vrot.slane %v3372, 3
    %v3406 = vrot.slane %v3382, 2
    %v3407 = vrot.slane %v3392, 1
    %v3408 = vsel %vm523, %v3322, %v3401
    %v3409 = vsel %vm1162, %v3402, %v3403
    %v3410 = vsel %vm1164, %v3408, %v3409
    %vm3411 = vcmask 1044484
    %v3412 = vsel %vm3411, %v3404, %v3405
    %vm3413 = vcmask 1046534
    %v3414 = vsel %vm3413, %v3406, %v3407
    %vm3415 = vcmask 1045508
    %v3416 = vsel %vm3415, %v3412, %v3414
    %vm3417 = vcmask 1043456
    %v3418 = vsel %vm3417, %v3410, %v3416
    %v3420 = vmul.f32 %v3175, %v3418
    %v3429 = vrot.slane %v3226, 7
    %v3430 = vrot.slane %v3227, 6
    %v3431 = vrot.slane %v3228, 5
    %v3432 = vrot.slane %v3229, 4
    %v3433 = vrot.slane %v3230, 3
    %v3434 = vrot.slane %v3231, 2
    %v3435 = vrot.slane %v3232, 1
    %v3436 = vsel %vm523, %v3225, %v3429
    %v3437 = vsel %vm1162, %v3430, %v3431
    %v3438 = vsel %vm1164, %v3436, %v3437
    %v3439 = vsel %vm3411, %v3432, %v3433
    %v3440 = vsel %vm3413, %v3434, %v3435
    %v3441 = vsel %vm3415, %v3439, %v3440
    %v3442 = vsel %vm3417, %v3438, %v3441
    %v3444 = vmul.f32 %v3420, %v3442
    %v3445 = vsub.f32 %v3176, %v3444
    %v3447 = vperm.slane %v3420, 0
    %v3448 = vperm.slane %v3420, 1
    %v3449 = vperm.slane %v3420, 2
    %v3450 = vperm.slane %v3420, 3
    %v3451 = vperm.slane %v3420, 4
    %v3452 = vperm.slane %v3420, 5
    %v3453 = vperm.slane %v3420, 6
    %v3454 = vperm.slane %v3420, 7
    %v3463 = vmul.f32 %v2808, %v3447
    %v3464 = vmul.f32 %v2860, %v3448
    %v3465 = vmul.f32 %v2912, %v3449
    %v3466 = vmul.f32 %v2964, %v3450
    %v3467 = vmul.f32 %v3016, %v3451
    %v3468 = vmul.f32 %v3068, %v3452
    %v3469 = vmul.f32 %v3120, %v3453
    %v3470 = vmul.f32 %v3172, %v3454
    %v3472 = vperm.slane %v3445, 0
    %v3473 = vperm.slane %v3445, 1
    %v3474 = vperm.slane %v3445, 2
    %v3475 = vperm.slane %v3445, 3
    %v3476 = vperm.slane %v3445, 4
    %v3477 = vperm.slane %v3445, 5
    %v3478 = vperm.slane %v3445, 6
    %v3479 = vperm.slane %v3445, 7
    %v3488 = vadd.f32 %v3463, %v3472
    %v3489 = vadd.f32 %v3464, %v3473
    %v3490 = vadd.f32 %v3465, %v3474
    %v3491 = vadd.f32 %v3466, %v3475
    %v3492 = vadd.f32 %v3467, %v3476
    %v3493 = vadd.f32 %v3468, %v3477
    %v3494 = vadd.f32 %v3469, %v3478
    %v3495 = vadd.f32 %v3470, %v3479
    %vm3496 = vcmp.gt.f32.partialorder %v3488, 0.0
    %vm3497 = vcmp.gt.f32.partialorder %v3489, 0.0
    %vm3498 = vcmp.gt.f32.partialorder %v3490, 0.0
    %vm3499 = vcmp.gt.f32.partialorder %v3491, 0.0
    %vm3500 = vcmp.gt.f32.partialorder %v3492, 0.0
    %vm3501 = vcmp.gt.f32.partialorder %v3493, 0.0
    %vm3502 = vcmp.gt.f32.partialorder %v3494, 0.0
    %vm3503 = vcmp.gt.f32.partialorder %v3495, 0.0
    %v3504 = vmul.f32 %v3488, 0.2
    %v3505 = vmul.f32 %v3489, 0.2
    %v3506 = vmul.f32 %v3490, 0.2
    %v3507 = vmul.f32 %v3491, 0.2
    %v3508 = vmul.f32 %v3492, 0.2
    %v3509 = vmul.f32 %v3493, 0.2
    %v3510 = vmul.f32 %v3494, 0.2
    %v3511 = vmul.f32 %v3495, 0.2
    %v3512 = vsel %vm3496, %v3488, %v3504
    %v3513 = vsel %vm3497, %v3489, %v3505
    %v3514 = vsel %vm3498, %v3490, %v3506
    %v3515 = vsel %vm3499, %v3491, %v3507
    %v3516 = vsel %vm3500, %v3492, %v3508
    %v3517 = vsel %vm3501, %v3493, %v3509
    %v3518 = vsel %vm3502, %v3494, %v3510
    %v3519 = vsel %vm3503, %v3495, %v3511
    %v3520 = vpack.c.bf16 %v3512, %v3512
    %v3521 = vpack.c.bf16 %v3513, %v3513
    %v3522 = vpack.c.bf16 %v3514, %v3514
    %v3523 = vpack.c.bf16 %v3515, %v3515
    %v3524 = vpack.c.bf16 %v3516, %v3516
    %v3525 = vpack.c.bf16 %v3517, %v3517
    %v3526 = vpack.c.bf16 %v3518, %v3518
    %v3527 = vpack.c.bf16 %v3519, %v3519
    %v3528 = vld [vmem:[#allocation22] sm:$0xff]
    %v3529 = vld [vmem:[#allocation22 + $0x8] sm:$0xff]
    %v3530 = vld [vmem:[#allocation22 + $0x10] sm:$0xff]
    %v3531 = vld [vmem:[#allocation22 + $0x18] sm:$0xf]
    %v3532 = vld [vmem:[#allocation22 + $0x1c] sm:$0xff]
    %v3533 = vld [vmem:[#allocation22 + $0x24] sm:$0xff]
    %v3534 = vld [vmem:[#allocation22 + $0x2c] sm:$0xff]
    %v3535 = vld [vmem:[#allocation22 + $0x34] sm:$0xf]
    %v3536 = vld [vmem:[#allocation22 + $0x38] sm:$0xff]
    %v3537 = vld [vmem:[#allocation22 + $0x40] sm:$0xff]
    %v3538 = vld [vmem:[#allocation22 + $0x48] sm:$0xff]
    %v3539 = vld [vmem:[#allocation22 + $0x50] sm:$0xf]
    %v3540 = vld [vmem:[#allocation22 + $0x54] sm:$0xff]
    %v3541 = vld [vmem:[#allocation22 + $0x5c] sm:$0xff]
    %v3542 = vld [vmem:[#allocation22 + $0x64] sm:$0xff]
    %v3543 = vld [vmem:[#allocation22 + $0x6c] sm:$0xf]
    %v3544 = vld [vmem:[#allocation22 + $0x70] sm:$0xff]
    %v3545 = vld [vmem:[#allocation22 + $0x78] sm:$0xff]
    %v3546 = vld [vmem:[#allocation22 + $0x80] sm:$0xff]
    %v3547 = vld [vmem:[#allocation22 + $0x88] sm:$0xf]
    %v3548 = vld [vmem:[#allocation22 + $0x8c] sm:$0xff]
    %v3549 = vld [vmem:[#allocation22 + $0x94] sm:$0xff]
    %v3550 = vld [vmem:[#allocation22 + $0x9c] sm:$0xff]
    %v3551 = vld [vmem:[#allocation22 + $0xa4] sm:$0xf]
    %v3552 = vld [vmem:[#allocation22 + $0xa8] sm:$0xff]
    %v3553 = vld [vmem:[#allocation22 + $0xb0] sm:$0xff]
    %v3554 = vld [vmem:[#allocation22 + $0xb8] sm:$0xff]
    %v3555 = vld [vmem:[#allocation22 + $0xc0] sm:$0xf]
    %v3556 = vld [vmem:[#allocation22 + $0xc4] sm:$0xff]
    %v3557 = vld [vmem:[#allocation22 + $0xcc] sm:$0xff]
    %v3558 = vld [vmem:[#allocation22 + $0xd4] sm:$0xff]
    %v3559 = vld [vmem:[#allocation22 + $0xdc] sm:$0xf]
    %v3560 = vld [vmem:[#allocation22 + $0xe0] sm:$0xff]
    %v3561 = vld [vmem:[#allocation22 + $0xe8] sm:$0xff]
    %v3562 = vld [vmem:[#allocation22 + $0xf0] sm:$0xff]
    %v3563 = vld [vmem:[#allocation22 + $0xf8] sm:$0xf]
    %v3564 = vld [vmem:[#allocation22 + $0xfc] sm:$0xff]
    %v3565 = vld [vmem:[#allocation22 + $0x104] sm:$0xff]
    %v3566 = vld [vmem:[#allocation22 + $0x10c] sm:$0xff]
    %v3567 = vld [vmem:[#allocation22 + $0x114] sm:$0xf]
    %v3568 = vld [vmem:[#allocation22 + $0x118] sm:$0xff]
    %v3569 = vld [vmem:[#allocation22 + $0x120] sm:$0xff]
    %v3570 = vld [vmem:[#allocation22 + $0x128] sm:$0xff]
    %v3571 = vld [vmem:[#allocation22 + $0x130] sm:$0xf]
    %v3572 = vld [vmem:[#allocation22 + $0x134] sm:$0xff]
    %v3573 = vld [vmem:[#allocation22 + $0x13c] sm:$0xff]
    %v3574 = vld [vmem:[#allocation22 + $0x144] sm:$0xff]
    %v3575 = vld [vmem:[#allocation22 + $0x14c] sm:$0xf]
    %v3576 = vld [vmem:[#allocation22 + $0x150] sm:$0xff]
    %v3577 = vld [vmem:[#allocation22 + $0x158] sm:$0xff]
    %v3578 = vld [vmem:[#allocation22 + $0x160] sm:$0xff]
    %v3579 = vld [vmem:[#allocation22 + $0x168] sm:$0xf]
    %v3580 = vld [vmem:[#allocation22 + $0x16c] sm:$0xff]
    %v3581 = vld [vmem:[#allocation22 + $0x174] sm:$0xff]
    %v3582 = vld [vmem:[#allocation22 + $0x17c] sm:$0xff]
    %v3583 = vld [vmem:[#allocation22 + $0x184] sm:$0xf]
    %v3584 = vld [vmem:[#allocation22 + $0x188] sm:$0xff]
    %v3585 = vld [vmem:[#allocation22 + $0x190] sm:$0xff]
    %v3586 = vld [vmem:[#allocation22 + $0x198] sm:$0xff]
    %v3587 = vld [vmem:[#allocation22 + $0x1a0] sm:$0xf]
    %v3588 = vld [vmem:[#allocation22 + $0x1a4] sm:$0xff]
    %v3589 = vld [vmem:[#allocation22 + $0x1ac] sm:$0xff]
    %v3590 = vld [vmem:[#allocation22 + $0x1b4] sm:$0xff]
    %v3591 = vld [vmem:[#allocation22 + $0x1bc] sm:$0xf]
    %v3592 = vld [vmem:[#allocation22 + $0x1c0] sm:$0xff]
    %v3593 = vld [vmem:[#allocation22 + $0x1c8] sm:$0xff]
    %v3594 = vld [vmem:[#allocation22 + $0x1d0] sm:$0xff]
    %v3595 = vld [vmem:[#allocation22 + $0x1d8] sm:$0xf]
    %v3596 = vld [vmem:[#allocation22 + $0x1dc] sm:$0xff]
    %v3597 = vld [vmem:[#allocation22 + $0x1e4] sm:$0xff]
    %v3598 = vld [vmem:[#allocation22 + $0x1ec] sm:$0xff]
    %v3599 = vld [vmem:[#allocation22 + $0x1f4] sm:$0xf]
    %v3600 = vld [vmem:[#allocation22 + $0x1f8] sm:$0xff]
    %v3601 = vld [vmem:[#allocation22 + $0x200] sm:$0xff]
    %v3602 = vld [vmem:[#allocation22 + $0x208] sm:$0xff]
    %v3603 = vld [vmem:[#allocation22 + $0x210] sm:$0xf]
    %v3604 = vld [vmem:[#allocation22 + $0x214] sm:$0xff]
    %v3605 = vld [vmem:[#allocation22 + $0x21c] sm:$0xff]
    %v3606 = vld [vmem:[#allocation22 + $0x224] sm:$0xff]
    %v3607 = vld [vmem:[#allocation22 + $0x22c] sm:$0xf]
    %v3608 = vld [vmem:[#allocation22 + $0x230] sm:$0xff]
    %v3609 = vld [vmem:[#allocation22 + $0x238] sm:$0xff]
    %v3610 = vld [vmem:[#allocation22 + $0x240] sm:$0xff]
    %v3611 = vld [vmem:[#allocation22 + $0x248] sm:$0xf]
    %v3612 = vld [vmem:[#allocation22 + $0x24c] sm:$0xff]
    %v3613 = vld [vmem:[#allocation22 + $0x254] sm:$0xff]
    %v3614 = vld [vmem:[#allocation22 + $0x25c] sm:$0xff]
    %v3615 = vld [vmem:[#allocation22 + $0x264] sm:$0xf]
    %v3616 = vld [vmem:[#allocation22 + $0x268] sm:$0xff]
    %v3617 = vld [vmem:[#allocation22 + $0x270] sm:$0xff]
    %v3618 = vld [vmem:[#allocation22 + $0x278] sm:$0xff]
    %v3619 = vld [vmem:[#allocation22 + $0x280] sm:$0xf]
    %v3620 = vld [vmem:[#allocation22 + $0x284] sm:$0xff]
    %v3621 = vld [vmem:[#allocation22 + $0x28c] sm:$0xff]
    %v3622 = vld [vmem:[#allocation22 + $0x294] sm:$0xff]
    %v3623 = vld [vmem:[#allocation22 + $0x29c] sm:$0xf]
    %v3624 = vld [vmem:[#allocation22 + $0x2a0] sm:$0xff]
    %v3625 = vld [vmem:[#allocation22 + $0x2a8] sm:$0xff]
    %v3626 = vld [vmem:[#allocation22 + $0x2b0] sm:$0xff]
    %v3627 = vld [vmem:[#allocation22 + $0x2b8] sm:$0xf]
    %v3628 = vld [vmem:[#allocation22 + $0x2bc] sm:$0xff]
    %v3629 = vld [vmem:[#allocation22 + $0x2c4] sm:$0xff]
    %v3630 = vld [vmem:[#allocation22 + $0x2cc] sm:$0xff]
    %v3631 = vld [vmem:[#allocation22 + $0x2d4] sm:$0xf]
    %v3632 = vld [vmem:[#allocation22 + $0x2d8] sm:$0xff]
    %v3633 = vld [vmem:[#allocation22 + $0x2e0] sm:$0xff]
    %v3634 = vld [vmem:[#allocation22 + $0x2e8] sm:$0xff]
    %v3635 = vld [vmem:[#allocation22 + $0x2f0] sm:$0xf]
    %v3636 = vld [vmem:[#allocation22 + $0x2f4] sm:$0xff]
    %v3637 = vld [vmem:[#allocation22 + $0x2fc] sm:$0xff]
    %v3638 = vld [vmem:[#allocation22 + $0x304] sm:$0xff]
    %v3639 = vld [vmem:[#allocation22 + $0x30c] sm:$0xf]
    %v3640 = vld [vmem:[#allocation22 + $0x310] sm:$0xff]
    %v3641 = vld [vmem:[#allocation22 + $0x318] sm:$0xff]
    %v3642 = vld [vmem:[#allocation22 + $0x320] sm:$0xff]
    %v3643 = vld [vmem:[#allocation22 + $0x328] sm:$0xf]
    %v3644 = vld [vmem:[#allocation22 + $0x32c] sm:$0xff]
    %v3645 = vld [vmem:[#allocation22 + $0x334] sm:$0xff]
    %v3646 = vld [vmem:[#allocation22 + $0x33c] sm:$0xff]
    %v3647 = vld [vmem:[#allocation22 + $0x344] sm:$0xf]
    %v3648 = vld [vmem:[#allocation22 + $0x348] sm:$0xff]
    %v3649 = vld [vmem:[#allocation22 + $0x350] sm:$0xff]
    %v3650 = vld [vmem:[#allocation22 + $0x358] sm:$0xff]
    %v3651 = vld [vmem:[#allocation22 + $0x360] sm:$0xf]
    %v3652 = vld [vmem:[#allocation22 + $0x364] sm:$0xff]
    %v3653 = vld [vmem:[#allocation22 + $0x36c] sm:$0xff]
    %v3654 = vld [vmem:[#allocation22 + $0x374] sm:$0xff]
    %v3655 = vld [vmem:[#allocation22 + $0x37c] sm:$0xf]
    %v3656 = vld [vmem:[#allocation22 + $0x380] sm:$0xff]
    %v3657 = vld [vmem:[#allocation22 + $0x388] sm:$0xff]
    %v3658 = vld [vmem:[#allocation22 + $0x390] sm:$0xff]
    %v3659 = vld [vmem:[#allocation22 + $0x398] sm:$0xf]
    %v3660 = vld [vmem:[#allocation22 + $0x39c] sm:$0xff]
    %v3661 = vld [vmem:[#allocation22 + $0x3a4] sm:$0xff]
    %v3662 = vld [vmem:[#allocation22 + $0x3ac] sm:$0xff]
    %v3663 = vld [vmem:[#allocation22 + $0x3b4] sm:$0xf]
    %v3664 = vld [vmem:[#allocation22 + $0x3b8] sm:$0xff]
    %v3665 = vld [vmem:[#allocation22 + $0x3c0] sm:$0xff]
    %v3666 = vld [vmem:[#allocation22 + $0x3c8] sm:$0xff]
    %v3667 = vld [vmem:[#allocation22 + $0x3d0] sm:$0xf]
    %v3668 = vld [vmem:[#allocation22 + $0x3d4] sm:$0xff]
    %v3669 = vld [vmem:[#allocation22 + $0x3dc] sm:$0xff]
    %v3670 = vld [vmem:[#allocation22 + $0x3e4] sm:$0xff]
    %v3671 = vld [vmem:[#allocation22 + $0x3ec] sm:$0xf]
    %v3672 = vld [vmem:[#allocation22 + $0x3f0] sm:$0xff]
    %v3673 = vld [vmem:[#allocation22 + $0x3f8] sm:$0xff]
    %v3674 = vld [vmem:[#allocation22 + $0x400] sm:$0xff]
    %v3675 = vld [vmem:[#allocation22 + $0x408] sm:$0xf]
    %v3676 = vld [vmem:[#allocation22 + $0x40c] sm:$0xff]
    %v3677 = vld [vmem:[#allocation22 + $0x414] sm:$0xff]
    %v3678 = vld [vmem:[#allocation22 + $0x41c] sm:$0xff]
    %v3679 = vld [vmem:[#allocation22 + $0x424] sm:$0xf]
    %v3680 = vld [vmem:[#allocation22 + $0x428] sm:$0xff]
    %v3681 = vld [vmem:[#allocation22 + $0x430] sm:$0xff]
    %v3682 = vld [vmem:[#allocation22 + $0x438] sm:$0xff]
    %v3683 = vld [vmem:[#allocation22 + $0x440] sm:$0xf]
    %v3684 = vld [vmem:[#allocation22 + $0x444] sm:$0xff]
    %v3685 = vld [vmem:[#allocation22 + $0x44c] sm:$0xff]
    %v3686 = vld [vmem:[#allocation22 + $0x454] sm:$0xff]
    %v3687 = vld [vmem:[#allocation22 + $0x45c] sm:$0xf]
    %v3688 = vld [vmem:[#allocation22 + $0x460] sm:$0xff]
    %v3689 = vld [vmem:[#allocation22 + $0x468] sm:$0xff]
    %v3690 = vld [vmem:[#allocation22 + $0x470] sm:$0xff]
    %v3691 = vld [vmem:[#allocation22 + $0x478] sm:$0xf]
    %v3692 = vld [vmem:[#allocation22 + $0x47c] sm:$0xff]
    %v3693 = vld [vmem:[#allocation22 + $0x484] sm:$0xff]
    %v3694 = vld [vmem:[#allocation22 + $0x48c] sm:$0xff]
    %v3695 = vld [vmem:[#allocation22 + $0x494] sm:$0xf]
    %v3696 = vld [vmem:[#allocation22 + $0x498] sm:$0xff]
    %v3697 = vld [vmem:[#allocation22 + $0x4a0] sm:$0xff]
    %v3698 = vld [vmem:[#allocation22 + $0x4a8] sm:$0xff]
    %v3699 = vld [vmem:[#allocation22 + $0x4b0] sm:$0xf]
    %v3700 = vld [vmem:[#allocation22 + $0x4b4] sm:$0xff]
    %v3701 = vld [vmem:[#allocation22 + $0x4bc] sm:$0xff]
    %v3702 = vld [vmem:[#allocation22 + $0x4c4] sm:$0xff]
    %v3703 = vld [vmem:[#allocation22 + $0x4cc] sm:$0xf]
    %v3704 = vld [vmem:[#allocation22 + $0x4d0] sm:$0xff]
    %v3705 = vld [vmem:[#allocation22 + $0x4d8] sm:$0xff]
    %v3706 = vld [vmem:[#allocation22 + $0x4e0] sm:$0xff]
    %v3707 = vld [vmem:[#allocation22 + $0x4e8] sm:$0xf]
    %v3708 = vld [vmem:[#allocation22 + $0x4ec] sm:$0xff]
    %v3709 = vld [vmem:[#allocation22 + $0x4f4] sm:$0xff]
    %v3710 = vld [vmem:[#allocation22 + $0x4fc] sm:$0xff]
    %v3711 = vld [vmem:[#allocation22 + $0x504] sm:$0xf]
    %v3712 = vld [vmem:[#allocation22 + $0x508] sm:$0xff]
    %v3713 = vld [vmem:[#allocation22 + $0x510] sm:$0xff]
    %v3714 = vld [vmem:[#allocation22 + $0x518] sm:$0xff]
    %v3715 = vld [vmem:[#allocation22 + $0x520] sm:$0xf]
    %v3716 = vld [vmem:[#allocation22 + $0x524] sm:$0xff]
    %v3717 = vld [vmem:[#allocation22 + $0x52c] sm:$0xff]
    %v3718 = vld [vmem:[#allocation22 + $0x534] sm:$0xff]
    %v3719 = vld [vmem:[#allocation22 + $0x53c] sm:$0xf]
    %v3720 = vld [vmem:[#allocation22 + $0x540] sm:$0xff]
    %v3721 = vld [vmem:[#allocation22 + $0x548] sm:$0xff]
    %v3722 = vld [vmem:[#allocation22 + $0x550] sm:$0xff]
    %v3723 = vld [vmem:[#allocation22 + $0x558] sm:$0xf]
    %v3724 = vld [vmem:[#allocation22 + $0x55c] sm:$0xff]
    %v3725 = vld [vmem:[#allocation22 + $0x564] sm:$0xff]
    %v3726 = vld [vmem:[#allocation22 + $0x56c] sm:$0xff]
    %v3727 = vld [vmem:[#allocation22 + $0x574] sm:$0xf]
    %v3728 = vld [vmem:[#allocation22 + $0x578] sm:$0xff]
    %v3729 = vld [vmem:[#allocation22 + $0x580] sm:$0xff]
    %v3730 = vld [vmem:[#allocation22 + $0x588] sm:$0xff]
    %v3731 = vld [vmem:[#allocation22 + $0x590] sm:$0xf]
    %v3732 = vld [vmem:[#allocation22 + $0x594] sm:$0xff]
    %v3733 = vld [vmem:[#allocation22 + $0x59c] sm:$0xff]
    %v3734 = vld [vmem:[#allocation22 + $0x5a4] sm:$0xff]
    %v3735 = vld [vmem:[#allocation22 + $0x5ac] sm:$0xf]
    %v3736 = vld [vmem:[#allocation22 + $0x5b0] sm:$0xff]
    %v3737 = vld [vmem:[#allocation22 + $0x5b8] sm:$0xff]
    %v3738 = vld [vmem:[#allocation22 + $0x5c0] sm:$0xff]
    %v3739 = vld [vmem:[#allocation22 + $0x5c8] sm:$0xf]
    %v3740 = vld [vmem:[#allocation22 + $0x5cc] sm:$0xff]
    %v3741 = vld [vmem:[#allocation22 + $0x5d4] sm:$0xff]
    %v3742 = vld [vmem:[#allocation22 + $0x5dc] sm:$0xff]
    %v3743 = vld [vmem:[#allocation22 + $0x5e4] sm:$0xf]
    %v3744 = vld [vmem:[#allocation22 + $0x5e8] sm:$0xff]
    %v3745 = vld [vmem:[#allocation22 + $0x5f0] sm:$0xff]
    %v3746 = vld [vmem:[#allocation22 + $0x5f8] sm:$0xff]
    %v3747 = vld [vmem:[#allocation22 + $0x600] sm:$0xf]
    %v3748 = vld [vmem:[#allocation22 + $0x604] sm:$0xff]
    %v3749 = vld [vmem:[#allocation22 + $0x60c] sm:$0xff]
    %v3750 = vld [vmem:[#allocation22 + $0x614] sm:$0xff]
    %v3751 = vld [vmem:[#allocation22 + $0x61c] sm:$0xf]
    %v3752 = vld [vmem:[#allocation22 + $0x620] sm:$0xff]
    %v3753 = vld [vmem:[#allocation22 + $0x628] sm:$0xff]
    %v3754 = vld [vmem:[#allocation22 + $0x630] sm:$0xff]
    %v3755 = vld [vmem:[#allocation22 + $0x638] sm:$0xf]
    %v3756 = vld [vmem:[#allocation22 + $0x63c] sm:$0xff]
    %v3757 = vld [vmem:[#allocation22 + $0x644] sm:$0xff]
    %v3758 = vld [vmem:[#allocation22 + $0x64c] sm:$0xff]
    %v3759 = vld [vmem:[#allocation22 + $0x654] sm:$0xf]
    %v3760 = vld [vmem:[#allocation22 + $0x658] sm:$0xff]
    %v3761 = vld [vmem:[#allocation22 + $0x660] sm:$0xff]
    %v3762 = vld [vmem:[#allocation22 + $0x668] sm:$0xff]
    %v3763 = vld [vmem:[#allocation22 + $0x670] sm:$0xf]
    %v3764 = vld [vmem:[#allocation22 + $0x674] sm:$0xff]
    %v3765 = vld [vmem:[#allocation22 + $0x67c] sm:$0xff]
    %v3766 = vld [vmem:[#allocation22 + $0x684] sm:$0xff]
    %v3767 = vld [vmem:[#allocation22 + $0x68c] sm:$0xf]
    %v3768 = vld [vmem:[#allocation22 + $0x690] sm:$0xff]
    %v3769 = vld [vmem:[#allocation22 + $0x698] sm:$0xff]
    %v3770 = vld [vmem:[#allocation22 + $0x6a0] sm:$0xff]
    %v3771 = vld [vmem:[#allocation22 + $0x6a8] sm:$0xf]
    %v3772 = vld [vmem:[#allocation22 + $0x6ac] sm:$0xff]
    %v3773 = vld [vmem:[#allocation22 + $0x6b4] sm:$0xff]
    %v3774 = vld [vmem:[#allocation22 + $0x6bc] sm:$0xff]
    %v3775 = vld [vmem:[#allocation22 + $0x6c4] sm:$0xf]
    %v3776 = vld [vmem:[#allocation22 + $0x6c8] sm:$0xff]
    %v3777 = vld [vmem:[#allocation22 + $0x6d0] sm:$0xff]
    %v3778 = vld [vmem:[#allocation22 + $0x6d8] sm:$0xff]
    %v3779 = vld [vmem:[#allocation22 + $0x6e0] sm:$0xf]
    %v3780 = vld [vmem:[#allocation22 + $0x6e4] sm:$0xff]
    %v3781 = vld [vmem:[#allocation22 + $0x6ec] sm:$0xff]
    %v3782 = vld [vmem:[#allocation22 + $0x6f4] sm:$0xff]
    %v3783 = vld [vmem:[#allocation22 + $0x6fc] sm:$0xf]
    %v3784 = vld [vmem:[#allocation22 + $0x700] sm:$0xff]
    %v3785 = vld [vmem:[#allocation22 + $0x708] sm:$0xff]
    %v3786 = vld [vmem:[#allocation22 + $0x710] sm:$0xff]
    %v3787 = vld [vmem:[#allocation22 + $0x718] sm:$0xf]
    %v3788 = vld [vmem:[#allocation22 + $0x71c] sm:$0xff]
    %v3789 = vld [vmem:[#allocation22 + $0x724] sm:$0xff]
    %v3790 = vld [vmem:[#allocation22 + $0x72c] sm:$0xff]
    %v3791 = vld [vmem:[#allocation22 + $0x734] sm:$0xf]
    %v3792 = vld [vmem:[#allocation22 + $0x738] sm:$0xff]
    %v3793 = vld [vmem:[#allocation22 + $0x740] sm:$0xff]
    %v3794 = vld [vmem:[#allocation22 + $0x748] sm:$0xff]
    %v3795 = vld [vmem:[#allocation22 + $0x750] sm:$0xf]
    %v3796 = vld [vmem:[#allocation22 + $0x754] sm:$0xff]
    %v3797 = vld [vmem:[#allocation22 + $0x75c] sm:$0xff]
    %v3798 = vld [vmem:[#allocation22 + $0x764] sm:$0xff]
    %v3799 = vld [vmem:[#allocation22 + $0x76c] sm:$0xf]
    %v3800 = vld [vmem:[#allocation22 + $0x770] sm:$0xff]
    %v3801 = vld [vmem:[#allocation22 + $0x778] sm:$0xff]
    %v3802 = vld [vmem:[#allocation22 + $0x780] sm:$0xff]
    %v3803 = vld [vmem:[#allocation22 + $0x788] sm:$0xf]
    %v3804 = vld [vmem:[#allocation22 + $0x78c] sm:$0xff]
    %v3805 = vld [vmem:[#allocation22 + $0x794] sm:$0xff]
    %v3806 = vld [vmem:[#allocation22 + $0x79c] sm:$0xff]
    %v3807 = vld [vmem:[#allocation22 + $0x7a4] sm:$0xf]
    %v3808 = vld [vmem:[#allocation22 + $0x7a8] sm:$0xff]
    %v3809 = vld [vmem:[#allocation22 + $0x7b0] sm:$0xff]
    %v3810 = vld [vmem:[#allocation22 + $0x7b8] sm:$0xff]
    %v3811 = vld [vmem:[#allocation22 + $0x7c0] sm:$0xf]
    %v3812 = vld [vmem:[#allocation22 + $0x7c4] sm:$0xff]
    %v3813 = vld [vmem:[#allocation22 + $0x7cc] sm:$0xff]
    %v3814 = vld [vmem:[#allocation22 + $0x7d4] sm:$0xff]
    %v3815 = vld [vmem:[#allocation22 + $0x7dc] sm:$0xf]
    %v3816 = vld [vmem:[#allocation22 + $0x7e0] sm:$0xff]
    %v3817 = vld [vmem:[#allocation22 + $0x7e8] sm:$0xff]
    %v3818 = vld [vmem:[#allocation22 + $0x7f0] sm:$0xff]
    %v3819 = vld [vmem:[#allocation22 + $0x7f8] sm:$0xf]
    %v3820 = vld [vmem:[#allocation22 + $0x7fc] sm:$0xff]
    %v3821 = vld [vmem:[#allocation22 + $0x804] sm:$0xff]
    %v3822 = vld [vmem:[#allocation22 + $0x80c] sm:$0xff]
    %v3823 = vld [vmem:[#allocation22 + $0x814] sm:$0xf]
    %v3824 = vld [vmem:[#allocation22 + $0x818] sm:$0xff]
    %v3825 = vld [vmem:[#allocation22 + $0x820] sm:$0xff]
    %v3826 = vld [vmem:[#allocation22 + $0x828] sm:$0xff]
    %v3827 = vld [vmem:[#allocation22 + $0x830] sm:$0xf]
    %v3828 = vld [vmem:[#allocation22 + $0x834] sm:$0xff]
    %v3829 = vld [vmem:[#allocation22 + $0x83c] sm:$0xff]
    %v3830 = vld [vmem:[#allocation22 + $0x844] sm:$0xff]
    %v3831 = vld [vmem:[#allocation22 + $0x84c] sm:$0xf]
    %v3832 = vld [vmem:[#allocation22 + $0x850] sm:$0xff]
    %v3833 = vld [vmem:[#allocation22 + $0x858] sm:$0xff]
    %v3834 = vld [vmem:[#allocation22 + $0x860] sm:$0xff]
    %v3835 = vld [vmem:[#allocation22 + $0x868] sm:$0xf]
    %v3836 = vld [vmem:[#allocation22 + $0x86c] sm:$0xff]
    %v3837 = vld [vmem:[#allocation22 + $0x874] sm:$0xff]
    %v3838 = vld [vmem:[#allocation22 + $0x87c] sm:$0xff]
    %v3839 = vld [vmem:[#allocation22 + $0x884] sm:$0xf]
    %v3840 = vld [vmem:[#allocation22 + $0x888] sm:$0xff]
    %v3841 = vld [vmem:[#allocation22 + $0x890] sm:$0xff]
    %v3842 = vld [vmem:[#allocation22 + $0x898] sm:$0xff]
    %v3843 = vld [vmem:[#allocation22 + $0x8a0] sm:$0xf]
    %v3844 = vld [vmem:[#allocation22 + $0x8a4] sm:$0xff]
    %v3845 = vld [vmem:[#allocation22 + $0x8ac] sm:$0xff]
    %v3846 = vld [vmem:[#allocation22 + $0x8b4] sm:$0xff]
    %v3847 = vld [vmem:[#allocation22 + $0x8bc] sm:$0xf]
    %v3848 = vld [vmem:[#allocation22 + $0x8c0] sm:$0xff]
    %v3849 = vld [vmem:[#allocation22 + $0x8c8] sm:$0xff]
    %v3850 = vld [vmem:[#allocation22 + $0x8d0] sm:$0xff]
    %v3851 = vld [vmem:[#allocation22 + $0x8d8] sm:$0xf]
    %v3852 = vld [vmem:[#allocation22 + $0x8dc] sm:$0xff]
    %v3853 = vld [vmem:[#allocation22 + $0x8e4] sm:$0xff]
    %v3854 = vld [vmem:[#allocation22 + $0x8ec] sm:$0xff]
    %v3855 = vld [vmem:[#allocation22 + $0x8f4] sm:$0xf]
    %v3856 = vld [vmem:[#allocation22 + $0x8f8] sm:$0xff]
    %v3857 = vld [vmem:[#allocation22 + $0x900] sm:$0xff]
    %v3858 = vld [vmem:[#allocation22 + $0x908] sm:$0xff]
    %v3859 = vld [vmem:[#allocation22 + $0x910] sm:$0xf]
    %v3860 = vld [vmem:[#allocation22 + $0x914] sm:$0xff]
    %v3861 = vld [vmem:[#allocation22 + $0x91c] sm:$0xff]
    %v3862 = vld [vmem:[#allocation22 + $0x924] sm:$0xff]
    %v3863 = vld [vmem:[#allocation22 + $0x92c] sm:$0xf]
    %v3864 = vld [vmem:[#allocation22 + $0x930] sm:$0xff]
    %v3865 = vld [vmem:[#allocation22 + $0x938] sm:$0xff]
    %v3866 = vld [vmem:[#allocation22 + $0x940] sm:$0xff]
    %v3867 = vld [vmem:[#allocation22 + $0x948] sm:$0xf]
    %v3868 = vld [vmem:[#allocation22 + $0x94c] sm:$0xff]
    %v3869 = vld [vmem:[#allocation22 + $0x954] sm:$0xff]
    %v3870 = vld [vmem:[#allocation22 + $0x95c] sm:$0xff]
    %v3871 = vld [vmem:[#allocation22 + $0x964] sm:$0xf]
    %v3872 = vld [vmem:[#allocation22 + $0x968] sm:$0xff]
    %v3873 = vld [vmem:[#allocation22 + $0x970] sm:$0xff]
    %v3874 = vld [vmem:[#allocation22 + $0x978] sm:$0xff]
    %v3875 = vld [vmem:[#allocation22 + $0x980] sm:$0xf]
    %v3876 = vld [vmem:[#allocation22 + $0x984] sm:$0xff]
    %v3877 = vld [vmem:[#allocation22 + $0x98c] sm:$0xff]
    %v3878 = vld [vmem:[#allocation22 + $0x994] sm:$0xff]
    %v3879 = vld [vmem:[#allocation22 + $0x99c] sm:$0xf]
    %v3880 = vld [vmem:[#allocation22 + $0x9a0] sm:$0xff]
    %v3881 = vld [vmem:[#allocation22 + $0x9a8] sm:$0xff]
    %v3882 = vld [vmem:[#allocation22 + $0x9b0] sm:$0xff]
    %v3883 = vld [vmem:[#allocation22 + $0x9b8] sm:$0xf]
    %v3884 = vld [vmem:[#allocation22 + $0x9bc] sm:$0xff]
    %v3885 = vld [vmem:[#allocation22 + $0x9c4] sm:$0xff]
    %v3886 = vld [vmem:[#allocation22 + $0x9cc] sm:$0xff]
    %v3887 = vld [vmem:[#allocation22 + $0x9d4] sm:$0xf]
    %v3888 = vld [vmem:[#allocation22 + $0x9d8] sm:$0xff]
    %v3889 = vld [vmem:[#allocation22 + $0x9e0] sm:$0xff]
    %v3890 = vld [vmem:[#allocation22 + $0x9e8] sm:$0xff]
    %v3891 = vld [vmem:[#allocation22 + $0x9f0] sm:$0xf]
    %v3892 = vld [vmem:[#allocation22 + $0x9f4] sm:$0xff]
    %v3893 = vld [vmem:[#allocation22 + $0x9fc] sm:$0xff]
    %v3894 = vld [vmem:[#allocation22 + $0xa04] sm:$0xff]
    %v3895 = vld [vmem:[#allocation22 + $0xa0c] sm:$0xf]
    %v3896 = vld [vmem:[#allocation22 + $0xa10] sm:$0xff]
    %v3897 = vld [vmem:[#allocation22 + $0xa18] sm:$0xff]
    %v3898 = vld [vmem:[#allocation22 + $0xa20] sm:$0xff]
    %v3899 = vld [vmem:[#allocation22 + $0xa28] sm:$0xf]
    %v3900 = vld [vmem:[#allocation22 + $0xa2c] sm:$0xff]
    %v3901 = vld [vmem:[#allocation22 + $0xa34] sm:$0xff]
    %v3902 = vld [vmem:[#allocation22 + $0xa3c] sm:$0xff]
    %v3903 = vld [vmem:[#allocation22 + $0xa44] sm:$0xf]
    %v3904 = vld [vmem:[#allocation22 + $0xa48] sm:$0xff]
    %v3905 = vld [vmem:[#allocation22 + $0xa50] sm:$0xff]
    %v3906 = vld [vmem:[#allocation22 + $0xa58] sm:$0xff]
    %v3907 = vld [vmem:[#allocation22 + $0xa60] sm:$0xf]
    %v3908 = vld [vmem:[#allocation22 + $0xa64] sm:$0xff]
    %v3909 = vld [vmem:[#allocation22 + $0xa6c] sm:$0xff]
    %v3910 = vld [vmem:[#allocation22 + $0xa74] sm:$0xff]
    %v3911 = vld [vmem:[#allocation22 + $0xa7c] sm:$0xf]
    %v3912 = vld [vmem:[#allocation22 + $0xa80] sm:$0xff]
    %v3913 = vld [vmem:[#allocation22 + $0xa88] sm:$0xff]
    %v3914 = vld [vmem:[#allocation22 + $0xa90] sm:$0xff]
    %v3915 = vld [vmem:[#allocation22 + $0xa98] sm:$0xf]
    %v3916 = vld [vmem:[#allocation22 + $0xa9c] sm:$0xff]
    %v3917 = vld [vmem:[#allocation22 + $0xaa4] sm:$0xff]
    %v3918 = vld [vmem:[#allocation22 + $0xaac] sm:$0xff]
    %v3919 = vld [vmem:[#allocation22 + $0xab4] sm:$0xf]
    %v3920 = vld [vmem:[#allocation22 + $0xab8] sm:$0xff]
    %v3921 = vld [vmem:[#allocation22 + $0xac0] sm:$0xff]
    %v3922 = vld [vmem:[#allocation22 + $0xac8] sm:$0xff]
    %v3923 = vld [vmem:[#allocation22 + $0xad0] sm:$0xf]
    %v3924 = vld [vmem:[#allocation22 + $0xad4] sm:$0xff]
    %v3925 = vld [vmem:[#allocation22 + $0xadc] sm:$0xff]
    %v3926 = vld [vmem:[#allocation22 + $0xae4] sm:$0xff]
    %v3927 = vld [vmem:[#allocation22 + $0xaec] sm:$0xf]
    %v3928 = vld [vmem:[#allocation22 + $0xaf0] sm:$0xff]
    %v3929 = vld [vmem:[#allocation22 + $0xaf8] sm:$0xff]
    %v3930 = vld [vmem:[#allocation22 + $0xb00] sm:$0xff]
    %v3931 = vld [vmem:[#allocation22 + $0xb08] sm:$0xf]
    %v3932 = vld [vmem:[#allocation22 + $0xb0c] sm:$0xff]
    %v3933 = vld [vmem:[#allocation22 + $0xb14] sm:$0xff]
    %v3934 = vld [vmem:[#allocation22 + $0xb1c] sm:$0xff]
    %v3935 = vld [vmem:[#allocation22 + $0xb24] sm:$0xf]
    %v3936 = vld [vmem:[#allocation22 + $0xb28] sm:$0xff]
    %v3937 = vld [vmem:[#allocation22 + $0xb30] sm:$0xff]
    %v3938 = vld [vmem:[#allocation22 + $0xb38] sm:$0xff]
    %v3939 = vld [vmem:[#allocation22 + $0xb40] sm:$0xf]
    %v3940 = vld [vmem:[#allocation22 + $0xb44] sm:$0xff]
    %v3941 = vld [vmem:[#allocation22 + $0xb4c] sm:$0xff]
    %v3942 = vld [vmem:[#allocation22 + $0xb54] sm:$0xff]
    %v3943 = vld [vmem:[#allocation22 + $0xb5c] sm:$0xf]
    %v3944 = vld [vmem:[#allocation22 + $0xb60] sm:$0xff]
    %v3945 = vld [vmem:[#allocation22 + $0xb68] sm:$0xff]
    %v3946 = vld [vmem:[#allocation22 + $0xb70] sm:$0xff]
    %v3947 = vld [vmem:[#allocation22 + $0xb78] sm:$0xf]
    %v3948 = vld [vmem:[#allocation22 + $0xb7c] sm:$0xff]
    %v3949 = vld [vmem:[#allocation22 + $0xb84] sm:$0xff]
    %v3950 = vld [vmem:[#allocation22 + $0xb8c] sm:$0xff]
    %v3951 = vld [vmem:[#allocation22 + $0xb94] sm:$0xf]
    %v3952 = vld [vmem:[#allocation22 + $0xb98] sm:$0xff]
    %v3953 = vld [vmem:[#allocation22 + $0xba0] sm:$0xff]
    %v3954 = vld [vmem:[#allocation22 + $0xba8] sm:$0xff]
    %v3955 = vld [vmem:[#allocation22 + $0xbb0] sm:$0xf]
    %v3956 = vld [vmem:[#allocation22 + $0xbb4] sm:$0xff]
    %v3957 = vld [vmem:[#allocation22 + $0xbbc] sm:$0xff]
    %v3958 = vld [vmem:[#allocation22 + $0xbc4] sm:$0xff]
    %v3959 = vld [vmem:[#allocation22 + $0xbcc] sm:$0xf]
    %v3960 = vld [vmem:[#allocation22 + $0xbd0] sm:$0xff]
    %v3961 = vld [vmem:[#allocation22 + $0xbd8] sm:$0xff]
    %v3962 = vld [vmem:[#allocation22 + $0xbe0] sm:$0xff]
    %v3963 = vld [vmem:[#allocation22 + $0xbe8] sm:$0xf]
    %v3964 = vld [vmem:[#allocation22 + $0xbec] sm:$0xff]
    %v3965 = vld [vmem:[#allocation22 + $0xbf4] sm:$0xff]
    %v3966 = vld [vmem:[#allocation22 + $0xbfc] sm:$0xff]
    %v3967 = vld [vmem:[#allocation22 + $0xc04] sm:$0xf]
    %v3968 = vld [vmem:[#allocation22 + $0xc08] sm:$0xff]
    %v3969 = vld [vmem:[#allocation22 + $0xc10] sm:$0xff]
    %v3970 = vld [vmem:[#allocation22 + $0xc18] sm:$0xff]
    %v3971 = vld [vmem:[#allocation22 + $0xc20] sm:$0xf]
    %v3972 = vld [vmem:[#allocation22 + $0xc24] sm:$0xff]
    %v3973 = vld [vmem:[#allocation22 + $0xc2c] sm:$0xff]
    %v3974 = vld [vmem:[#allocation22 + $0xc34] sm:$0xff]
    %v3975 = vld [vmem:[#allocation22 + $0xc3c] sm:$0xf]
    %v3976 = vld [vmem:[#allocation22 + $0xc40] sm:$0xff]
    %v3977 = vld [vmem:[#allocation22 + $0xc48] sm:$0xff]
    %v3978 = vld [vmem:[#allocation22 + $0xc50] sm:$0xff]
    %v3979 = vld [vmem:[#allocation22 + $0xc58] sm:$0xf]
    %v3980 = vld [vmem:[#allocation22 + $0xc5c] sm:$0xff]
    %v3981 = vld [vmem:[#allocation22 + $0xc64] sm:$0xff]
    %v3982 = vld [vmem:[#allocation22 + $0xc6c] sm:$0xff]
    %v3983 = vld [vmem:[#allocation22 + $0xc74] sm:$0xf]
    %v3984 = vld [vmem:[#allocation22 + $0xc78] sm:$0xff]
    %v3985 = vld [vmem:[#allocation22 + $0xc80] sm:$0xff]
    %v3986 = vld [vmem:[#allocation22 + $0xc88] sm:$0xff]
    %v3987 = vld [vmem:[#allocation22 + $0xc90] sm:$0xf]
    %v3988 = vld [vmem:[#allocation22 + $0xc94] sm:$0xff]
    %v3989 = vld [vmem:[#allocation22 + $0xc9c] sm:$0xff]
    %v3990 = vld [vmem:[#allocation22 + $0xca4] sm:$0xff]
    %v3991 = vld [vmem:[#allocation22 + $0xcac] sm:$0xf]
    %v3992 = vld [vmem:[#allocation22 + $0xcb0] sm:$0xff]
    %v3993 = vld [vmem:[#allocation22 + $0xcb8] sm:$0xff]
    %v3994 = vld [vmem:[#allocation22 + $0xcc0] sm:$0xff]
    %v3995 = vld [vmem:[#allocation22 + $0xcc8] sm:$0xf]
    %v3996 = vld [vmem:[#allocation22 + $0xccc] sm:$0xff]
    %v3997 = vld [vmem:[#allocation22 + $0xcd4] sm:$0xff]
    %v3998 = vld [vmem:[#allocation22 + $0xcdc] sm:$0xff]
    %v3999 = vld [vmem:[#allocation22 + $0xce4] sm:$0xf]
    %v4000 = vld [vmem:[#allocation22 + $0xce8] sm:$0xff]
    %v4001 = vld [vmem:[#allocation22 + $0xcf0] sm:$0xff]
    %v4002 = vld [vmem:[#allocation22 + $0xcf8] sm:$0xff]
    %v4003 = vld [vmem:[#allocation22 + $0xd00] sm:$0xf]
    %v4004 = vld [vmem:[#allocation22 + $0xd04] sm:$0xff]
    %v4005 = vld [vmem:[#allocation22 + $0xd0c] sm:$0xff]
    %v4006 = vld [vmem:[#allocation22 + $0xd14] sm:$0xff]
    %v4007 = vld [vmem:[#allocation22 + $0xd1c] sm:$0xf]
    %v4008 = vld [vmem:[#allocation22 + $0xd20] sm:$0xff]
    %v4009 = vld [vmem:[#allocation22 + $0xd28] sm:$0xff]
    %v4010 = vld [vmem:[#allocation22 + $0xd30] sm:$0xff]
    %v4011 = vld [vmem:[#allocation22 + $0xd38] sm:$0xf]
    %v4012 = vld [vmem:[#allocation22 + $0xd3c] sm:$0xff]
    %v4013 = vld [vmem:[#allocation22 + $0xd44] sm:$0xff]
    %v4014 = vld [vmem:[#allocation22 + $0xd4c] sm:$0xff]
    %v4015 = vld [vmem:[#allocation22 + $0xd54] sm:$0xf]
    %v4016 = vld [vmem:[#allocation22 + $0xd58] sm:$0xff]
    %v4017 = vld [vmem:[#allocation22 + $0xd60] sm:$0xff]
    %v4018 = vld [vmem:[#allocation22 + $0xd68] sm:$0xff]
    %v4019 = vld [vmem:[#allocation22 + $0xd70] sm:$0xf]
    %v4020 = vld [vmem:[#allocation22 + $0xd74] sm:$0xff]
    %v4021 = vld [vmem:[#allocation22 + $0xd7c] sm:$0xff]
    %v4022 = vld [vmem:[#allocation22 + $0xd84] sm:$0xff]
    %v4023 = vld [vmem:[#allocation22 + $0xd8c] sm:$0xf]
    %v4024 = vld [vmem:[#allocation22 + $0xd90] sm:$0xff]
    %v4025 = vld [vmem:[#allocation22 + $0xd98] sm:$0xff]
    %v4026 = vld [vmem:[#allocation22 + $0xda0] sm:$0xff]
    %v4027 = vld [vmem:[#allocation22 + $0xda8] sm:$0xf]
    %v4028 = vld [vmem:[#allocation22 + $0xdac] sm:$0xff]
    %v4029 = vld [vmem:[#allocation22 + $0xdb4] sm:$0xff]
    %v4030 = vld [vmem:[#allocation22 + $0xdbc] sm:$0xff]
    %v4031 = vld [vmem:[#allocation22 + $0xdc4] sm:$0xf]
    %v4032 = vld [vmem:[#allocation22 + $0xdc8] sm:$0xff]
    %v4033 = vld [vmem:[#allocation22 + $0xdd0] sm:$0xff]
    %v4034 = vld [vmem:[#allocation22 + $0xdd8] sm:$0xff]
    %v4035 = vld [vmem:[#allocation22 + $0xde0] sm:$0xf]
    %v4036 = vld [vmem:[#allocation22 + $0xde4] sm:$0xff]
    %v4037 = vld [vmem:[#allocation22 + $0xdec] sm:$0xff]
    %v4038 = vld [vmem:[#allocation22 + $0xdf4] sm:$0xff]
    %v4039 = vld [vmem:[#allocation22 + $0xdfc] sm:$0xf]
    %v4040 = vld [vmem:[#allocation23] sm:$0xff]
    %v4042 = vperm.slane %v4040, 0
    %v4043 = vperm.slane %v4040, 1
    %v4044 = vperm.slane %v4040, 2
    %v4045 = vperm.slane %v4040, 3
    %v4046 = vperm.slane %v4040, 4
    %v4047 = vperm.slane %v4040, 5
    %v4048 = vperm.slane %v4040, 6
    %v4568 = vunpack.c.l.b16 %v3528
    %v4569 = vunpack.c.h.b16 %v3528
    %v4570 = vunpack.c.l.b16 %v3529
    %v4571 = vunpack.c.h.b16 %v3529
    %v4572 = vunpack.c.l.b16 %v3530
    %v4573 = vunpack.c.h.b16 %v3530
    %v4574 = vunpack.c.l.b16 %v3531
    %v4575 = vunpack.c.l.b16 %v3532
    %v4576 = vunpack.c.h.b16 %v3532
    %v4577 = vunpack.c.l.b16 %v3533
    %v4578 = vunpack.c.h.b16 %v3533
    %v4579 = vunpack.c.l.b16 %v3534
    %v4580 = vunpack.c.h.b16 %v3534
    %v4581 = vunpack.c.l.b16 %v3535
    %v4582 = vunpack.c.l.b16 %v3536
    %v4583 = vunpack.c.h.b16 %v3536
    %v4584 = vunpack.c.l.b16 %v3537
    %v4585 = vunpack.c.h.b16 %v3537
    %v4586 = vunpack.c.l.b16 %v3538
    %v4587 = vunpack.c.h.b16 %v3538
    %v4588 = vunpack.c.l.b16 %v3539
    %v4589 = vunpack.c.l.b16 %v3540
    %v4590 = vunpack.c.h.b16 %v3540
    %v4591 = vunpack.c.l.b16 %v3541
    %v4592 = vunpack.c.h.b16 %v3541
    %v4593 = vunpack.c.l.b16 %v3542
    %v4594 = vunpack.c.h.b16 %v3542
    %v4595 = vunpack.c.l.b16 %v3543
    %v4596 = vunpack.c.l.b16 %v3544
    %v4597 = vunpack.c.h.b16 %v3544
    %v4598 = vunpack.c.l.b16 %v3545
    %v4599 = vunpack.c.h.b16 %v3545
    %v4600 = vunpack.c.l.b16 %v3546
    %v4601 = vunpack.c.h.b16 %v3546
    %v4602 = vunpack.c.l.b16 %v3547
    %v4603 = vunpack.c.l.b16 %v3548
    %v4604 = vunpack.c.h.b16 %v3548
    %v4605 = vunpack.c.l.b16 %v3549
    %v4606 = vunpack.c.h.b16 %v3549
    %v4607 = vunpack.c.l.b16 %v3550
    %v4608 = vunpack.c.h.b16 %v3550
    %v4609 = vunpack.c.l.b16 %v3551
    %v4610 = vunpack.c.l.b16 %v3552
    %v4611 = vunpack.c.h.b16 %v3552
    %v4612 = vunpack.c.l.b16 %v3553
    %v4613 = vunpack.c.h.b16 %v3553
    %v4614 = vunpack.c.l.b16 %v3554
    %v4615 = vunpack.c.h.b16 %v3554
    %v4616 = vunpack.c.l.b16 %v3555
    %v4617 = vunpack.c.l.b16 %v3556
    %v4618 = vunpack.c.h.b16 %v3556
    %v4619 = vunpack.c.l.b16 %v3557
    %v4620 = vunpack.c.h.b16 %v3557
    %v4621 = vunpack.c.l.b16 %v3558
    %v4622 = vunpack.c.h.b16 %v3558
    %v4623 = vunpack.c.l.b16 %v3559
    %v4624 = vunpack.c.l.b16 %v3560
    %v4625 = vunpack.c.h.b16 %v3560
    %v4626 = vunpack.c.l.b16 %v3561
    %v4627 = vunpack.c.h.b16 %v3561
    %v4628 = vunpack.c.l.b16 %v3562
    %v4629 = vunpack.c.h.b16 %v3562
    %v4630 = vunpack.c.l.b16 %v3563
    %v4631 = vunpack.c.l.b16 %v3564
    %v4632 = vunpack.c.h.b16 %v3564
    %v4633 = vunpack.c.l.b16 %v3565
    %v4634 = vunpack.c.h.b16 %v3565
    %v4635 = vunpack.c.l.b16 %v3566
    %v4636 = vunpack.c.h.b16 %v3566
    %v4637 = vunpack.c.l.b16 %v3567
    %v4638 = vunpack.c.l.b16 %v3568
    %v4639 = vunpack.c.h.b16 %v3568
    %v4640 = vunpack.c.l.b16 %v3569
    %v4641 = vunpack.c.h.b16 %v3569
    %v4642 = vunpack.c.l.b16 %v3570
    %v4643 = vunpack.c.h.b16 %v3570
    %v4644 = vunpack.c.l.b16 %v3571
    %v4645 = vunpack.c.l.b16 %v3572
    %v4646 = vunpack.c.h.b16 %v3572
    %v4647 = vunpack.c.l.b16 %v3573
    %v4648 = vunpack.c.h.b16 %v3573
    %v4649 = vunpack.c.l.b16 %v3574
    %v4650 = vunpack.c.h.b16 %v3574
    %v4651 = vunpack.c.l.b16 %v3575
    %v4652 = vunpack.c.l.b16 %v3576
    %v4653 = vunpack.c.h.b16 %v3576
    %v4654 = vunpack.c.l.b16 %v3577
    %v4655 = vunpack.c.h.b16 %v3577
    %v4656 = vunpack.c.l.b16 %v3578
    %v4657 = vunpack.c.h.b16 %v3578
    %v4658 = vunpack.c.l.b16 %v3579
    %v4659 = vunpack.c.l.b16 %v3580
    %v4660 = vunpack.c.h.b16 %v3580
    %v4661 = vunpack.c.l.b16 %v3581
    %v4662 = vunpack.c.h.b16 %v3581
    %v4663 = vunpack.c.l.b16 %v3582
    %v4664 = vunpack.c.h.b16 %v3582
    %v4665 = vunpack.c.l.b16 %v3583
    %v4666 = vunpack.c.l.b16 %v3584
    %v4667 = vunpack.c.h.b16 %v3584
    %v4668 = vunpack.c.l.b16 %v3585
    %v4669 = vunpack.c.h.b16 %v3585
    %v4670 = vunpack.c.l.b16 %v3586
    %v4671 = vunpack.c.h.b16 %v3586
    %v4672 = vunpack.c.l.b16 %v3587
    %v4673 = vunpack.c.l.b16 %v3588
    %v4674 = vunpack.c.h.b16 %v3588
    %v4675 = vunpack.c.l.b16 %v3589
    %v4676 = vunpack.c.h.b16 %v3589
    %v4677 = vunpack.c.l.b16 %v3590
    %v4678 = vunpack.c.h.b16 %v3590
    %v4679 = vunpack.c.l.b16 %v3591
    %v4680 = vunpack.c.l.b16 %v3592
    %v4681 = vunpack.c.h.b16 %v3592
    %v4682 = vunpack.c.l.b16 %v3593
    %v4683 = vunpack.c.h.b16 %v3593
    %v4684 = vunpack.c.l.b16 %v3594
    %v4685 = vunpack.c.h.b16 %v3594
    %v4686 = vunpack.c.l.b16 %v3595
    %v4687 = vunpack.c.l.b16 %v3596
    %v4688 = vunpack.c.h.b16 %v3596
    %v4689 = vunpack.c.l.b16 %v3597
    %v4690 = vunpack.c.h.b16 %v3597
    %v4691 = vunpack.c.l.b16 %v3598
    %v4692 = vunpack.c.h.b16 %v3598
    %v4693 = vunpack.c.l.b16 %v3599
    %v4694 = vunpack.c.l.b16 %v3600
    %v4695 = vunpack.c.h.b16 %v3600
    %v4696 = vunpack.c.l.b16 %v3601
    %v4697 = vunpack.c.h.b16 %v3601
    %v4698 = vunpack.c.l.b16 %v3602
    %v4699 = vunpack.c.h.b16 %v3602
    %v4700 = vunpack.c.l.b16 %v3603
    %v4701 = vunpack.c.l.b16 %v3604
    %v4702 = vunpack.c.h.b16 %v3604
    %v4703 = vunpack.c.l.b16 %v3605
    %v4704 = vunpack.c.h.b16 %v3605
    %v4705 = vunpack.c.l.b16 %v3606
    %v4706 = vunpack.c.h.b16 %v3606
    %v4707 = vunpack.c.l.b16 %v3607
    %v4708 = vunpack.c.l.b16 %v3608
    %v4709 = vunpack.c.h.b16 %v3608
    %v4710 = vunpack.c.l.b16 %v3609
    %v4711 = vunpack.c.h.b16 %v3609
    %v4712 = vunpack.c.l.b16 %v3610
    %v4713 = vunpack.c.h.b16 %v3610
    %v4714 = vunpack.c.l.b16 %v3611
    %v4715 = vunpack.c.l.b16 %v3612
    %v4716 = vunpack.c.h.b16 %v3612
    %v4717 = vunpack.c.l.b16 %v3613
    %v4718 = vunpack.c.h.b16 %v3613
    %v4719 = vunpack.c.l.b16 %v3614
    %v4720 = vunpack.c.h.b16 %v3614
    %v4721 = vunpack.c.l.b16 %v3615
    %v4722 = vunpack.c.l.b16 %v3616
    %v4723 = vunpack.c.h.b16 %v3616
    %v4724 = vunpack.c.l.b16 %v3617
    %v4725 = vunpack.c.h.b16 %v3617
    %v4726 = vunpack.c.l.b16 %v3618
    %v4727 = vunpack.c.h.b16 %v3618
    %v4728 = vunpack.c.l.b16 %v3619
    %v4729 = vunpack.c.l.b16 %v3620
    %v4730 = vunpack.c.h.b16 %v3620
    %v4731 = vunpack.c.l.b16 %v3621
    %v4732 = vunpack.c.h.b16 %v3621
    %v4733 = vunpack.c.l.b16 %v3622
    %v4734 = vunpack.c.h.b16 %v3622
    %v4735 = vunpack.c.l.b16 %v3623
    %v4736 = vunpack.c.l.b16 %v3624
    %v4737 = vunpack.c.h.b16 %v3624
    %v4738 = vunpack.c.l.b16 %v3625
    %v4739 = vunpack.c.h.b16 %v3625
    %v4740 = vunpack.c.l.b16 %v3626
    %v4741 = vunpack.c.h.b16 %v3626
    %v4742 = vunpack.c.l.b16 %v3627
    %v4743 = vunpack.c.l.b16 %v3628
    %v4744 = vunpack.c.h.b16 %v3628
    %v4745 = vunpack.c.l.b16 %v3629
    %v4746 = vunpack.c.h.b16 %v3629
    %v4747 = vunpack.c.l.b16 %v3630
    %v4748 = vunpack.c.h.b16 %v3630
    %v4749 = vunpack.c.l.b16 %v3631
    %v4750 = vunpack.c.l.b16 %v3632
    %v4751 = vunpack.c.h.b16 %v3632
    %v4752 = vunpack.c.l.b16 %v3633
    %v4753 = vunpack.c.h.b16 %v3633
    %v4754 = vunpack.c.l.b16 %v3634
    %v4755 = vunpack.c.h.b16 %v3634
    %v4756 = vunpack.c.l.b16 %v3635
    %v4757 = vunpack.c.l.b16 %v3636
    %v4758 = vunpack.c.h.b16 %v3636
    %v4759 = vunpack.c.l.b16 %v3637
    %v4760 = vunpack.c.h.b16 %v3637
    %v4761 = vunpack.c.l.b16 %v3638
    %v4762 = vunpack.c.h.b16 %v3638
    %v4763 = vunpack.c.l.b16 %v3639
    %v4764 = vunpack.c.l.b16 %v3640
    %v4765 = vunpack.c.h.b16 %v3640
    %v4766 = vunpack.c.l.b16 %v3641
    %v4767 = vunpack.c.h.b16 %v3641
    %v4768 = vunpack.c.l.b16 %v3642
    %v4769 = vunpack.c.h.b16 %v3642
    %v4770 = vunpack.c.l.b16 %v3643
    %v4771 = vunpack.c.l.b16 %v3644
    %v4772 = vunpack.c.h.b16 %v3644
    %v4773 = vunpack.c.l.b16 %v3645
    %v4774 = vunpack.c.h.b16 %v3645
    %v4775 = vunpack.c.l.b16 %v3646
    %v4776 = vunpack.c.h.b16 %v3646
    %v4777 = vunpack.c.l.b16 %v3647
    %v4778 = vunpack.c.l.b16 %v3648
    %v4779 = vunpack.c.h.b16 %v3648
    %v4780 = vunpack.c.l.b16 %v3649
    %v4781 = vunpack.c.h.b16 %v3649
    %v4782 = vunpack.c.l.b16 %v3650
    %v4783 = vunpack.c.h.b16 %v3650
    %v4784 = vunpack.c.l.b16 %v3651
    %v4785 = vunpack.c.l.b16 %v3652
    %v4786 = vunpack.c.h.b16 %v3652
    %v4787 = vunpack.c.l.b16 %v3653
    %v4788 = vunpack.c.h.b16 %v3653
    %v4789 = vunpack.c.l.b16 %v3654
    %v4790 = vunpack.c.h.b16 %v3654
    %v4791 = vunpack.c.l.b16 %v3655
    %v4792 = vunpack.c.l.b16 %v3656
    %v4793 = vunpack.c.h.b16 %v3656
    %v4794 = vunpack.c.l.b16 %v3657
    %v4795 = vunpack.c.h.b16 %v3657
    %v4796 = vunpack.c.l.b16 %v3658
    %v4797 = vunpack.c.h.b16 %v3658
    %v4798 = vunpack.c.l.b16 %v3659
    %v4799 = vunpack.c.l.b16 %v3660
    %v4800 = vunpack.c.h.b16 %v3660
    %v4801 = vunpack.c.l.b16 %v3661
    %v4802 = vunpack.c.h.b16 %v3661
    %v4803 = vunpack.c.l.b16 %v3662
    %v4804 = vunpack.c.h.b16 %v3662
    %v4805 = vunpack.c.l.b16 %v3663
    %v4806 = vunpack.c.l.b16 %v3664
    %v4807 = vunpack.c.h.b16 %v3664
    %v4808 = vunpack.c.l.b16 %v3665
    %v4809 = vunpack.c.h.b16 %v3665
    %v4810 = vunpack.c.l.b16 %v3666
    %v4811 = vunpack.c.h.b16 %v3666
    %v4812 = vunpack.c.l.b16 %v3667
    %v4813 = vunpack.c.l.b16 %v3668
    %v4814 = vunpack.c.h.b16 %v3668
    %v4815 = vunpack.c.l.b16 %v3669
    %v4816 = vunpack.c.h.b16 %v3669
    %v4817 = vunpack.c.l.b16 %v3670
    %v4818 = vunpack.c.h.b16 %v3670
    %v4819 = vunpack.c.l.b16 %v3671
    %v4820 = vunpack.c.l.b16 %v3672
    %v4821 = vunpack.c.h.b16 %v3672
    %v4822 = vunpack.c.l.b16 %v3673
    %v4823 = vunpack.c.h.b16 %v3673
    %v4824 = vunpack.c.l.b16 %v3674
    %v4825 = vunpack.c.h.b16 %v3674
    %v4826 = vunpack.c.l.b16 %v3675
    %v4827 = vunpack.c.l.b16 %v3676
    %v4828 = vunpack.c.h.b16 %v3676
    %v4829 = vunpack.c.l.b16 %v3677
    %v4830 = vunpack.c.h.b16 %v3677
    %v4831 = vunpack.c.l.b16 %v3678
    %v4832 = vunpack.c.h.b16 %v3678
    %v4833 = vunpack.c.l.b16 %v3679
    %v4834 = vunpack.c.l.b16 %v3680
    %v4835 = vunpack.c.h.b16 %v3680
    %v4836 = vunpack.c.l.b16 %v3681
    %v4837 = vunpack.c.h.b16 %v3681
    %v4838 = vunpack.c.l.b16 %v3682
    %v4839 = vunpack.c.h.b16 %v3682
    %v4840 = vunpack.c.l.b16 %v3683
    %v4841 = vunpack.c.l.b16 %v3684
    %v4842 = vunpack.c.h.b16 %v3684
    %v4843 = vunpack.c.l.b16 %v3685
    %v4844 = vunpack.c.h.b16 %v3685
    %v4845 = vunpack.c.l.b16 %v3686
    %v4846 = vunpack.c.h.b16 %v3686
    %v4847 = vunpack.c.l.b16 %v3687
    %v4848 = vunpack.c.l.b16 %v3688
    %v4849 = vunpack.c.h.b16 %v3688
    %v4850 = vunpack.c.l.b16 %v3689
    %v4851 = vunpack.c.h.b16 %v3689
    %v4852 = vunpack.c.l.b16 %v3690
    %v4853 = vunpack.c.h.b16 %v3690
    %v4854 = vunpack.c.l.b16 %v3691
    %v4855 = vunpack.c.l.b16 %v3692
    %v4856 = vunpack.c.h.b16 %v3692
    %v4857 = vunpack.c.l.b16 %v3693
    %v4858 = vunpack.c.h.b16 %v3693
    %v4859 = vunpack.c.l.b16 %v3694
    %v4860 = vunpack.c.h.b16 %v3694
    %v4861 = vunpack.c.l.b16 %v3695
    %v4862 = vunpack.c.l.b16 %v3696
    %v4863 = vunpack.c.h.b16 %v3696
    %v4864 = vunpack.c.l.b16 %v3697
    %v4865 = vunpack.c.h.b16 %v3697
    %v4866 = vunpack.c.l.b16 %v3698
    %v4867 = vunpack.c.h.b16 %v3698
    %v4868 = vunpack.c.l.b16 %v3699
    %v4869 = vunpack.c.l.b16 %v3700
    %v4870 = vunpack.c.h.b16 %v3700
    %v4871 = vunpack.c.l.b16 %v3701
    %v4872 = vunpack.c.h.b16 %v3701
    %v4873 = vunpack.c.l.b16 %v3702
    %v4874 = vunpack.c.h.b16 %v3702
    %v4875 = vunpack.c.l.b16 %v3703
    %v4876 = vunpack.c.l.b16 %v3704
    %v4877 = vunpack.c.h.b16 %v3704
    %v4878 = vunpack.c.l.b16 %v3705
    %v4879 = vunpack.c.h.b16 %v3705
    %v4880 = vunpack.c.l.b16 %v3706
    %v4881 = vunpack.c.h.b16 %v3706
    %v4882 = vunpack.c.l.b16 %v3707
    %v4883 = vunpack.c.l.b16 %v3708
    %v4884 = vunpack.c.h.b16 %v3708
    %v4885 = vunpack.c.l.b16 %v3709
    %v4886 = vunpack.c.h.b16 %v3709
    %v4887 = vunpack.c.l.b16 %v3710
    %v4888 = vunpack.c.h.b16 %v3710
    %v4889 = vunpack.c.l.b16 %v3711
    %v4890 = vunpack.c.l.b16 %v3712
    %v4891 = vunpack.c.h.b16 %v3712
    %v4892 = vunpack.c.l.b16 %v3713
    %v4893 = vunpack.c.h.b16 %v3713
    %v4894 = vunpack.c.l.b16 %v3714
    %v4895 = vunpack.c.h.b16 %v3714
    %v4896 = vunpack.c.l.b16 %v3715
    %v4897 = vunpack.c.l.b16 %v3716
    %v4898 = vunpack.c.h.b16 %v3716
    %v4899 = vunpack.c.l.b16 %v3717
    %v4900 = vunpack.c.h.b16 %v3717
    %v4901 = vunpack.c.l.b16 %v3718
    %v4902 = vunpack.c.h.b16 %v3718
    %v4903 = vunpack.c.l.b16 %v3719
    %v4904 = vunpack.c.l.b16 %v3720
    %v4905 = vunpack.c.h.b16 %v3720
    %v4906 = vunpack.c.l.b16 %v3721
    %v4907 = vunpack.c.h.b16 %v3721
    %v4908 = vunpack.c.l.b16 %v3722
    %v4909 = vunpack.c.h.b16 %v3722
    %v4910 = vunpack.c.l.b16 %v3723
    %v4911 = vunpack.c.l.b16 %v3724
    %v4912 = vunpack.c.h.b16 %v3724
    %v4913 = vunpack.c.l.b16 %v3725
    %v4914 = vunpack.c.h.b16 %v3725
    %v4915 = vunpack.c.l.b16 %v3726
    %v4916 = vunpack.c.h.b16 %v3726
    %v4917 = vunpack.c.l.b16 %v3727
    %v4918 = vunpack.c.l.b16 %v3728
    %v4919 = vunpack.c.h.b16 %v3728
    %v4920 = vunpack.c.l.b16 %v3729
    %v4921 = vunpack.c.h.b16 %v3729
    %v4922 = vunpack.c.l.b16 %v3730
    %v4923 = vunpack.c.h.b16 %v3730
    %v4924 = vunpack.c.l.b16 %v3731
    %v4925 = vunpack.c.l.b16 %v3732
    %v4926 = vunpack.c.h.b16 %v3732
    %v4927 = vunpack.c.l.b16 %v3733
    %v4928 = vunpack.c.h.b16 %v3733
    %v4929 = vunpack.c.l.b16 %v3734
    %v4930 = vunpack.c.h.b16 %v3734
    %v4931 = vunpack.c.l.b16 %v3735
    %v4932 = vunpack.c.l.b16 %v3736
    %v4933 = vunpack.c.h.b16 %v3736
    %v4934 = vunpack.c.l.b16 %v3737
    %v4935 = vunpack.c.h.b16 %v3737
    %v4936 = vunpack.c.l.b16 %v3738
    %v4937 = vunpack.c.h.b16 %v3738
    %v4938 = vunpack.c.l.b16 %v3739
    %v4939 = vunpack.c.l.b16 %v3740
    %v4940 = vunpack.c.h.b16 %v3740
    %v4941 = vunpack.c.l.b16 %v3741
    %v4942 = vunpack.c.h.b16 %v3741
    %v4943 = vunpack.c.l.b16 %v3742
    %v4944 = vunpack.c.h.b16 %v3742
    %v4945 = vunpack.c.l.b16 %v3743
    %v4946 = vunpack.c.l.b16 %v3744
    %v4947 = vunpack.c.h.b16 %v3744
    %v4948 = vunpack.c.l.b16 %v3745
    %v4949 = vunpack.c.h.b16 %v3745
    %v4950 = vunpack.c.l.b16 %v3746
    %v4951 = vunpack.c.h.b16 %v3746
    %v4952 = vunpack.c.l.b16 %v3747
    %v4953 = vunpack.c.l.b16 %v3748
    %v4954 = vunpack.c.h.b16 %v3748
    %v4955 = vunpack.c.l.b16 %v3749
    %v4956 = vunpack.c.h.b16 %v3749
    %v4957 = vunpack.c.l.b16 %v3750
    %v4958 = vunpack.c.h.b16 %v3750
    %v4959 = vunpack.c.l.b16 %v3751
    %v4960 = vunpack.c.l.b16 %v3752
    %v4961 = vunpack.c.h.b16 %v3752
    %v4962 = vunpack.c.l.b16 %v3753
    %v4963 = vunpack.c.h.b16 %v3753
    %v4964 = vunpack.c.l.b16 %v3754
    %v4965 = vunpack.c.h.b16 %v3754
    %v4966 = vunpack.c.l.b16 %v3755
    %v4967 = vunpack.c.l.b16 %v3756
    %v4968 = vunpack.c.h.b16 %v3756
    %v4969 = vunpack.c.l.b16 %v3757
    %v4970 = vunpack.c.h.b16 %v3757
    %v4971 = vunpack.c.l.b16 %v3758
    %v4972 = vunpack.c.h.b16 %v3758
    %v4973 = vunpack.c.l.b16 %v3759
    %v4974 = vunpack.c.l.b16 %v3760
    %v4975 = vunpack.c.h.b16 %v3760
    %v4976 = vunpack.c.l.b16 %v3761
    %v4977 = vunpack.c.h.b16 %v3761
    %v4978 = vunpack.c.l.b16 %v3762
    %v4979 = vunpack.c.h.b16 %v3762
    %v4980 = vunpack.c.l.b16 %v3763
    %v4981 = vunpack.c.l.b16 %v3764
    %v4982 = vunpack.c.h.b16 %v3764
    %v4983 = vunpack.c.l.b16 %v3765
    %v4984 = vunpack.c.h.b16 %v3765
    %v4985 = vunpack.c.l.b16 %v3766
    %v4986 = vunpack.c.h.b16 %v3766
    %v4987 = vunpack.c.l.b16 %v3767
    %v4988 = vunpack.c.l.b16 %v3768
    %v4989 = vunpack.c.h.b16 %v3768
    %v4990 = vunpack.c.l.b16 %v3769
    %v4991 = vunpack.c.h.b16 %v3769
    %v4992 = vunpack.c.l.b16 %v3770
    %v4993 = vunpack.c.h.b16 %v3770
    %v4994 = vunpack.c.l.b16 %v3771
    %v4995 = vunpack.c.l.b16 %v3772
    %v4996 = vunpack.c.h.b16 %v3772
    %v4997 = vunpack.c.l.b16 %v3773
    %v4998 = vunpack.c.h.b16 %v3773
    %v4999 = vunpack.c.l.b16 %v3774
    %v5000 = vunpack.c.h.b16 %v3774
    %v5001 = vunpack.c.l.b16 %v3775
    %v5002 = vunpack.c.l.b16 %v3776
    %v5003 = vunpack.c.h.b16 %v3776
    %v5004 = vunpack.c.l.b16 %v3777
    %v5005 = vunpack.c.h.b16 %v3777
    %v5006 = vunpack.c.l.b16 %v3778
    %v5007 = vunpack.c.h.b16 %v3778
    %v5008 = vunpack.c.l.b16 %v3779
    %v5009 = vunpack.c.l.b16 %v3780
    %v5010 = vunpack.c.h.b16 %v3780
    %v5011 = vunpack.c.l.b16 %v3781
    %v5012 = vunpack.c.h.b16 %v3781
    %v5013 = vunpack.c.l.b16 %v3782
    %v5014 = vunpack.c.h.b16 %v3782
    %v5015 = vunpack.c.l.b16 %v3783
    %v5016 = vunpack.c.l.b16 %v3784
    %v5017 = vunpack.c.h.b16 %v3784
    %v5018 = vunpack.c.l.b16 %v3785
    %v5019 = vunpack.c.h.b16 %v3785
    %v5020 = vunpack.c.l.b16 %v3786
    %v5021 = vunpack.c.h.b16 %v3786
    %v5022 = vunpack.c.l.b16 %v3787
    %v5023 = vunpack.c.l.b16 %v3788
    %v5024 = vunpack.c.h.b16 %v3788
    %v5025 = vunpack.c.l.b16 %v3789
    %v5026 = vunpack.c.h.b16 %v3789
    %v5027 = vunpack.c.l.b16 %v3790
    %v5028 = vunpack.c.h.b16 %v3790
    %v5029 = vunpack.c.l.b16 %v3791
    %v5030 = vunpack.c.l.b16 %v3792
    %v5031 = vunpack.c.h.b16 %v3792
    %v5032 = vunpack.c.l.b16 %v3793
    %v5033 = vunpack.c.h.b16 %v3793
    %v5034 = vunpack.c.l.b16 %v3794
    %v5035 = vunpack.c.h.b16 %v3794
    %v5036 = vunpack.c.l.b16 %v3795
    %v5037 = vunpack.c.l.b16 %v3796
    %v5038 = vunpack.c.h.b16 %v3796
    %v5039 = vunpack.c.l.b16 %v3797
    %v5040 = vunpack.c.h.b16 %v3797
    %v5041 = vunpack.c.l.b16 %v3798
    %v5042 = vunpack.c.h.b16 %v3798
    %v5043 = vunpack.c.l.b16 %v3799
    %v5044 = vunpack.c.l.b16 %v3800
    %v5045 = vunpack.c.h.b16 %v3800
    %v5046 = vunpack.c.l.b16 %v3801
    %v5047 = vunpack.c.h.b16 %v3801
    %v5048 = vunpack.c.l.b16 %v3802
    %v5049 = vunpack.c.h.b16 %v3802
    %v5050 = vunpack.c.l.b16 %v3803
    %v5051 = vunpack.c.l.b16 %v3804
    %v5052 = vunpack.c.h.b16 %v3804
    %v5053 = vunpack.c.l.b16 %v3805
    %v5054 = vunpack.c.h.b16 %v3805
    %v5055 = vunpack.c.l.b16 %v3806
    %v5056 = vunpack.c.h.b16 %v3806
    %v5057 = vunpack.c.l.b16 %v3807
    %v5058 = vunpack.c.l.b16 %v3808
    %v5059 = vunpack.c.h.b16 %v3808
    %v5060 = vunpack.c.l.b16 %v3809
    %v5061 = vunpack.c.h.b16 %v3809
    %v5062 = vunpack.c.l.b16 %v3810
    %v5063 = vunpack.c.h.b16 %v3810
    %v5064 = vunpack.c.l.b16 %v3811
    %v5065 = vunpack.c.l.b16 %v3812
    %v5066 = vunpack.c.h.b16 %v3812
    %v5067 = vunpack.c.l.b16 %v3813
    %v5068 = vunpack.c.h.b16 %v3813
    %v5069 = vunpack.c.l.b16 %v3814
    %v5070 = vunpack.c.h.b16 %v3814
    %v5071 = vunpack.c.l.b16 %v3815
    %v5072 = vunpack.c.l.b16 %v3816
    %v5073 = vunpack.c.h.b16 %v3816
    %v5074 = vunpack.c.l.b16 %v3817
    %v5075 = vunpack.c.h.b16 %v3817
    %v5076 = vunpack.c.l.b16 %v3818
    %v5077 = vunpack.c.h.b16 %v3818
    %v5078 = vunpack.c.l.b16 %v3819
    %v5079 = vunpack.c.l.b16 %v3820
    %v5080 = vunpack.c.h.b16 %v3820
    %v5081 = vunpack.c.l.b16 %v3821
    %v5082 = vunpack.c.h.b16 %v3821
    %v5083 = vunpack.c.l.b16 %v3822
    %v5084 = vunpack.c.h.b16 %v3822
    %v5085 = vunpack.c.l.b16 %v3823
    %v5086 = vunpack.c.l.b16 %v3824
    %v5087 = vunpack.c.h.b16 %v3824
    %v5088 = vunpack.c.l.b16 %v3825
    %v5089 = vunpack.c.h.b16 %v3825
    %v5090 = vunpack.c.l.b16 %v3826
    %v5091 = vunpack.c.h.b16 %v3826
    %v5092 = vunpack.c.l.b16 %v3827
    %v5093 = vunpack.c.l.b16 %v3828
    %v5094 = vunpack.c.h.b16 %v3828
    %v5095 = vunpack.c.l.b16 %v3829
    %v5096 = vunpack.c.h.b16 %v3829
    %v5097 = vunpack.c.l.b16 %v3830
    %v5098 = vunpack.c.h.b16 %v3830
    %v5099 = vunpack.c.l.b16 %v3831
    %v5100 = vunpack.c.l.b16 %v3832
    %v5101 = vunpack.c.h.b16 %v3832
    %v5102 = vunpack.c.l.b16 %v3833
    %v5103 = vunpack.c.h.b16 %v3833
    %v5104 = vunpack.c.l.b16 %v3834
    %v5105 = vunpack.c.h.b16 %v3834
    %v5106 = vunpack.c.l.b16 %v3835
    %v5107 = vunpack.c.l.b16 %v3836
    %v5108 = vunpack.c.h.b16 %v3836
    %v5109 = vunpack.c.l.b16 %v3837
    %v5110 = vunpack.c.h.b16 %v3837
    %v5111 = vunpack.c.l.b16 %v3838
    %v5112 = vunpack.c.h.b16 %v3838
    %v5113 = vunpack.c.l.b16 %v3839
    %v5114 = vunpack.c.l.b16 %v3840
    %v5115 = vunpack.c.h.b16 %v3840
    %v5116 = vunpack.c.l.b16 %v3841
    %v5117 = vunpack.c.h.b16 %v3841
    %v5118 = vunpack.c.l.b16 %v3842
    %v5119 = vunpack.c.h.b16 %v3842
    %v5120 = vunpack.c.l.b16 %v3843
    %v5121 = vunpack.c.l.b16 %v3844
    %v5122 = vunpack.c.h.b16 %v3844
    %v5123 = vunpack.c.l.b16 %v3845
    %v5124 = vunpack.c.h.b16 %v3845
    %v5125 = vunpack.c.l.b16 %v3846
    %v5126 = vunpack.c.h.b16 %v3846
    %v5127 = vunpack.c.l.b16 %v3847
    %v5128 = vunpack.c.l.b16 %v3848
    %v5129 = vunpack.c.h.b16 %v3848
    %v5130 = vunpack.c.l.b16 %v3849
    %v5131 = vunpack.c.h.b16 %v3849
    %v5132 = vunpack.c.l.b16 %v3850
    %v5133 = vunpack.c.h.b16 %v3850
    %v5134 = vunpack.c.l.b16 %v3851
    %v5135 = vunpack.c.l.b16 %v3852
    %v5136 = vunpack.c.h.b16 %v3852
    %v5137 = vunpack.c.l.b16 %v3853
    %v5138 = vunpack.c.h.b16 %v3853
    %v5139 = vunpack.c.l.b16 %v3854
    %v5140 = vunpack.c.h.b16 %v3854
    %v5141 = vunpack.c.l.b16 %v3855
    %v5142 = vunpack.c.l.b16 %v3856
    %v5143 = vunpack.c.h.b16 %v3856
    %v5144 = vunpack.c.l.b16 %v3857
    %v5145 = vunpack.c.h.b16 %v3857
    %v5146 = vunpack.c.l.b16 %v3858
    %v5147 = vunpack.c.h.b16 %v3858
    %v5148 = vunpack.c.l.b16 %v3859
    %v5149 = vunpack.c.l.b16 %v3860
    %v5150 = vunpack.c.h.b16 %v3860
    %v5151 = vunpack.c.l.b16 %v3861
    %v5152 = vunpack.c.h.b16 %v3861
    %v5153 = vunpack.c.l.b16 %v3862
    %v5154 = vunpack.c.h.b16 %v3862
    %v5155 = vunpack.c.l.b16 %v3863
    %v5156 = vunpack.c.l.b16 %v3864
    %v5157 = vunpack.c.h.b16 %v3864
    %v5158 = vunpack.c.l.b16 %v3865
    %v5159 = vunpack.c.h.b16 %v3865
    %v5160 = vunpack.c.l.b16 %v3866
    %v5161 = vunpack.c.h.b16 %v3866
    %v5162 = vunpack.c.l.b16 %v3867
    %v5163 = vunpack.c.l.b16 %v3868
    %v5164 = vunpack.c.h.b16 %v3868
    %v5165 = vunpack.c.l.b16 %v3869
    %v5166 = vunpack.c.h.b16 %v3869
    %v5167 = vunpack.c.l.b16 %v3870
    %v5168 = vunpack.c.h.b16 %v3870
    %v5169 = vunpack.c.l.b16 %v3871
    %v5170 = vunpack.c.l.b16 %v3872
    %v5171 = vunpack.c.h.b16 %v3872
    %v5172 = vunpack.c.l.b16 %v3873
    %v5173 = vunpack.c.h.b16 %v3873
    %v5174 = vunpack.c.l.b16 %v3874
    %v5175 = vunpack.c.h.b16 %v3874
    %v5176 = vunpack.c.l.b16 %v3875
    %v5177 = vunpack.c.l.b16 %v3876
    %v5178 = vunpack.c.h.b16 %v3876
    %v5179 = vunpack.c.l.b16 %v3877
    %v5180 = vunpack.c.h.b16 %v3877
    %v5181 = vunpack.c.l.b16 %v3878
    %v5182 = vunpack.c.h.b16 %v3878
    %v5183 = vunpack.c.l.b16 %v3879
    %v5184 = vunpack.c.l.b16 %v3880
    %v5185 = vunpack.c.h.b16 %v3880
    %v5186 = vunpack.c.l.b16 %v3881
    %v5187 = vunpack.c.h.b16 %v3881
    %v5188 = vunpack.c.l.b16 %v3882
    %v5189 = vunpack.c.h.b16 %v3882
    %v5190 = vunpack.c.l.b16 %v3883
    %v5191 = vunpack.c.l.b16 %v3884
    %v5192 = vunpack.c.h.b16 %v3884
    %v5193 = vunpack.c.l.b16 %v3885
    %v5194 = vunpack.c.h.b16 %v3885
    %v5195 = vunpack.c.l.b16 %v3886
    %v5196 = vunpack.c.h.b16 %v3886
    %v5197 = vunpack.c.l.b16 %v3887
    %v5198 = vunpack.c.l.b16 %v3888
    %v5199 = vunpack.c.h.b16 %v3888
    %v5200 = vunpack.c.l.b16 %v3889
    %v5201 = vunpack.c.h.b16 %v3889
    %v5202 = vunpack.c.l.b16 %v3890
    %v5203 = vunpack.c.h.b16 %v3890
    %v5204 = vunpack.c.l.b16 %v3891
    %v5205 = vunpack.c.l.b16 %v3892
    %v5206 = vunpack.c.h.b16 %v3892
    %v5207 = vunpack.c.l.b16 %v3893
    %v5208 = vunpack.c.h.b16 %v3893
    %v5209 = vunpack.c.l.b16 %v3894
    %v5210 = vunpack.c.h.b16 %v3894
    %v5211 = vunpack.c.l.b16 %v3895
    %v5212 = vunpack.c.l.b16 %v3896
    %v5213 = vunpack.c.h.b16 %v3896
    %v5214 = vunpack.c.l.b16 %v3897
    %v5215 = vunpack.c.h.b16 %v3897
    %v5216 = vunpack.c.l.b16 %v3898
    %v5217 = vunpack.c.h.b16 %v3898
    %v5218 = vunpack.c.l.b16 %v3899
    %v5219 = vunpack.c.l.b16 %v3900
    %v5220 = vunpack.c.h.b16 %v3900
    %v5221 = vunpack.c.l.b16 %v3901
    %v5222 = vunpack.c.h.b16 %v3901
    %v5223 = vunpack.c.l.b16 %v3902
    %v5224 = vunpack.c.h.b16 %v3902
    %v5225 = vunpack.c.l.b16 %v3903
    %v5226 = vunpack.c.l.b16 %v3904
    %v5227 = vunpack.c.h.b16 %v3904
    %v5228 = vunpack.c.l.b16 %v3905
    %v5229 = vunpack.c.h.b16 %v3905
    %v5230 = vunpack.c.l.b16 %v3906
    %v5231 = vunpack.c.h.b16 %v3906
    %v5232 = vunpack.c.l.b16 %v3907
    %v5233 = vunpack.c.l.b16 %v3908
    %v5234 = vunpack.c.h.b16 %v3908
    %v5235 = vunpack.c.l.b16 %v3909
    %v5236 = vunpack.c.h.b16 %v3909
    %v5237 = vunpack.c.l.b16 %v3910
    %v5238 = vunpack.c.h.b16 %v3910
    %v5239 = vunpack.c.l.b16 %v3911
    %v5240 = vunpack.c.l.b16 %v3912
    %v5241 = vunpack.c.h.b16 %v3912
    %v5242 = vunpack.c.l.b16 %v3913
    %v5243 = vunpack.c.h.b16 %v3913
    %v5244 = vunpack.c.l.b16 %v3914
    %v5245 = vunpack.c.h.b16 %v3914
    %v5246 = vunpack.c.l.b16 %v3915
    %v5247 = vunpack.c.l.b16 %v3916
    %v5248 = vunpack.c.h.b16 %v3916
    %v5249 = vunpack.c.l.b16 %v3917
    %v5250 = vunpack.c.h.b16 %v3917
    %v5251 = vunpack.c.l.b16 %v3918
    %v5252 = vunpack.c.h.b16 %v3918
    %v5253 = vunpack.c.l.b16 %v3919
    %v5254 = vunpack.c.l.b16 %v3920
    %v5255 = vunpack.c.h.b16 %v3920
    %v5256 = vunpack.c.l.b16 %v3921
    %v5257 = vunpack.c.h.b16 %v3921
    %v5258 = vunpack.c.l.b16 %v3922
    %v5259 = vunpack.c.h.b16 %v3922
    %v5260 = vunpack.c.l.b16 %v3923
    %v5261 = vunpack.c.l.b16 %v3924
    %v5262 = vunpack.c.h.b16 %v3924
    %v5263 = vunpack.c.l.b16 %v3925
    %v5264 = vunpack.c.h.b16 %v3925
    %v5265 = vunpack.c.l.b16 %v3926
    %v5266 = vunpack.c.h.b16 %v3926
    %v5267 = vunpack.c.l.b16 %v3927
    %v5268 = vunpack.c.l.b16 %v3928
    %v5269 = vunpack.c.h.b16 %v3928
    %v5270 = vunpack.c.l.b16 %v3929
    %v5271 = vunpack.c.h.b16 %v3929
    %v5272 = vunpack.c.l.b16 %v3930
    %v5273 = vunpack.c.h.b16 %v3930
    %v5274 = vunpack.c.l.b16 %v3931
    %v5275 = vunpack.c.l.b16 %v3932
    %v5276 = vunpack.c.h.b16 %v3932
    %v5277 = vunpack.c.l.b16 %v3933
    %v5278 = vunpack.c.h.b16 %v3933
    %v5279 = vunpack.c.l.b16 %v3934
    %v5280 = vunpack.c.h.b16 %v3934
    %v5281 = vunpack.c.l.b16 %v3935
    %v5282 = vunpack.c.l.b16 %v3936
    %v5283 = vunpack.c.h.b16 %v3936
    %v5284 = vunpack.c.l.b16 %v3937
    %v5285 = vunpack.c.h.b16 %v3937
    %v5286 = vunpack.c.l.b16 %v3938
    %v5287 = vunpack.c.h.b16 %v3938
    %v5288 = vunpack.c.l.b16 %v3939
    %v5289 = vunpack.c.l.b16 %v3940
    %v5290 = vunpack.c.h.b16 %v3940
    %v5291 = vunpack.c.l.b16 %v3941
    %v5292 = vunpack.c.h.b16 %v3941
    %v5293 = vunpack.c.l.b16 %v3942
    %v5294 = vunpack.c.h.b16 %v3942
    %v5295 = vunpack.c.l.b16 %v3943
    %v5296 = vunpack.c.l.b16 %v3944
    %v5297 = vunpack.c.h.b16 %v3944
    %v5298 = vunpack.c.l.b16 %v3945
    %v5299 = vunpack.c.h.b16 %v3945
    %v5300 = vunpack.c.l.b16 %v3946
    %v5301 = vunpack.c.h.b16 %v3946
    %v5302 = vunpack.c.l.b16 %v3947
    %v5303 = vunpack.c.l.b16 %v3948
    %v5304 = vunpack.c.h.b16 %v3948
    %v5305 = vunpack.c.l.b16 %v3949
    %v5306 = vunpack.c.h.b16 %v3949
    %v5307 = vunpack.c.l.b16 %v3950
    %v5308 = vunpack.c.h.b16 %v3950
    %v5309 = vunpack.c.l.b16 %v3951
    %v5310 = vunpack.c.l.b16 %v3952
    %v5311 = vunpack.c.h.b16 %v3952
    %v5312 = vunpack.c.l.b16 %v3953
    %v5313 = vunpack.c.h.b16 %v3953
    %v5314 = vunpack.c.l.b16 %v3954
    %v5315 = vunpack.c.h.b16 %v3954
    %v5316 = vunpack.c.l.b16 %v3955
    %v5317 = vunpack.c.l.b16 %v3956
    %v5318 = vunpack.c.h.b16 %v3956
    %v5319 = vunpack.c.l.b16 %v3957
    %v5320 = vunpack.c.h.b16 %v3957
    %v5321 = vunpack.c.l.b16 %v3958
    %v5322 = vunpack.c.h.b16 %v3958
    %v5323 = vunpack.c.l.b16 %v3959
    %v5324 = vunpack.c.l.b16 %v3960
    %v5325 = vunpack.c.h.b16 %v3960
    %v5326 = vunpack.c.l.b16 %v3961
    %v5327 = vunpack.c.h.b16 %v3961
    %v5328 = vunpack.c.l.b16 %v3962
    %v5329 = vunpack.c.h.b16 %v3962
    %v5330 = vunpack.c.l.b16 %v3963
    %v5331 = vunpack.c.l.b16 %v3964
    %v5332 = vunpack.c.h.b16 %v3964
    %v5333 = vunpack.c.l.b16 %v3965
    %v5334 = vunpack.c.h.b16 %v3965
    %v5335 = vunpack.c.l.b16 %v3966
    %v5336 = vunpack.c.h.b16 %v3966
    %v5337 = vunpack.c.l.b16 %v3967
    %v5338 = vunpack.c.l.b16 %v3968
    %v5339 = vunpack.c.h.b16 %v3968
    %v5340 = vunpack.c.l.b16 %v3969
    %v5341 = vunpack.c.h.b16 %v3969
    %v5342 = vunpack.c.l.b16 %v3970
    %v5343 = vunpack.c.h.b16 %v3970
    %v5344 = vunpack.c.l.b16 %v3971
    %v5345 = vunpack.c.l.b16 %v3972
    %v5346 = vunpack.c.h.b16 %v3972
    %v5347 = vunpack.c.l.b16 %v3973
    %v5348 = vunpack.c.h.b16 %v3973
    %v5349 = vunpack.c.l.b16 %v3974
    %v5350 = vunpack.c.h.b16 %v3974
    %v5351 = vunpack.c.l.b16 %v3975
    %v5352 = vunpack.c.l.b16 %v3976
    %v5353 = vunpack.c.h.b16 %v3976
    %v5354 = vunpack.c.l.b16 %v3977
    %v5355 = vunpack.c.h.b16 %v3977
    %v5356 = vunpack.c.l.b16 %v3978
    %v5357 = vunpack.c.h.b16 %v3978
    %v5358 = vunpack.c.l.b16 %v3979
    %v5359 = vunpack.c.l.b16 %v3980
    %v5360 = vunpack.c.h.b16 %v3980
    %v5361 = vunpack.c.l.b16 %v3981
    %v5362 = vunpack.c.h.b16 %v3981
    %v5363 = vunpack.c.l.b16 %v3982
    %v5364 = vunpack.c.h.b16 %v3982
    %v5365 = vunpack.c.l.b16 %v3983
    %v5366 = vunpack.c.l.b16 %v3984
    %v5367 = vunpack.c.h.b16 %v3984
    %v5368 = vunpack.c.l.b16 %v3985
    %v5369 = vunpack.c.h.b16 %v3985
    %v5370 = vunpack.c.l.b16 %v3986
    %v5371 = vunpack.c.h.b16 %v3986
    %v5372 = vunpack.c.l.b16 %v3987
    %v5373 = vunpack.c.l.b16 %v3988
    %v5374 = vunpack.c.h.b16 %v3988
    %v5375 = vunpack.c.l.b16 %v3989
    %v5376 = vunpack.c.h.b16 %v3989
    %v5377 = vunpack.c.l.b16 %v3990
    %v5378 = vunpack.c.h.b16 %v3990
    %v5379 = vunpack.c.l.b16 %v3991
    %v5380 = vunpack.c.l.b16 %v3992
    %v5381 = vunpack.c.h.b16 %v3992
    %v5382 = vunpack.c.l.b16 %v3993
    %v5383 = vunpack.c.h.b16 %v3993
    %v5384 = vunpack.c.l.b16 %v3994
    %v5385 = vunpack.c.h.b16 %v3994
    %v5386 = vunpack.c.l.b16 %v3995
    %v5387 = vunpack.c.l.b16 %v3996
    %v5388 = vunpack.c.h.b16 %v3996
    %v5389 = vunpack.c.l.b16 %v3997
    %v5390 = vunpack.c.h.b16 %v3997
    %v5391 = vunpack.c.l.b16 %v3998
    %v5392 = vunpack.c.h.b16 %v3998
    %v5393 = vunpack.c.l.b16 %v3999
    %v5394 = vunpack.c.l.b16 %v4000
    %v5395 = vunpack.c.h.b16 %v4000
    %v5396 = vunpack.c.l.b16 %v4001
    %v5397 = vunpack.c.h.b16 %v4001
    %v5398 = vunpack.c.l.b16 %v4002
    %v5399 = vunpack.c.h.b16 %v4002
    %v5400 = vunpack.c.l.b16 %v4003
    %v5401 = vunpack.c.l.b16 %v4004
    %v5402 = vunpack.c.h.b16 %v4004
    %v5403 = vunpack.c.l.b16 %v4005
    %v5404 = vunpack.c.h.b16 %v4005
    %v5405 = vunpack.c.l.b16 %v4006
    %v5406 = vunpack.c.h.b16 %v4006
    %v5407 = vunpack.c.l.b16 %v4007
    %v5408 = vunpack.c.l.b16 %v4008
    %v5409 = vunpack.c.h.b16 %v4008
    %v5410 = vunpack.c.l.b16 %v4009
    %v5411 = vunpack.c.h.b16 %v4009
    %v5412 = vunpack.c.l.b16 %v4010
    %v5413 = vunpack.c.h.b16 %v4010
    %v5414 = vunpack.c.l.b16 %v4011
    %v5415 = vunpack.c.l.b16 %v4012
    %v5416 = vunpack.c.h.b16 %v4012
    %v5417 = vunpack.c.l.b16 %v4013
    %v5418 = vunpack.c.h.b16 %v4013
    %v5419 = vunpack.c.l.b16 %v4014
    %v5420 = vunpack.c.h.b16 %v4014
    %v5421 = vunpack.c.l.b16 %v4015
    %v5422 = vunpack.c.l.b16 %v4016
    %v5423 = vunpack.c.h.b16 %v4016
    %v5424 = vunpack.c.l.b16 %v4017
    %v5425 = vunpack.c.h.b16 %v4017
    %v5426 = vunpack.c.l.b16 %v4018
    %v5427 = vunpack.c.h.b16 %v4018
    %v5428 = vunpack.c.l.b16 %v4019
    %v5429 = vunpack.c.l.b16 %v4020
    %v5430 = vunpack.c.h.b16 %v4020
    %v5431 = vunpack.c.l.b16 %v4021
    %v5432 = vunpack.c.h.b16 %v4021
    %v5433 = vunpack.c.l.b16 %v4022
    %v5434 = vunpack.c.h.b16 %v4022
    %v5435 = vunpack.c.l.b16 %v4023
    %v5436 = vunpack.c.l.b16 %v4024
    %v5437 = vunpack.c.h.b16 %v4024
    %v5438 = vunpack.c.l.b16 %v4025
    %v5439 = vunpack.c.h.b16 %v4025
    %v5440 = vunpack.c.l.b16 %v4026
    %v5441 = vunpack.c.h.b16 %v4026
    %v5442 = vunpack.c.l.b16 %v4027
    %v5443 = vunpack.c.l.b16 %v4028
    %v5444 = vunpack.c.h.b16 %v4028
    %v5445 = vunpack.c.l.b16 %v4029
    %v5446 = vunpack.c.h.b16 %v4029
    %v5447 = vunpack.c.l.b16 %v4030
    %v5448 = vunpack.c.h.b16 %v4030
    %v5449 = vunpack.c.l.b16 %v4031
    %v5450 = vunpack.c.l.b16 %v4032
    %v5451 = vunpack.c.h.b16 %v4032
    %v5452 = vunpack.c.l.b16 %v4033
    %v5453 = vunpack.c.h.b16 %v4033
    %v5454 = vunpack.c.l.b16 %v4034
    %v5455 = vunpack.c.h.b16 %v4034
    %v5456 = vunpack.c.l.b16 %v4035
    %v5457 = vunpack.c.l.b16 %v4036
    %v5458 = vunpack.c.h.b16 %v4036
    %v5459 = vunpack.c.l.b16 %v4037
    %v5460 = vunpack.c.h.b16 %v4037
    %v5461 = vunpack.c.l.b16 %v4038
    %v5462 = vunpack.c.h.b16 %v4038
    %v5463 = vunpack.c.l.b16 %v4039
    %v5464 = vpack.c.b16 %v4575, %v4568
    %v5465 = vpack.c.b16 %v4576, %v4569
    %v5466 = vpack.c.b16 %v4577, %v4570
    %v5467 = vpack.c.b16 %v4578, %v4571
    %v5468 = vpack.c.b16 %v4579, %v4572
    %v5469 = vpack.c.b16 %v4580, %v4573
    %v5470 = vpack.c.b16 %v4581, %v4574
    %v5471 = vpack.c.b16 %v4589, %v4582
    %v5472 = vpack.c.b16 %v4590, %v4583
    %v5473 = vpack.c.b16 %v4591, %v4584
    %v5474 = vpack.c.b16 %v4592, %v4585
    %v5475 = vpack.c.b16 %v4593, %v4586
    %v5476 = vpack.c.b16 %v4594, %v4587
    %v5477 = vpack.c.b16 %v4595, %v4588
    %v5478 = vpack.c.b16 %v4603, %v4596
    %v5479 = vpack.c.b16 %v4604, %v4597
    %v5480 = vpack.c.b16 %v4605, %v4598
    %v5481 = vpack.c.b16 %v4606, %v4599
    %v5482 = vpack.c.b16 %v4607, %v4600
    %v5483 = vpack.c.b16 %v4608, %v4601
    %v5484 = vpack.c.b16 %v4609, %v4602
    %v5485 = vpack.c.b16 %v4617, %v4610
    %v5486 = vpack.c.b16 %v4618, %v4611
    %v5487 = vpack.c.b16 %v4619, %v4612
    %v5488 = vpack.c.b16 %v4620, %v4613
    %v5489 = vpack.c.b16 %v4621, %v4614
    %v5490 = vpack.c.b16 %v4622, %v4615
    %v5491 = vpack.c.b16 %v4623, %v4616
    %v5492 = vpack.c.b16 %v4631, %v4624
    %v5493 = vpack.c.b16 %v4632, %v4625
    %v5494 = vpack.c.b16 %v4633, %v4626
    %v5495 = vpack.c.b16 %v4634, %v4627
    %v5496 = vpack.c.b16 %v4635, %v4628
    %v5497 = vpack.c.b16 %v4636, %v4629
    %v5498 = vpack.c.b16 %v4637, %v4630
    %v5499 = vpack.c.b16 %v4645, %v4638
    %v5500 = vpack.c.b16 %v4646, %v4639
    %v5501 = vpack.c.b16 %v4647, %v4640
    %v5502 = vpack.c.b16 %v4648, %v4641
    %v5503 = vpack.c.b16 %v4649, %v4642
    %v5504 = vpack.c.b16 %v4650, %v4643
    %v5505 = vpack.c.b16 %v4651, %v4644
    %v5506 = vpack.c.b16 %v4659, %v4652
    %v5507 = vpack.c.b16 %v4660, %v4653
    %v5508 = vpack.c.b16 %v4661, %v4654
    %v5509 = vpack.c.b16 %v4662, %v4655
    %v5510 = vpack.c.b16 %v4663, %v4656
    %v5511 = vpack.c.b16 %v4664, %v4657
    %v5512 = vpack.c.b16 %v4665, %v4658
    %v5513 = vpack.c.b16 %v4673, %v4666
    %v5514 = vpack.c.b16 %v4674, %v4667
    %v5515 = vpack.c.b16 %v4675, %v4668
    %v5516 = vpack.c.b16 %v4676, %v4669
    %v5517 = vpack.c.b16 %v4677, %v4670
    %v5518 = vpack.c.b16 %v4678, %v4671
    %v5519 = vpack.c.b16 %v4679, %v4672
    %v5520 = vpack.c.b16 %v4687, %v4680
    %v5521 = vpack.c.b16 %v4688, %v4681
    %v5522 = vpack.c.b16 %v4689, %v4682
    %v5523 = vpack.c.b16 %v4690, %v4683
    %v5524 = vpack.c.b16 %v4691, %v4684
    %v5525 = vpack.c.b16 %v4692, %v4685
    %v5526 = vpack.c.b16 %v4693, %v4686
    %v5527 = vpack.c.b16 %v4701, %v4694
    %v5528 = vpack.c.b16 %v4702, %v4695
    %v5529 = vpack.c.b16 %v4703, %v4696
    %v5530 = vpack.c.b16 %v4704, %v4697
    %v5531 = vpack.c.b16 %v4705, %v4698
    %v5532 = vpack.c.b16 %v4706, %v4699
    %v5533 = vpack.c.b16 %v4707, %v4700
    %v5534 = vpack.c.b16 %v4715, %v4708
    %v5535 = vpack.c.b16 %v4716, %v4709
    %v5536 = vpack.c.b16 %v4717, %v4710
    %v5537 = vpack.c.b16 %v4718, %v4711
    %v5538 = vpack.c.b16 %v4719, %v4712
    %v5539 = vpack.c.b16 %v4720, %v4713
    %v5540 = vpack.c.b16 %v4721, %v4714
    %v5541 = vpack.c.b16 %v4729, %v4722
    %v5542 = vpack.c.b16 %v4730, %v4723
    %v5543 = vpack.c.b16 %v4731, %v4724
    %v5544 = vpack.c.b16 %v4732, %v4725
    %v5545 = vpack.c.b16 %v4733, %v4726
    %v5546 = vpack.c.b16 %v4734, %v4727
    %v5547 = vpack.c.b16 %v4735, %v4728
    %v5548 = vpack.c.b16 %v4743, %v4736
    %v5549 = vpack.c.b16 %v4744, %v4737
    %v5550 = vpack.c.b16 %v4745, %v4738
    %v5551 = vpack.c.b16 %v4746, %v4739
    %v5552 = vpack.c.b16 %v4747, %v4740
    %v5553 = vpack.c.b16 %v4748, %v4741
    %v5554 = vpack.c.b16 %v4749, %v4742
    %v5555 = vpack.c.b16 %v4757, %v4750
    %v5556 = vpack.c.b16 %v4758, %v4751
    %v5557 = vpack.c.b16 %v4759, %v4752
    %v5558 = vpack.c.b16 %v4760, %v4753
    %v5559 = vpack.c.b16 %v4761, %v4754
    %v5560 = vpack.c.b16 %v4762, %v4755
    %v5561 = vpack.c.b16 %v4763, %v4756
    %v5562 = vpack.c.b16 %v4771, %v4764
    %v5563 = vpack.c.b16 %v4772, %v4765
    %v5564 = vpack.c.b16 %v4773, %v4766
    %v5565 = vpack.c.b16 %v4774, %v4767
    %v5566 = vpack.c.b16 %v4775, %v4768
    %v5567 = vpack.c.b16 %v4776, %v4769
    %v5568 = vpack.c.b16 %v4777, %v4770
    %v5569 = vpack.c.b16 %v4785, %v4778
    %v5570 = vpack.c.b16 %v4786, %v4779
    %v5571 = vpack.c.b16 %v4787, %v4780
    %v5572 = vpack.c.b16 %v4788, %v4781
    %v5573 = vpack.c.b16 %v4789, %v4782
    %v5574 = vpack.c.b16 %v4790, %v4783
    %v5575 = vpack.c.b16 %v4791, %v4784
    %v5576 = vpack.c.b16 %v4799, %v4792
    %v5577 = vpack.c.b16 %v4800, %v4793
    %v5578 = vpack.c.b16 %v4801, %v4794
    %v5579 = vpack.c.b16 %v4802, %v4795
    %v5580 = vpack.c.b16 %v4803, %v4796
    %v5581 = vpack.c.b16 %v4804, %v4797
    %v5582 = vpack.c.b16 %v4805, %v4798
    %v5583 = vpack.c.b16 %v4813, %v4806
    %v5584 = vpack.c.b16 %v4814, %v4807
    %v5585 = vpack.c.b16 %v4815, %v4808
    %v5586 = vpack.c.b16 %v4816, %v4809
    %v5587 = vpack.c.b16 %v4817, %v4810
    %v5588 = vpack.c.b16 %v4818, %v4811
    %v5589 = vpack.c.b16 %v4819, %v4812
    %v5590 = vpack.c.b16 %v4827, %v4820
    %v5591 = vpack.c.b16 %v4828, %v4821
    %v5592 = vpack.c.b16 %v4829, %v4822
    %v5593 = vpack.c.b16 %v4830, %v4823
    %v5594 = vpack.c.b16 %v4831, %v4824
    %v5595 = vpack.c.b16 %v4832, %v4825
    %v5596 = vpack.c.b16 %v4833, %v4826
    %v5597 = vpack.c.b16 %v4841, %v4834
    %v5598 = vpack.c.b16 %v4842, %v4835
    %v5599 = vpack.c.b16 %v4843, %v4836
    %v5600 = vpack.c.b16 %v4844, %v4837
    %v5601 = vpack.c.b16 %v4845, %v4838
    %v5602 = vpack.c.b16 %v4846, %v4839
    %v5603 = vpack.c.b16 %v4847, %v4840
    %v5604 = vpack.c.b16 %v4855, %v4848
    %v5605 = vpack.c.b16 %v4856, %v4849
    %v5606 = vpack.c.b16 %v4857, %v4850
    %v5607 = vpack.c.b16 %v4858, %v4851
    %v5608 = vpack.c.b16 %v4859, %v4852
    %v5609 = vpack.c.b16 %v4860, %v4853
    %v5610 = vpack.c.b16 %v4861, %v4854
    %v5611 = vpack.c.b16 %v4869, %v4862
    %v5612 = vpack.c.b16 %v4870, %v4863
    %v5613 = vpack.c.b16 %v4871, %v4864
    %v5614 = vpack.c.b16 %v4872, %v4865
    %v5615 = vpack.c.b16 %v4873, %v4866
    %v5616 = vpack.c.b16 %v4874, %v4867
    %v5617 = vpack.c.b16 %v4875, %v4868
    %v5618 = vpack.c.b16 %v4883, %v4876
    %v5619 = vpack.c.b16 %v4884, %v4877
    %v5620 = vpack.c.b16 %v4885, %v4878
    %v5621 = vpack.c.b16 %v4886, %v4879
    %v5622 = vpack.c.b16 %v4887, %v4880
    %v5623 = vpack.c.b16 %v4888, %v4881
    %v5624 = vpack.c.b16 %v4889, %v4882
    %v5625 = vpack.c.b16 %v4897, %v4890
    %v5626 = vpack.c.b16 %v4898, %v4891
    %v5627 = vpack.c.b16 %v4899, %v4892
    %v5628 = vpack.c.b16 %v4900, %v4893
    %v5629 = vpack.c.b16 %v4901, %v4894
    %v5630 = vpack.c.b16 %v4902, %v4895
    %v5631 = vpack.c.b16 %v4903, %v4896
    %v5632 = vpack.c.b16 %v4911, %v4904
    %v5633 = vpack.c.b16 %v4912, %v4905
    %v5634 = vpack.c.b16 %v4913, %v4906
    %v5635 = vpack.c.b16 %v4914, %v4907
    %v5636 = vpack.c.b16 %v4915, %v4908
    %v5637 = vpack.c.b16 %v4916, %v4909
    %v5638 = vpack.c.b16 %v4917, %v4910
    %v5639 = vpack.c.b16 %v4925, %v4918
    %v5640 = vpack.c.b16 %v4926, %v4919
    %v5641 = vpack.c.b16 %v4927, %v4920
    %v5642 = vpack.c.b16 %v4928, %v4921
    %v5643 = vpack.c.b16 %v4929, %v4922
    %v5644 = vpack.c.b16 %v4930, %v4923
    %v5645 = vpack.c.b16 %v4931, %v4924
    %v5646 = vpack.c.b16 %v4939, %v4932
    %v5647 = vpack.c.b16 %v4940, %v4933
    %v5648 = vpack.c.b16 %v4941, %v4934
    %v5649 = vpack.c.b16 %v4942, %v4935
    %v5650 = vpack.c.b16 %v4943, %v4936
    %v5651 = vpack.c.b16 %v4944, %v4937
    %v5652 = vpack.c.b16 %v4945, %v4938
    %v5653 = vpack.c.b16 %v4953, %v4946
    %v5654 = vpack.c.b16 %v4954, %v4947
    %v5655 = vpack.c.b16 %v4955, %v4948
    %v5656 = vpack.c.b16 %v4956, %v4949
    %v5657 = vpack.c.b16 %v4957, %v4950
    %v5658 = vpack.c.b16 %v4958, %v4951
    %v5659 = vpack.c.b16 %v4959, %v4952
    %v5660 = vpack.c.b16 %v4967, %v4960
    %v5661 = vpack.c.b16 %v4968, %v4961
    %v5662 = vpack.c.b16 %v4969, %v4962
    %v5663 = vpack.c.b16 %v4970, %v4963
    %v5664 = vpack.c.b16 %v4971, %v4964
    %v5665 = vpack.c.b16 %v4972, %v4965
    %v5666 = vpack.c.b16 %v4973, %v4966
    %v5667 = vpack.c.b16 %v4981, %v4974
    %v5668 = vpack.c.b16 %v4982, %v4975
    %v5669 = vpack.c.b16 %v4983, %v4976
    %v5670 = vpack.c.b16 %v4984, %v4977
    %v5671 = vpack.c.b16 %v4985, %v4978
    %v5672 = vpack.c.b16 %v4986, %v4979
    %v5673 = vpack.c.b16 %v4987, %v4980
    %v5674 = vpack.c.b16 %v4995, %v4988
    %v5675 = vpack.c.b16 %v4996, %v4989
    %v5676 = vpack.c.b16 %v4997, %v4990
    %v5677 = vpack.c.b16 %v4998, %v4991
    %v5678 = vpack.c.b16 %v4999, %v4992
    %v5679 = vpack.c.b16 %v5000, %v4993
    %v5680 = vpack.c.b16 %v5001, %v4994
    %v5681 = vpack.c.b16 %v5009, %v5002
    %v5682 = vpack.c.b16 %v5010, %v5003
    %v5683 = vpack.c.b16 %v5011, %v5004
    %v5684 = vpack.c.b16 %v5012, %v5005
    %v5685 = vpack.c.b16 %v5013, %v5006
    %v5686 = vpack.c.b16 %v5014, %v5007
    %v5687 = vpack.c.b16 %v5015, %v5008
    %v5688 = vpack.c.b16 %v5023, %v5016
    %v5689 = vpack.c.b16 %v5024, %v5017
    %v5690 = vpack.c.b16 %v5025, %v5018
    %v5691 = vpack.c.b16 %v5026, %v5019
    %v5692 = vpack.c.b16 %v5027, %v5020
    %v5693 = vpack.c.b16 %v5028, %v5021
    %v5694 = vpack.c.b16 %v5029, %v5022
    %v5695 = vpack.c.b16 %v5037, %v5030
    %v5696 = vpack.c.b16 %v5038, %v5031
    %v5697 = vpack.c.b16 %v5039, %v5032
    %v5698 = vpack.c.b16 %v5040, %v5033
    %v5699 = vpack.c.b16 %v5041, %v5034
    %v5700 = vpack.c.b16 %v5042, %v5035
    %v5701 = vpack.c.b16 %v5043, %v5036
    %v5702 = vpack.c.b16 %v5051, %v5044
    %v5703 = vpack.c.b16 %v5052, %v5045
    %v5704 = vpack.c.b16 %v5053, %v5046
    %v5705 = vpack.c.b16 %v5054, %v5047
    %v5706 = vpack.c.b16 %v5055, %v5048
    %v5707 = vpack.c.b16 %v5056, %v5049
    %v5708 = vpack.c.b16 %v5057, %v5050
    %v5709 = vpack.c.b16 %v5065, %v5058
    %v5710 = vpack.c.b16 %v5066, %v5059
    %v5711 = vpack.c.b16 %v5067, %v5060
    %v5712 = vpack.c.b16 %v5068, %v5061
    %v5713 = vpack.c.b16 %v5069, %v5062
    %v5714 = vpack.c.b16 %v5070, %v5063
    %v5715 = vpack.c.b16 %v5071, %v5064
    %v5716 = vpack.c.b16 %v5079, %v5072
    %v5717 = vpack.c.b16 %v5080, %v5073
    %v5718 = vpack.c.b16 %v5081, %v5074
    %v5719 = vpack.c.b16 %v5082, %v5075
    %v5720 = vpack.c.b16 %v5083, %v5076
    %v5721 = vpack.c.b16 %v5084, %v5077
    %v5722 = vpack.c.b16 %v5085, %v5078
    %v5723 = vpack.c.b16 %v5093, %v5086
    %v5724 = vpack.c.b16 %v5094, %v5087
    %v5725 = vpack.c.b16 %v5095, %v5088
    %v5726 = vpack.c.b16 %v5096, %v5089
    %v5727 = vpack.c.b16 %v5097, %v5090
    %v5728 = vpack.c.b16 %v5098, %v5091
    %v5729 = vpack.c.b16 %v5099, %v5092
    %v5730 = vpack.c.b16 %v5107, %v5100
    %v5731 = vpack.c.b16 %v5108, %v5101
    %v5732 = vpack.c.b16 %v5109, %v5102
    %v5733 = vpack.c.b16 %v5110, %v5103
    %v5734 = vpack.c.b16 %v5111, %v5104
    %v5735 = vpack.c.b16 %v5112, %v5105
    %v5736 = vpack.c.b16 %v5113, %v5106
    %v5737 = vpack.c.b16 %v5121, %v5114
    %v5738 = vpack.c.b16 %v5122, %v5115
    %v5739 = vpack.c.b16 %v5123, %v5116
    %v5740 = vpack.c.b16 %v5124, %v5117
    %v5741 = vpack.c.b16 %v5125, %v5118
    %v5742 = vpack.c.b16 %v5126, %v5119
    %v5743 = vpack.c.b16 %v5127, %v5120
    %v5744 = vpack.c.b16 %v5135, %v5128
    %v5745 = vpack.c.b16 %v5136, %v5129
    %v5746 = vpack.c.b16 %v5137, %v5130
    %v5747 = vpack.c.b16 %v5138, %v5131
    %v5748 = vpack.c.b16 %v5139, %v5132
    %v5749 = vpack.c.b16 %v5140, %v5133
    %v5750 = vpack.c.b16 %v5141, %v5134
    %v5751 = vpack.c.b16 %v5149, %v5142
    %v5752 = vpack.c.b16 %v5150, %v5143
    %v5753 = vpack.c.b16 %v5151, %v5144
    %v5754 = vpack.c.b16 %v5152, %v5145
    %v5755 = vpack.c.b16 %v5153, %v5146
    %v5756 = vpack.c.b16 %v5154, %v5147
    %v5757 = vpack.c.b16 %v5155, %v5148
    %v5758 = vpack.c.b16 %v5163, %v5156
    %v5759 = vpack.c.b16 %v5164, %v5157
    %v5760 = vpack.c.b16 %v5165, %v5158
    %v5761 = vpack.c.b16 %v5166, %v5159
    %v5762 = vpack.c.b16 %v5167, %v5160
    %v5763 = vpack.c.b16 %v5168, %v5161
    %v5764 = vpack.c.b16 %v5169, %v5162
    %v5765 = vpack.c.b16 %v5177, %v5170
    %v5766 = vpack.c.b16 %v5178, %v5171
    %v5767 = vpack.c.b16 %v5179, %v5172
    %v5768 = vpack.c.b16 %v5180, %v5173
    %v5769 = vpack.c.b16 %v5181, %v5174
    %v5770 = vpack.c.b16 %v5182, %v5175
    %v5771 = vpack.c.b16 %v5183, %v5176
    %v5772 = vpack.c.b16 %v5191, %v5184
    %v5773 = vpack.c.b16 %v5192, %v5185
    %v5774 = vpack.c.b16 %v5193, %v5186
    %v5775 = vpack.c.b16 %v5194, %v5187
    %v5776 = vpack.c.b16 %v5195, %v5188
    %v5777 = vpack.c.b16 %v5196, %v5189
    %v5778 = vpack.c.b16 %v5197, %v5190
    %v5779 = vpack.c.b16 %v5205, %v5198
    %v5780 = vpack.c.b16 %v5206, %v5199
    %v5781 = vpack.c.b16 %v5207, %v5200
    %v5782 = vpack.c.b16 %v5208, %v5201
    %v5783 = vpack.c.b16 %v5209, %v5202
    %v5784 = vpack.c.b16 %v5210, %v5203
    %v5785 = vpack.c.b16 %v5211, %v5204
    %v5786 = vpack.c.b16 %v5219, %v5212
    %v5787 = vpack.c.b16 %v5220, %v5213
    %v5788 = vpack.c.b16 %v5221, %v5214
    %v5789 = vpack.c.b16 %v5222, %v5215
    %v5790 = vpack.c.b16 %v5223, %v5216
    %v5791 = vpack.c.b16 %v5224, %v5217
    %v5792 = vpack.c.b16 %v5225, %v5218
    %v5793 = vpack.c.b16 %v5233, %v5226
    %v5794 = vpack.c.b16 %v5234, %v5227
    %v5795 = vpack.c.b16 %v5235, %v5228
    %v5796 = vpack.c.b16 %v5236, %v5229
    %v5797 = vpack.c.b16 %v5237, %v5230
    %v5798 = vpack.c.b16 %v5238, %v5231
    %v5799 = vpack.c.b16 %v5239, %v5232
    %v5800 = vpack.c.b16 %v5247, %v5240
    %v5801 = vpack.c.b16 %v5248, %v5241
    %v5802 = vpack.c.b16 %v5249, %v5242
    %v5803 = vpack.c.b16 %v5250, %v5243
    %v5804 = vpack.c.b16 %v5251, %v5244
    %v5805 = vpack.c.b16 %v5252, %v5245
    %v5806 = vpack.c.b16 %v5253, %v5246
    %v5807 = vpack.c.b16 %v5261, %v5254
    %v5808 = vpack.c.b16 %v5262, %v5255
    %v5809 = vpack.c.b16 %v5263, %v5256
    %v5810 = vpack.c.b16 %v5264, %v5257
    %v5811 = vpack.c.b16 %v5265, %v5258
    %v5812 = vpack.c.b16 %v5266, %v5259
    %v5813 = vpack.c.b16 %v5267, %v5260
    %v5814 = vpack.c.b16 %v5275, %v5268
    %v5815 = vpack.c.b16 %v5276, %v5269
    %v5816 = vpack.c.b16 %v5277, %v5270
    %v5817 = vpack.c.b16 %v5278, %v5271
    %v5818 = vpack.c.b16 %v5279, %v5272
    %v5819 = vpack.c.b16 %v5280, %v5273
    %v5820 = vpack.c.b16 %v5281, %v5274
    %v5821 = vpack.c.b16 %v5289, %v5282
    %v5822 = vpack.c.b16 %v5290, %v5283
    %v5823 = vpack.c.b16 %v5291, %v5284
    %v5824 = vpack.c.b16 %v5292, %v5285
    %v5825 = vpack.c.b16 %v5293, %v5286
    %v5826 = vpack.c.b16 %v5294, %v5287
    %v5827 = vpack.c.b16 %v5295, %v5288
    %v5828 = vpack.c.b16 %v5303, %v5296
    %v5829 = vpack.c.b16 %v5304, %v5297
    %v5830 = vpack.c.b16 %v5305, %v5298
    %v5831 = vpack.c.b16 %v5306, %v5299
    %v5832 = vpack.c.b16 %v5307, %v5300
    %v5833 = vpack.c.b16 %v5308, %v5301
    %v5834 = vpack.c.b16 %v5309, %v5302
    %v5835 = vpack.c.b16 %v5317, %v5310
    %v5836 = vpack.c.b16 %v5318, %v5311
    %v5837 = vpack.c.b16 %v5319, %v5312
    %v5838 = vpack.c.b16 %v5320, %v5313
    %v5839 = vpack.c.b16 %v5321, %v5314
    %v5840 = vpack.c.b16 %v5322, %v5315
    %v5841 = vpack.c.b16 %v5323, %v5316
    %v5842 = vpack.c.b16 %v5331, %v5324
    %v5843 = vpack.c.b16 %v5332, %v5325
    %v5844 = vpack.c.b16 %v5333, %v5326
    %v5845 = vpack.c.b16 %v5334, %v5327
    %v5846 = vpack.c.b16 %v5335, %v5328
    %v5847 = vpack.c.b16 %v5336, %v5329
    %v5848 = vpack.c.b16 %v5337, %v5330
    %v5849 = vpack.c.b16 %v5345, %v5338
    %v5850 = vpack.c.b16 %v5346, %v5339
    %v5851 = vpack.c.b16 %v5347, %v5340
    %v5852 = vpack.c.b16 %v5348, %v5341
    %v5853 = vpack.c.b16 %v5349, %v5342
    %v5854 = vpack.c.b16 %v5350, %v5343
    %v5855 = vpack.c.b16 %v5351, %v5344
    %v5856 = vpack.c.b16 %v5359, %v5352
    %v5857 = vpack.c.b16 %v5360, %v5353
    %v5858 = vpack.c.b16 %v5361, %v5354
    %v5859 = vpack.c.b16 %v5362, %v5355
    %v5860 = vpack.c.b16 %v5363, %v5356
    %v5861 = vpack.c.b16 %v5364, %v5357
    %v5862 = vpack.c.b16 %v5365, %v5358
    %v5863 = vpack.c.b16 %v5373, %v5366
    %v5864 = vpack.c.b16 %v5374, %v5367
    %v5865 = vpack.c.b16 %v5375, %v5368
    %v5866 = vpack.c.b16 %v5376, %v5369
    %v5867 = vpack.c.b16 %v5377, %v5370
    %v5868 = vpack.c.b16 %v5378, %v5371
    %v5869 = vpack.c.b16 %v5379, %v5372
    %v5870 = vpack.c.b16 %v5387, %v5380
    %v5871 = vpack.c.b16 %v5388, %v5381
    %v5872 = vpack.c.b16 %v5389, %v5382
    %v5873 = vpack.c.b16 %v5390, %v5383
    %v5874 = vpack.c.b16 %v5391, %v5384
    %v5875 = vpack.c.b16 %v5392, %v5385
    %v5876 = vpack.c.b16 %v5393, %v5386
    %v5877 = vpack.c.b16 %v5401, %v5394
    %v5878 = vpack.c.b16 %v5402, %v5395
    %v5879 = vpack.c.b16 %v5403, %v5396
    %v5880 = vpack.c.b16 %v5404, %v5397
    %v5881 = vpack.c.b16 %v5405, %v5398
    %v5882 = vpack.c.b16 %v5406, %v5399
    %v5883 = vpack.c.b16 %v5407, %v5400
    %v5884 = vpack.c.b16 %v5415, %v5408
    %v5885 = vpack.c.b16 %v5416, %v5409
    %v5886 = vpack.c.b16 %v5417, %v5410
    %v5887 = vpack.c.b16 %v5418, %v5411
    %v5888 = vpack.c.b16 %v5419, %v5412
    %v5889 = vpack.c.b16 %v5420, %v5413
    %v5890 = vpack.c.b16 %v5421, %v5414
    %v5891 = vpack.c.b16 %v5429, %v5422
    %v5892 = vpack.c.b16 %v5430, %v5423
    %v5893 = vpack.c.b16 %v5431, %v5424
    %v5894 = vpack.c.b16 %v5432, %v5425
    %v5895 = vpack.c.b16 %v5433, %v5426
    %v5896 = vpack.c.b16 %v5434, %v5427
    %v5897 = vpack.c.b16 %v5435, %v5428
    %v5898 = vpack.c.b16 %v5443, %v5436
    %v5899 = vpack.c.b16 %v5444, %v5437
    %v5900 = vpack.c.b16 %v5445, %v5438
    %v5901 = vpack.c.b16 %v5446, %v5439
    %v5902 = vpack.c.b16 %v5447, %v5440
    %v5903 = vpack.c.b16 %v5448, %v5441
    %v5904 = vpack.c.b16 %v5449, %v5442
    %v5905 = vpack.c.b16 %v5457, %v5450
    %v5906 = vpack.c.b16 %v5458, %v5451
    %v5907 = vpack.c.b16 %v5459, %v5452
    %v5908 = vpack.c.b16 %v5460, %v5453
    %v5909 = vpack.c.b16 %v5461, %v5454
    %v5910 = vpack.c.b16 %v5462, %v5455
    %v5911 = vpack.c.b16 %v5463, %v5456
    %6360 = vmatpush.bf16.msra.mxu0 %v5513
    %6361 = vmatpush.bf16.msra.mxu0 %v5506
    %6362 = vmatpush.bf16.msra.mxu0 %v5499
    %6363 = vmatpush.bf16.msra.mxu0 %v5492
    %6364 = vmatpush.bf16.msra.mxu0 %v5485
    %6365 = vmatpush.bf16.msra.mxu0 %v5478
    %6366 = vmatpush.bf16.msra.mxu0 %v5471
    %6367 = vmatpush.bf16.msra.mxu0 %v5464
    %6368 = vmatmul.bf16.gmra.mxu0 %v3520
    %v6369 = vpop.f32.mrf.mxu0
    %v6370 = vadd.f32 %v4042, %v6369
    %v6371 = vpop.f32.mrf.mxu0
    %6372 = vdwg.mxu0
    %6373 = vmatpush.bf16.msra.mxu0 %v5569
    %6374 = vmatpush.bf16.msra.mxu0 %v5562
    %6375 = vmatpush.bf16.msra.mxu0 %v5555
    %6376 = vmatpush.bf16.msra.mxu0 %v5548
    %6377 = vmatpush.bf16.msra.mxu0 %v5541
    %6378 = vmatpush.bf16.msra.mxu0 %v5534
    %6379 = vmatpush.bf16.msra.mxu0 %v5527
    %6380 = vmatpush.bf16.msra.mxu0 %v5520
    %6381 = vmatmul.bf16.gmra.mxu0 %v3521
    %v6382 = vpop.f32.mrf.mxu0
    %v6383 = vadd.f32 %v6370, %v6382
    %v6384 = vpop.f32.mrf.mxu0
    %6385 = vdwg.mxu0
    %6386 = vmatpush.bf16.msra.mxu0 %v5625
    %6387 = vmatpush.bf16.msra.mxu0 %v5618
    %6388 = vmatpush.bf16.msra.mxu0 %v5611
    %6389 = vmatpush.bf16.msra.mxu0 %v5604
    %6390 = vmatpush.bf16.msra.mxu0 %v5597
    %6391 = vmatpush.bf16.msra.mxu0 %v5590
    %6392 = vmatpush.bf16.msra.mxu0 %v5583
    %6393 = vmatpush.bf16.msra.mxu0 %v5576
    %6394 = vmatmul.bf16.gmra.mxu0 %v3522
    %v6395 = vpop.f32.mrf.mxu0
    %v6396 = vadd.f32 %v6383, %v6395
    %v6397 = vpop.f32.mrf.mxu0
    %6398 = vdwg.mxu0
    %6399 = vmatpush.bf16.msra.mxu0 %v5681
    %6400 = vmatpush.bf16.msra.mxu0 %v5674
    %6401 = vmatpush.bf16.msra.mxu0 %v5667
    %6402 = vmatpush.bf16.msra.mxu0 %v5660
    %6403 = vmatpush.bf16.msra.mxu0 %v5653
    %6404 = vmatpush.bf16.msra.mxu0 %v5646
    %6405 = vmatpush.bf16.msra.mxu0 %v5639
    %6406 = vmatpush.bf16.msra.mxu0 %v5632
    %6407 = vmatmul.bf16.gmra.mxu0 %v3523
    %v6408 = vpop.f32.mrf.mxu0
    %v6409 = vadd.f32 %v6396, %v6408
    %v6410 = vpop.f32.mrf.mxu0
    %6411 = vdwg.mxu0
    %6412 = vmatpush.bf16.msra.mxu0 %v5737
    %6413 = vmatpush.bf16.msra.mxu0 %v5730
    %6414 = vmatpush.bf16.msra.mxu0 %v5723
    %6415 = vmatpush.bf16.msra.mxu0 %v5716
    %6416 = vmatpush.bf16.msra.mxu0 %v5709
    %6417 = vmatpush.bf16.msra.mxu0 %v5702
    %6418 = vmatpush.bf16.msra.mxu0 %v5695
    %6419 = vmatpush.bf16.msra.mxu0 %v5688
    %6420 = vmatmul.bf16.gmra.mxu0 %v3524
    %v6421 = vpop.f32.mrf.mxu0
    %v6422 = vadd.f32 %v6409, %v6421
    %v6423 = vpop.f32.mrf.mxu0
    %6424 = vdwg.mxu0
    %6425 = vmatpush.bf16.msra.mxu0 %v5793
    %6426 = vmatpush.bf16.msra.mxu0 %v5786
    %6427 = vmatpush.bf16.msra.mxu0 %v5779
    %6428 = vmatpush.bf16.msra.mxu0 %v5772
    %6429 = vmatpush.bf16.msra.mxu0 %v5765
    %6430 = vmatpush.bf16.msra.mxu0 %v5758
    %6431 = vmatpush.bf16.msra.mxu0 %v5751
    %6432 = vmatpush.bf16.msra.mxu0 %v5744
    %6433 = vmatmul.bf16.gmra.mxu0 %v3525
    %v6434 = vpop.f32.mrf.mxu0
    %v6435 = vadd.f32 %v6422, %v6434
    %v6436 = vpop.f32.mrf.mxu0
    %6437 = vdwg.mxu0
    %6438 = vmatpush.bf16.msra.mxu0 %v5849
    %6439 = vmatpush.bf16.msra.mxu0 %v5842
    %6440 = vmatpush.bf16.msra.mxu0 %v5835
    %6441 = vmatpush.bf16.msra.mxu0 %v5828
    %6442 = vmatpush.bf16.msra.mxu0 %v5821
    %6443 = vmatpush.bf16.msra.mxu0 %v5814
    %6444 = vmatpush.bf16.msra.mxu0 %v5807
    %6445 = vmatpush.bf16.msra.mxu0 %v5800
    %6446 = vmatmul.bf16.gmra.mxu0 %v3526
    %v6447 = vpop.f32.mrf.mxu0
    %v6448 = vadd.f32 %v6435, %v6447
    %v6449 = vpop.f32.mrf.mxu0
    %6450 = vdwg.mxu0
    %6451 = vmatpush.bf16.msra.mxu0 %v5905
    %6452 = vmatpush.bf16.msra.mxu0 %v5898
    %6453 = vmatpush.bf16.msra.mxu0 %v5891
    %6454 = vmatpush.bf16.msra.mxu0 %v5884
    %6455 = vmatpush.bf16.msra.mxu0 %v5877
    %6456 = vmatpush.bf16.msra.mxu0 %v5870
    %6457 = vmatpush.bf16.msra.mxu0 %v5863
    %6458 = vmatpush.bf16.msra.mxu0 %v5856
    %6459 = vmatmul.bf16.gmra.mxu0 %v3527
    %v6460 = vpop.f32.mrf.mxu0
    %v6461 = vadd.f32 %v6448, %v6460
    %v6462 = vpop.f32.mrf.mxu0
    %6463 = vdwg.mxu0
    %6464 = vmatpush.bf16.msra.mxu0 %v5514
    %6465 = vmatpush.bf16.msra.mxu0 %v5507
    %6466 = vmatpush.bf16.msra.mxu0 %v5500
    %6467 = vmatpush.bf16.msra.mxu0 %v5493
    %6468 = vmatpush.bf16.msra.mxu0 %v5486
    %6469 = vmatpush.bf16.msra.mxu0 %v5479
    %6470 = vmatpush.bf16.msra.mxu0 %v5472
    %6471 = vmatpush.bf16.msra.mxu0 %v5465
    %6472 = vmatmul.bf16.gmra.mxu0 %v3520
    %v6473 = vpop.f32.mrf.mxu0
    %v6474 = vadd.f32 %v4043, %v6473
    %v6475 = vpop.f32.mrf.mxu0
    %6476 = vdwg.mxu0
    %6477 = vmatpush.bf16.msra.mxu0 %v5570
    %6478 = vmatpush.bf16.msra.mxu0 %v5563
    %6479 = vmatpush.bf16.msra.mxu0 %v5556
    %6480 = vmatpush.bf16.msra.mxu0 %v5549
    %6481 = vmatpush.bf16.msra.mxu0 %v5542
    %6482 = vmatpush.bf16.msra.mxu0 %v5535
    %6483 = vmatpush.bf16.msra.mxu0 %v5528
    %6484 = vmatpush.bf16.msra.mxu0 %v5521
    %6485 = vmatmul.bf16.gmra.mxu0 %v3521
    %v6486 = vpop.f32.mrf.mxu0
    %v6487 = vadd.f32 %v6474, %v6486
    %v6488 = vpop.f32.mrf.mxu0
    %6489 = vdwg.mxu0
    %6490 = vmatpush.bf16.msra.mxu0 %v5626
    %6491 = vmatpush.bf16.msra.mxu0 %v5619
    %6492 = vmatpush.bf16.msra.mxu0 %v5612
    %6493 = vmatpush.bf16.msra.mxu0 %v5605
    %6494 = vmatpush.bf16.msra.mxu0 %v5598
    %6495 = vmatpush.bf16.msra.mxu0 %v5591
    %6496 = vmatpush.bf16.msra.mxu0 %v5584
    %6497 = vmatpush.bf16.msra.mxu0 %v5577
    %6498 = vmatmul.bf16.gmra.mxu0 %v3522
    %v6499 = vpop.f32.mrf.mxu0
    %v6500 = vadd.f32 %v6487, %v6499
    %v6501 = vpop.f32.mrf.mxu0
    %6502 = vdwg.mxu0
    %6503 = vmatpush.bf16.msra.mxu0 %v5682
    %6504 = vmatpush.bf16.msra.mxu0 %v5675
    %6505 = vmatpush.bf16.msra.mxu0 %v5668
    %6506 = vmatpush.bf16.msra.mxu0 %v5661
    %6507 = vmatpush.bf16.msra.mxu0 %v5654
    %6508 = vmatpush.bf16.msra.mxu0 %v5647
    %6509 = vmatpush.bf16.msra.mxu0 %v5640
    %6510 = vmatpush.bf16.msra.mxu0 %v5633
    %6511 = vmatmul.bf16.gmra.mxu0 %v3523
    %v6512 = vpop.f32.mrf.mxu0
    %v6513 = vadd.f32 %v6500, %v6512
    %v6514 = vpop.f32.mrf.mxu0
    %6515 = vdwg.mxu0
    %6516 = vmatpush.bf16.msra.mxu0 %v5738
    %6517 = vmatpush.bf16.msra.mxu0 %v5731
    %6518 = vmatpush.bf16.msra.mxu0 %v5724
    %6519 = vmatpush.bf16.msra.mxu0 %v5717
    %6520 = vmatpush.bf16.msra.mxu0 %v5710
    %6521 = vmatpush.bf16.msra.mxu0 %v5703
    %6522 = vmatpush.bf16.msra.mxu0 %v5696
    %6523 = vmatpush.bf16.msra.mxu0 %v5689
    %6524 = vmatmul.bf16.gmra.mxu0 %v3524
    %v6525 = vpop.f32.mrf.mxu0
    %v6526 = vadd.f32 %v6513, %v6525
    %v6527 = vpop.f32.mrf.mxu0
    %6528 = vdwg.mxu0
    %6529 = vmatpush.bf16.msra.mxu0 %v5794
    %6530 = vmatpush.bf16.msra.mxu0 %v5787
    %6531 = vmatpush.bf16.msra.mxu0 %v5780
    %6532 = vmatpush.bf16.msra.mxu0 %v5773
    %6533 = vmatpush.bf16.msra.mxu0 %v5766
    %6534 = vmatpush.bf16.msra.mxu0 %v5759
    %6535 = vmatpush.bf16.msra.mxu0 %v5752
    %6536 = vmatpush.bf16.msra.mxu0 %v5745
    %6537 = vmatmul.bf16.gmra.mxu0 %v3525
    %v6538 = vpop.f32.mrf.mxu0
    %v6539 = vadd.f32 %v6526, %v6538
    %v6540 = vpop.f32.mrf.mxu0
    %6541 = vdwg.mxu0
    %6542 = vmatpush.bf16.msra.mxu0 %v5850
    %6543 = vmatpush.bf16.msra.mxu0 %v5843
    %6544 = vmatpush.bf16.msra.mxu0 %v5836
    %6545 = vmatpush.bf16.msra.mxu0 %v5829
    %6546 = vmatpush.bf16.msra.mxu0 %v5822
    %6547 = vmatpush.bf16.msra.mxu0 %v5815
    %6548 = vmatpush.bf16.msra.mxu0 %v5808
    %6549 = vmatpush.bf16.msra.mxu0 %v5801
    %6550 = vmatmul.bf16.gmra.mxu0 %v3526
    %v6551 = vpop.f32.mrf.mxu0
    %v6552 = vadd.f32 %v6539, %v6551
    %v6553 = vpop.f32.mrf.mxu0
    %6554 = vdwg.mxu0
    %6555 = vmatpush.bf16.msra.mxu0 %v5906
    %6556 = vmatpush.bf16.msra.mxu0 %v5899
    %6557 = vmatpush.bf16.msra.mxu0 %v5892
    %6558 = vmatpush.bf16.msra.mxu0 %v5885
    %6559 = vmatpush.bf16.msra.mxu0 %v5878
    %6560 = vmatpush.bf16.msra.mxu0 %v5871
    %6561 = vmatpush.bf16.msra.mxu0 %v5864
    %6562 = vmatpush.bf16.msra.mxu0 %v5857
    %6563 = vmatmul.bf16.gmra.mxu0 %v3527
    %v6564 = vpop.f32.mrf.mxu0
    %v6565 = vadd.f32 %v6552, %v6564
    %v6566 = vpop.f32.mrf.mxu0
    %6567 = vdwg.mxu0
    %6568 = vmatpush.bf16.msra.mxu0 %v5515
    %6569 = vmatpush.bf16.msra.mxu0 %v5508
    %6570 = vmatpush.bf16.msra.mxu0 %v5501
    %6571 = vmatpush.bf16.msra.mxu0 %v5494
    %6572 = vmatpush.bf16.msra.mxu0 %v5487
    %6573 = vmatpush.bf16.msra.mxu0 %v5480
    %6574 = vmatpush.bf16.msra.mxu0 %v5473
    %6575 = vmatpush.bf16.msra.mxu0 %v5466
    %6576 = vmatmul.bf16.gmra.mxu0 %v3520
    %v6577 = vpop.f32.mrf.mxu0
    %v6578 = vadd.f32 %v4044, %v6577
    %v6579 = vpop.f32.mrf.mxu0
    %6580 = vdwg.mxu0
    %6581 = vmatpush.bf16.msra.mxu0 %v5571
    %6582 = vmatpush.bf16.msra.mxu0 %v5564
    %6583 = vmatpush.bf16.msra.mxu0 %v5557
    %6584 = vmatpush.bf16.msra.mxu0 %v5550
    %6585 = vmatpush.bf16.msra.mxu0 %v5543
    %6586 = vmatpush.bf16.msra.mxu0 %v5536
    %6587 = vmatpush.bf16.msra.mxu0 %v5529
    %6588 = vmatpush.bf16.msra.mxu0 %v5522
    %6589 = vmatmul.bf16.gmra.mxu0 %v3521
    %v6590 = vpop.f32.mrf.mxu0
    %v6591 = vadd.f32 %v6578, %v6590
    %v6592 = vpop.f32.mrf.mxu0
    %6593 = vdwg.mxu0
    %6594 = vmatpush.bf16.msra.mxu0 %v5627
    %6595 = vmatpush.bf16.msra.mxu0 %v5620
    %6596 = vmatpush.bf16.msra.mxu0 %v5613
    %6597 = vmatpush.bf16.msra.mxu0 %v5606
    %6598 = vmatpush.bf16.msra.mxu0 %v5599
    %6599 = vmatpush.bf16.msra.mxu0 %v5592
    %6600 = vmatpush.bf16.msra.mxu0 %v5585
    %6601 = vmatpush.bf16.msra.mxu0 %v5578
    %6602 = vmatmul.bf16.gmra.mxu0 %v3522
    %v6603 = vpop.f32.mrf.mxu0
    %v6604 = vadd.f32 %v6591, %v6603
    %v6605 = vpop.f32.mrf.mxu0
    %6606 = vdwg.mxu0
    %6607 = vmatpush.bf16.msra.mxu0 %v5683
    %6608 = vmatpush.bf16.msra.mxu0 %v5676
    %6609 = vmatpush.bf16.msra.mxu0 %v5669
    %6610 = vmatpush.bf16.msra.mxu0 %v5662
    %6611 = vmatpush.bf16.msra.mxu0 %v5655
    %6612 = vmatpush.bf16.msra.mxu0 %v5648
    %6613 = vmatpush.bf16.msra.mxu0 %v5641
    %6614 = vmatpush.bf16.msra.mxu0 %v5634
    %6615 = vmatmul.bf16.gmra.mxu0 %v3523
    %v6616 = vpop.f32.mrf.mxu0
    %v6617 = vadd.f32 %v6604, %v6616
    %v6618 = vpop.f32.mrf.mxu0
    %6619 = vdwg.mxu0
    %6620 = vmatpush.bf16.msra.mxu0 %v5739
    %6621 = vmatpush.bf16.msra.mxu0 %v5732
    %6622 = vmatpush.bf16.msra.mxu0 %v5725
    %6623 = vmatpush.bf16.msra.mxu0 %v5718
    %6624 = vmatpush.bf16.msra.mxu0 %v5711
    %6625 = vmatpush.bf16.msra.mxu0 %v5704
    %6626 = vmatpush.bf16.msra.mxu0 %v5697
    %6627 = vmatpush.bf16.msra.mxu0 %v5690
    %6628 = vmatmul.bf16.gmra.mxu0 %v3524
    %v6629 = vpop.f32.mrf.mxu0
    %v6630 = vadd.f32 %v6617, %v6629
    %v6631 = vpop.f32.mrf.mxu0
    %6632 = vdwg.mxu0
    %6633 = vmatpush.bf16.msra.mxu0 %v5795
    %6634 = vmatpush.bf16.msra.mxu0 %v5788
    %6635 = vmatpush.bf16.msra.mxu0 %v5781
    %6636 = vmatpush.bf16.msra.mxu0 %v5774
    %6637 = vmatpush.bf16.msra.mxu0 %v5767
    %6638 = vmatpush.bf16.msra.mxu0 %v5760
    %6639 = vmatpush.bf16.msra.mxu0 %v5753
    %6640 = vmatpush.bf16.msra.mxu0 %v5746
    %6641 = vmatmul.bf16.gmra.mxu0 %v3525
    %v6642 = vpop.f32.mrf.mxu0
    %v6643 = vadd.f32 %v6630, %v6642
    %v6644 = vpop.f32.mrf.mxu0
    %6645 = vdwg.mxu0
    %6646 = vmatpush.bf16.msra.mxu0 %v5851
    %6647 = vmatpush.bf16.msra.mxu0 %v5844
    %6648 = vmatpush.bf16.msra.mxu0 %v5837
    %6649 = vmatpush.bf16.msra.mxu0 %v5830
    %6650 = vmatpush.bf16.msra.mxu0 %v5823
    %6651 = vmatpush.bf16.msra.mxu0 %v5816
    %6652 = vmatpush.bf16.msra.mxu0 %v5809
    %6653 = vmatpush.bf16.msra.mxu0 %v5802
    %6654 = vmatmul.bf16.gmra.mxu0 %v3526
    %v6655 = vpop.f32.mrf.mxu0
    %v6656 = vadd.f32 %v6643, %v6655
    %v6657 = vpop.f32.mrf.mxu0
    %6658 = vdwg.mxu0
    %6659 = vmatpush.bf16.msra.mxu0 %v5907
    %6660 = vmatpush.bf16.msra.mxu0 %v5900
    %6661 = vmatpush.bf16.msra.mxu0 %v5893
    %6662 = vmatpush.bf16.msra.mxu0 %v5886
    %6663 = vmatpush.bf16.msra.mxu0 %v5879
    %6664 = vmatpush.bf16.msra.mxu0 %v5872
    %6665 = vmatpush.bf16.msra.mxu0 %v5865
    %6666 = vmatpush.bf16.msra.mxu0 %v5858
    %6667 = vmatmul.bf16.gmra.mxu0 %v3527
    %v6668 = vpop.f32.mrf.mxu0
    %v6669 = vadd.f32 %v6656, %v6668
    %v6670 = vpop.f32.mrf.mxu0
    %6671 = vdwg.mxu0
    %6672 = vmatpush.bf16.msra.mxu0 %v5516
    %6673 = vmatpush.bf16.msra.mxu0 %v5509
    %6674 = vmatpush.bf16.msra.mxu0 %v5502
    %6675 = vmatpush.bf16.msra.mxu0 %v5495
    %6676 = vmatpush.bf16.msra.mxu0 %v5488
    %6677 = vmatpush.bf16.msra.mxu0 %v5481
    %6678 = vmatpush.bf16.msra.mxu0 %v5474
    %6679 = vmatpush.bf16.msra.mxu0 %v5467
    %6680 = vmatmul.bf16.gmra.mxu0 %v3520
    %v6681 = vpop.f32.mrf.mxu0
    %v6682 = vadd.f32 %v4045, %v6681
    %v6683 = vpop.f32.mrf.mxu0
    %6684 = vdwg.mxu0
    %6685 = vmatpush.bf16.msra.mxu0 %v5572
    %6686 = vmatpush.bf16.msra.mxu0 %v5565
    %6687 = vmatpush.bf16.msra.mxu0 %v5558
    %6688 = vmatpush.bf16.msra.mxu0 %v5551
    %6689 = vmatpush.bf16.msra.mxu0 %v5544
    %6690 = vmatpush.bf16.msra.mxu0 %v5537
    %6691 = vmatpush.bf16.msra.mxu0 %v5530
    %6692 = vmatpush.bf16.msra.mxu0 %v5523
    %6693 = vmatmul.bf16.gmra.mxu0 %v3521
    %v6694 = vpop.f32.mrf.mxu0
    %v6695 = vadd.f32 %v6682, %v6694
    %v6696 = vpop.f32.mrf.mxu0
    %6697 = vdwg.mxu0
    %6698 = vmatpush.bf16.msra.mxu0 %v5628
    %6699 = vmatpush.bf16.msra.mxu0 %v5621
    %6700 = vmatpush.bf16.msra.mxu0 %v5614
    %6701 = vmatpush.bf16.msra.mxu0 %v5607
    %6702 = vmatpush.bf16.msra.mxu0 %v5600
    %6703 = vmatpush.bf16.msra.mxu0 %v5593
    %6704 = vmatpush.bf16.msra.mxu0 %v5586
    %6705 = vmatpush.bf16.msra.mxu0 %v5579
    %6706 = vmatmul.bf16.gmra.mxu0 %v3522
    %v6707 = vpop.f32.mrf.mxu0
    %v6708 = vadd.f32 %v6695, %v6707
    %v6709 = vpop.f32.mrf.mxu0
    %6710 = vdwg.mxu0
    %6711 = vmatpush.bf16.msra.mxu0 %v5684
    %6712 = vmatpush.bf16.msra.mxu0 %v5677
    %6713 = vmatpush.bf16.msra.mxu0 %v5670
    %6714 = vmatpush.bf16.msra.mxu0 %v5663
    %6715 = vmatpush.bf16.msra.mxu0 %v5656
    %6716 = vmatpush.bf16.msra.mxu0 %v5649
    %6717 = vmatpush.bf16.msra.mxu0 %v5642
    %6718 = vmatpush.bf16.msra.mxu0 %v5635
    %6719 = vmatmul.bf16.gmra.mxu0 %v3523
    %v6720 = vpop.f32.mrf.mxu0
    %v6721 = vadd.f32 %v6708, %v6720
    %v6722 = vpop.f32.mrf.mxu0
    %6723 = vdwg.mxu0
    %6724 = vmatpush.bf16.msra.mxu0 %v5740
    %6725 = vmatpush.bf16.msra.mxu0 %v5733
    %6726 = vmatpush.bf16.msra.mxu0 %v5726
    %6727 = vmatpush.bf16.msra.mxu0 %v5719
    %6728 = vmatpush.bf16.msra.mxu0 %v5712
    %6729 = vmatpush.bf16.msra.mxu0 %v5705
    %6730 = vmatpush.bf16.msra.mxu0 %v5698
    %6731 = vmatpush.bf16.msra.mxu0 %v5691
    %6732 = vmatmul.bf16.gmra.mxu0 %v3524
    %v6733 = vpop.f32.mrf.mxu0
    %v6734 = vadd.f32 %v6721, %v6733
    %v6735 = vpop.f32.mrf.mxu0
    %6736 = vdwg.mxu0
    %6737 = vmatpush.bf16.msra.mxu0 %v5796
    %6738 = vmatpush.bf16.msra.mxu0 %v5789
    %6739 = vmatpush.bf16.msra.mxu0 %v5782
    %6740 = vmatpush.bf16.msra.mxu0 %v5775
    %6741 = vmatpush.bf16.msra.mxu0 %v5768
    %6742 = vmatpush.bf16.msra.mxu0 %v5761
    %6743 = vmatpush.bf16.msra.mxu0 %v5754
    %6744 = vmatpush.bf16.msra.mxu0 %v5747
    %6745 = vmatmul.bf16.gmra.mxu0 %v3525
    %v6746 = vpop.f32.mrf.mxu0
    %v6747 = vadd.f32 %v6734, %v6746
    %v6748 = vpop.f32.mrf.mxu0
    %6749 = vdwg.mxu0
    %6750 = vmatpush.bf16.msra.mxu0 %v5852
    %6751 = vmatpush.bf16.msra.mxu0 %v5845
    %6752 = vmatpush.bf16.msra.mxu0 %v5838
    %6753 = vmatpush.bf16.msra.mxu0 %v5831
    %6754 = vmatpush.bf16.msra.mxu0 %v5824
    %6755 = vmatpush.bf16.msra.mxu0 %v5817
    %6756 = vmatpush.bf16.msra.mxu0 %v5810
    %6757 = vmatpush.bf16.msra.mxu0 %v5803
    %6758 = vmatmul.bf16.gmra.mxu0 %v3526
    %v6759 = vpop.f32.mrf.mxu0
    %v6760 = vadd.f32 %v6747, %v6759
    %v6761 = vpop.f32.mrf.mxu0
    %6762 = vdwg.mxu0
    %6763 = vmatpush.bf16.msra.mxu0 %v5908
    %6764 = vmatpush.bf16.msra.mxu0 %v5901
    %6765 = vmatpush.bf16.msra.mxu0 %v5894
    %6766 = vmatpush.bf16.msra.mxu0 %v5887
    %6767 = vmatpush.bf16.msra.mxu0 %v5880
    %6768 = vmatpush.bf16.msra.mxu0 %v5873
    %6769 = vmatpush.bf16.msra.mxu0 %v5866
    %6770 = vmatpush.bf16.msra.mxu0 %v5859
    %6771 = vmatmul.bf16.gmra.mxu0 %v3527
    %v6772 = vpop.f32.mrf.mxu0
    %v6773 = vadd.f32 %v6760, %v6772
    %v6774 = vpop.f32.mrf.mxu0
    %6775 = vdwg.mxu0
    %6776 = vmatpush.bf16.msra.mxu0 %v5517
    %6777 = vmatpush.bf16.msra.mxu0 %v5510
    %6778 = vmatpush.bf16.msra.mxu0 %v5503
    %6779 = vmatpush.bf16.msra.mxu0 %v5496
    %6780 = vmatpush.bf16.msra.mxu0 %v5489
    %6781 = vmatpush.bf16.msra.mxu0 %v5482
    %6782 = vmatpush.bf16.msra.mxu0 %v5475
    %6783 = vmatpush.bf16.msra.mxu0 %v5468
    %6784 = vmatmul.bf16.gmra.mxu0 %v3520
    %v6785 = vpop.f32.mrf.mxu0
    %v6786 = vadd.f32 %v4046, %v6785
    %v6787 = vpop.f32.mrf.mxu0
    %6788 = vdwg.mxu0
    %6789 = vmatpush.bf16.msra.mxu0 %v5573
    %6790 = vmatpush.bf16.msra.mxu0 %v5566
    %6791 = vmatpush.bf16.msra.mxu0 %v5559
    %6792 = vmatpush.bf16.msra.mxu0 %v5552
    %6793 = vmatpush.bf16.msra.mxu0 %v5545
    %6794 = vmatpush.bf16.msra.mxu0 %v5538
    %6795 = vmatpush.bf16.msra.mxu0 %v5531
    %6796 = vmatpush.bf16.msra.mxu0 %v5524
    %6797 = vmatmul.bf16.gmra.mxu0 %v3521
    %v6798 = vpop.f32.mrf.mxu0
    %v6799 = vadd.f32 %v6786, %v6798
    %v6800 = vpop.f32.mrf.mxu0
    %6801 = vdwg.mxu0
    %6802 = vmatpush.bf16.msra.mxu0 %v5629
    %6803 = vmatpush.bf16.msra.mxu0 %v5622
    %6804 = vmatpush.bf16.msra.mxu0 %v5615
    %6805 = vmatpush.bf16.msra.mxu0 %v5608
    %6806 = vmatpush.bf16.msra.mxu0 %v5601
    %6807 = vmatpush.bf16.msra.mxu0 %v5594
    %6808 = vmatpush.bf16.msra.mxu0 %v5587
    %6809 = vmatpush.bf16.msra.mxu0 %v5580
    %6810 = vmatmul.bf16.gmra.mxu0 %v3522
    %v6811 = vpop.f32.mrf.mxu0
    %v6812 = vadd.f32 %v6799, %v6811
    %v6813 = vpop.f32.mrf.mxu0
    %6814 = vdwg.mxu0
    %6815 = vmatpush.bf16.msra.mxu0 %v5685
    %6816 = vmatpush.bf16.msra.mxu0 %v5678
    %6817 = vmatpush.bf16.msra.mxu0 %v5671
    %6818 = vmatpush.bf16.msra.mxu0 %v5664
    %6819 = vmatpush.bf16.msra.mxu0 %v5657
    %6820 = vmatpush.bf16.msra.mxu0 %v5650
    %6821 = vmatpush.bf16.msra.mxu0 %v5643
    %6822 = vmatpush.bf16.msra.mxu0 %v5636
    %6823 = vmatmul.bf16.gmra.mxu0 %v3523
    %v6824 = vpop.f32.mrf.mxu0
    %v6825 = vadd.f32 %v6812, %v6824
    %v6826 = vpop.f32.mrf.mxu0
    %6827 = vdwg.mxu0
    %6828 = vmatpush.bf16.msra.mxu0 %v5741
    %6829 = vmatpush.bf16.msra.mxu0 %v5734
    %6830 = vmatpush.bf16.msra.mxu0 %v5727
    %6831 = vmatpush.bf16.msra.mxu0 %v5720
    %6832 = vmatpush.bf16.msra.mxu0 %v5713
    %6833 = vmatpush.bf16.msra.mxu0 %v5706
    %6834 = vmatpush.bf16.msra.mxu0 %v5699
    %6835 = vmatpush.bf16.msra.mxu0 %v5692
    %6836 = vmatmul.bf16.gmra.mxu0 %v3524
    %v6837 = vpop.f32.mrf.mxu0
    %v6838 = vadd.f32 %v6825, %v6837
    %v6839 = vpop.f32.mrf.mxu0
    %6840 = vdwg.mxu0
    %6841 = vmatpush.bf16.msra.mxu0 %v5797
    %6842 = vmatpush.bf16.msra.mxu0 %v5790
    %6843 = vmatpush.bf16.msra.mxu0 %v5783
    %6844 = vmatpush.bf16.msra.mxu0 %v5776
    %6845 = vmatpush.bf16.msra.mxu0 %v5769
    %6846 = vmatpush.bf16.msra.mxu0 %v5762
    %6847 = vmatpush.bf16.msra.mxu0 %v5755
    %6848 = vmatpush.bf16.msra.mxu0 %v5748
    %6849 = vmatmul.bf16.gmra.mxu0 %v3525
    %v6850 = vpop.f32.mrf.mxu0
    %v6851 = vadd.f32 %v6838, %v6850
    %v6852 = vpop.f32.mrf.mxu0
    %6853 = vdwg.mxu0
    %6854 = vmatpush.bf16.msra.mxu0 %v5853
    %6855 = vmatpush.bf16.msra.mxu0 %v5846
    %6856 = vmatpush.bf16.msra.mxu0 %v5839
    %6857 = vmatpush.bf16.msra.mxu0 %v5832
    %6858 = vmatpush.bf16.msra.mxu0 %v5825
    %6859 = vmatpush.bf16.msra.mxu0 %v5818
    %6860 = vmatpush.bf16.msra.mxu0 %v5811
    %6861 = vmatpush.bf16.msra.mxu0 %v5804
    %6862 = vmatmul.bf16.gmra.mxu0 %v3526
    %v6863 = vpop.f32.mrf.mxu0
    %v6864 = vadd.f32 %v6851, %v6863
    %v6865 = vpop.f32.mrf.mxu0
    %6866 = vdwg.mxu0
    %6867 = vmatpush.bf16.msra.mxu0 %v5909
    %6868 = vmatpush.bf16.msra.mxu0 %v5902
    %6869 = vmatpush.bf16.msra.mxu0 %v5895
    %6870 = vmatpush.bf16.msra.mxu0 %v5888
    %6871 = vmatpush.bf16.msra.mxu0 %v5881
    %6872 = vmatpush.bf16.msra.mxu0 %v5874
    %6873 = vmatpush.bf16.msra.mxu0 %v5867
    %6874 = vmatpush.bf16.msra.mxu0 %v5860
    %6875 = vmatmul.bf16.gmra.mxu0 %v3527
    %v6876 = vpop.f32.mrf.mxu0
    %v6877 = vadd.f32 %v6864, %v6876
    %v6878 = vpop.f32.mrf.mxu0
    %6879 = vdwg.mxu0
    %6880 = vmatpush.bf16.msra.mxu0 %v5518
    %6881 = vmatpush.bf16.msra.mxu0 %v5511
    %6882 = vmatpush.bf16.msra.mxu0 %v5504
    %6883 = vmatpush.bf16.msra.mxu0 %v5497
    %6884 = vmatpush.bf16.msra.mxu0 %v5490
    %6885 = vmatpush.bf16.msra.mxu0 %v5483
    %6886 = vmatpush.bf16.msra.mxu0 %v5476
    %6887 = vmatpush.bf16.msra.mxu0 %v5469
    %6888 = vmatmul.bf16.gmra.mxu0 %v3520
    %v6889 = vpop.f32.mrf.mxu0
    %v6890 = vadd.f32 %v4047, %v6889
    %v6891 = vpop.f32.mrf.mxu0
    %6892 = vdwg.mxu0
    %6893 = vmatpush.bf16.msra.mxu0 %v5574
    %6894 = vmatpush.bf16.msra.mxu0 %v5567
    %6895 = vmatpush.bf16.msra.mxu0 %v5560
    %6896 = vmatpush.bf16.msra.mxu0 %v5553
    %6897 = vmatpush.bf16.msra.mxu0 %v5546
    %6898 = vmatpush.bf16.msra.mxu0 %v5539
    %6899 = vmatpush.bf16.msra.mxu0 %v5532
    %6900 = vmatpush.bf16.msra.mxu0 %v5525
    %6901 = vmatmul.bf16.gmra.mxu0 %v3521
    %v6902 = vpop.f32.mrf.mxu0
    %v6903 = vadd.f32 %v6890, %v6902
    %v6904 = vpop.f32.mrf.mxu0
    %6905 = vdwg.mxu0
    %6906 = vmatpush.bf16.msra.mxu0 %v5630
    %6907 = vmatpush.bf16.msra.mxu0 %v5623
    %6908 = vmatpush.bf16.msra.mxu0 %v5616
    %6909 = vmatpush.bf16.msra.mxu0 %v5609
    %6910 = vmatpush.bf16.msra.mxu0 %v5602
    %6911 = vmatpush.bf16.msra.mxu0 %v5595
    %6912 = vmatpush.bf16.msra.mxu0 %v5588
    %6913 = vmatpush.bf16.msra.mxu0 %v5581
    %6914 = vmatmul.bf16.gmra.mxu0 %v3522
    %v6915 = vpop.f32.mrf.mxu0
    %v6916 = vadd.f32 %v6903, %v6915
    %v6917 = vpop.f32.mrf.mxu0
    %6918 = vdwg.mxu0
    %6919 = vmatpush.bf16.msra.mxu0 %v5686
    %6920 = vmatpush.bf16.msra.mxu0 %v5679
    %6921 = vmatpush.bf16.msra.mxu0 %v5672
    %6922 = vmatpush.bf16.msra.mxu0 %v5665
    %6923 = vmatpush.bf16.msra.mxu0 %v5658
    %6924 = vmatpush.bf16.msra.mxu0 %v5651
    %6925 = vmatpush.bf16.msra.mxu0 %v5644
    %6926 = vmatpush.bf16.msra.mxu0 %v5637
    %6927 = vmatmul.bf16.gmra.mxu0 %v3523
    %v6928 = vpop.f32.mrf.mxu0
    %v6929 = vadd.f32 %v6916, %v6928
    %v6930 = vpop.f32.mrf.mxu0
    %6931 = vdwg.mxu0
    %6932 = vmatpush.bf16.msra.mxu0 %v5742
    %6933 = vmatpush.bf16.msra.mxu0 %v5735
    %6934 = vmatpush.bf16.msra.mxu0 %v5728
    %6935 = vmatpush.bf16.msra.mxu0 %v5721
    %6936 = vmatpush.bf16.msra.mxu0 %v5714
    %6937 = vmatpush.bf16.msra.mxu0 %v5707
    %6938 = vmatpush.bf16.msra.mxu0 %v5700
    %6939 = vmatpush.bf16.msra.mxu0 %v5693
    %6940 = vmatmul.bf16.gmra.mxu0 %v3524
    %v6941 = vpop.f32.mrf.mxu0
    %v6942 = vadd.f32 %v6929, %v6941
    %v6943 = vpop.f32.mrf.mxu0
    %6944 = vdwg.mxu0
    %6945 = vmatpush.bf16.msra.mxu0 %v5798
    %6946 = vmatpush.bf16.msra.mxu0 %v5791
    %6947 = vmatpush.bf16.msra.mxu0 %v5784
    %6948 = vmatpush.bf16.msra.mxu0 %v5777
    %6949 = vmatpush.bf16.msra.mxu0 %v5770
    %6950 = vmatpush.bf16.msra.mxu0 %v5763
    %6951 = vmatpush.bf16.msra.mxu0 %v5756
    %6952 = vmatpush.bf16.msra.mxu0 %v5749
    %6953 = vmatmul.bf16.gmra.mxu0 %v3525
    %v6954 = vpop.f32.mrf.mxu0
    %v6955 = vadd.f32 %v6942, %v6954
    %v6956 = vpop.f32.mrf.mxu0
    %6957 = vdwg.mxu0
    %6958 = vmatpush.bf16.msra.mxu0 %v5854
    %6959 = vmatpush.bf16.msra.mxu0 %v5847
    %6960 = vmatpush.bf16.msra.mxu0 %v5840
    %6961 = vmatpush.bf16.msra.mxu0 %v5833
    %6962 = vmatpush.bf16.msra.mxu0 %v5826
    %6963 = vmatpush.bf16.msra.mxu0 %v5819
    %6964 = vmatpush.bf16.msra.mxu0 %v5812
    %6965 = vmatpush.bf16.msra.mxu0 %v5805
    %6966 = vmatmul.bf16.gmra.mxu0 %v3526
    %v6967 = vpop.f32.mrf.mxu0
    %v6968 = vadd.f32 %v6955, %v6967
    %v6969 = vpop.f32.mrf.mxu0
    %6970 = vdwg.mxu0
    %6971 = vmatpush.bf16.msra.mxu0 %v5910
    %6972 = vmatpush.bf16.msra.mxu0 %v5903
    %6973 = vmatpush.bf16.msra.mxu0 %v5896
    %6974 = vmatpush.bf16.msra.mxu0 %v5889
    %6975 = vmatpush.bf16.msra.mxu0 %v5882
    %6976 = vmatpush.bf16.msra.mxu0 %v5875
    %6977 = vmatpush.bf16.msra.mxu0 %v5868
    %6978 = vmatpush.bf16.msra.mxu0 %v5861
    %6979 = vmatmul.bf16.gmra.mxu0 %v3527
    %v6980 = vpop.f32.mrf.mxu0
    %v6981 = vadd.f32 %v6968, %v6980
    %v6982 = vpop.f32.mrf.mxu0
    %6983 = vdwg.mxu0
    %6984 = vmatpush.bf16.msra.mxu0 %v5519
    %6985 = vmatpush.bf16.msra.mxu0 %v5512
    %6986 = vmatpush.bf16.msra.mxu0 %v5505
    %6987 = vmatpush.bf16.msra.mxu0 %v5498
    %6988 = vmatpush.bf16.msra.mxu0 %v5491
    %6989 = vmatpush.bf16.msra.mxu0 %v5484
    %6990 = vmatpush.bf16.msra.mxu0 %v5477
    %6991 = vmatpush.bf16.msra.mxu0 %v5470
    %6992 = vmatmul.bf16.gmra.mxu0 %v3520
    %v6993 = vpop.f32.mrf.mxu0
    %v6994 = vadd.f32 %v4048, %v6993
    %v6995 = vpop.f32.mrf.mxu0
    %6996 = vdwg.mxu0
    %6997 = vmatpush.bf16.msra.mxu0 %v5575
    %6998 = vmatpush.bf16.msra.mxu0 %v5568
    %6999 = vmatpush.bf16.msra.mxu0 %v5561
    %7000 = vmatpush.bf16.msra.mxu0 %v5554
    %7001 = vmatpush.bf16.msra.mxu0 %v5547
    %7002 = vmatpush.bf16.msra.mxu0 %v5540
    %7003 = vmatpush.bf16.msra.mxu0 %v5533
    %7004 = vmatpush.bf16.msra.mxu0 %v5526
    %7005 = vmatmul.bf16.gmra.mxu0 %v3521
    %v7006 = vpop.f32.mrf.mxu0
    %v7007 = vadd.f32 %v6994, %v7006
    %v7008 = vpop.f32.mrf.mxu0
    %7009 = vdwg.mxu0
    %7010 = vmatpush.bf16.msra.mxu0 %v5631
    %7011 = vmatpush.bf16.msra.mxu0 %v5624
    %7012 = vmatpush.bf16.msra.mxu0 %v5617
    %7013 = vmatpush.bf16.msra.mxu0 %v5610
    %7014 = vmatpush.bf16.msra.mxu0 %v5603
    %7015 = vmatpush.bf16.msra.mxu0 %v5596
    %7016 = vmatpush.bf16.msra.mxu0 %v5589
    %7017 = vmatpush.bf16.msra.mxu0 %v5582
    %7018 = vmatmul.bf16.gmra.mxu0 %v3522
    %v7019 = vpop.f32.mrf.mxu0
    %v7020 = vadd.f32 %v7007, %v7019
    %v7021 = vpop.f32.mrf.mxu0
    %7022 = vdwg.mxu0
    %7023 = vmatpush.bf16.msra.mxu0 %v5687
    %7024 = vmatpush.bf16.msra.mxu0 %v5680
    %7025 = vmatpush.bf16.msra.mxu0 %v5673
    %7026 = vmatpush.bf16.msra.mxu0 %v5666
    %7027 = vmatpush.bf16.msra.mxu0 %v5659
    %7028 = vmatpush.bf16.msra.mxu0 %v5652
    %7029 = vmatpush.bf16.msra.mxu0 %v5645
    %7030 = vmatpush.bf16.msra.mxu0 %v5638
    %7031 = vmatmul.bf16.gmra.mxu0 %v3523
    %v7032 = vpop.f32.mrf.mxu0
    %v7033 = vadd.f32 %v7020, %v7032
    %v7034 = vpop.f32.mrf.mxu0
    %7035 = vdwg.mxu0
    %7036 = vmatpush.bf16.msra.mxu0 %v5743
    %7037 = vmatpush.bf16.msra.mxu0 %v5736
    %7038 = vmatpush.bf16.msra.mxu0 %v5729
    %7039 = vmatpush.bf16.msra.mxu0 %v5722
    %7040 = vmatpush.bf16.msra.mxu0 %v5715
    %7041 = vmatpush.bf16.msra.mxu0 %v5708
    %7042 = vmatpush.bf16.msra.mxu0 %v5701
    %7043 = vmatpush.bf16.msra.mxu0 %v5694
    %7044 = vmatmul.bf16.gmra.mxu0 %v3524
    %v7045 = vpop.f32.mrf.mxu0
    %v7046 = vadd.f32 %v7033, %v7045
    %v7047 = vpop.f32.mrf.mxu0
    %7048 = vdwg.mxu0
    %7049 = vmatpush.bf16.msra.mxu0 %v5799
    %7050 = vmatpush.bf16.msra.mxu0 %v5792
    %7051 = vmatpush.bf16.msra.mxu0 %v5785
    %7052 = vmatpush.bf16.msra.mxu0 %v5778
    %7053 = vmatpush.bf16.msra.mxu0 %v5771
    %7054 = vmatpush.bf16.msra.mxu0 %v5764
    %7055 = vmatpush.bf16.msra.mxu0 %v5757
    %7056 = vmatpush.bf16.msra.mxu0 %v5750
    %7057 = vmatmul.bf16.gmra.mxu0 %v3525
    %v7058 = vpop.f32.mrf.mxu0
    %v7059 = vadd.f32 %v7046, %v7058
    %v7060 = vpop.f32.mrf.mxu0
    %7061 = vdwg.mxu0
    %7062 = vmatpush.bf16.msra.mxu0 %v5855
    %7063 = vmatpush.bf16.msra.mxu0 %v5848
    %7064 = vmatpush.bf16.msra.mxu0 %v5841
    %7065 = vmatpush.bf16.msra.mxu0 %v5834
    %7066 = vmatpush.bf16.msra.mxu0 %v5827
    %7067 = vmatpush.bf16.msra.mxu0 %v5820
    %7068 = vmatpush.bf16.msra.mxu0 %v5813
    %7069 = vmatpush.bf16.msra.mxu0 %v5806
    %7070 = vmatmul.bf16.gmra.mxu0 %v3526
    %v7071 = vpop.f32.mrf.mxu0
    %v7072 = vadd.f32 %v7059, %v7071
    %v7073 = vpop.f32.mrf.mxu0
    %7074 = vdwg.mxu0
    %7075 = vmatpush.bf16.msra.mxu0 %v5911
    %7076 = vmatpush.bf16.msra.mxu0 %v5904
    %7077 = vmatpush.bf16.msra.mxu0 %v5897
    %7078 = vmatpush.bf16.msra.mxu0 %v5890
    %7079 = vmatpush.bf16.msra.mxu0 %v5883
    %7080 = vmatpush.bf16.msra.mxu0 %v5876
    %7081 = vmatpush.bf16.msra.mxu0 %v5869
    %7082 = vmatpush.bf16.msra.mxu0 %v5862
    %7083 = vmatmul.bf16.gmra.mxu0 %v3527
    %v7084 = vpop.f32.mrf.mxu0
    %v7085 = vadd.f32 %v7072, %v7084
    %v7086 = vpop.f32.mrf.mxu0
    %7087 = vdwg.mxu0
    %v7088 = vtanh.pop %v6461
    %v7089 = vtanh.pop %v6565
    %v7090 = vtanh.pop %v6669
    %v7091 = vtanh.pop %v6773
    %v7092 = vtanh.pop %v6877
    %v7093 = vtanh.pop %v6981
    %v7094 = vtanh.pop %v7085
    %7095 = vst [vmem:[#allocation25] sm:$0xff] %v7088
    %7096 = vst [vmem:[#allocation25 + $0x8] sm:$0xff] %v7089
    %7097 = vst [vmem:[#allocation25 + $0x10] sm:$0xff] %v7090
    %7098 = vst [vmem:[#allocation25 + $0x18] sm:$0xff] %v7091
    %7099 = vst [vmem:[#allocation25 + $0x20] sm:$0xff] %v7092
    %7100 = vst [vmem:[#allocation25 + $0x28] sm:$0xff] %v7093
    %7101 = vst [vmem:[#allocation25 + $0x30] sm:$0xff] %v7094
    // Predicated region
    $region114: #{tpu_custom_call.1} parent=1 // pred_check
      _
    $region115: #{tpu_custom_call.1} parent=1 // pred_check_branch
      %7103 = sbr.rel (0) target = $region117
    $region116: #{tpu_custom_call.1} parent=1 // pred_region
      %7105 = vsyncadd [#allocation4], 0
      %s7107 = sshll.u32 [#allocation25], 4
      %s7108 = int_to_ptr.vmem [resolvable:$true] %s7107
      %s7109 = sshll.u32 %s14, 4
      %s7110 = int_to_ptr.hbm [resolvable:$true] %s7109
      %7112 = dma.vmem_to_hbm [thread:$0]  %s7108, 896, %s7110, [#allocation4]
    $region117: #{tpu_custom_call.1} parent=1 // pred_fallthru
      _
    // Predicated region
    $region118: #{tpu_custom_call.1} parent=1 // pred_check
      _
    $region119: #{tpu_custom_call.1} parent=1 // pred_check_branch
      %7114 = sbr.rel (0) target = $region121
    $region120: #{tpu_custom_call.1} parent=1 // pred_region
      %7116 = dma.done [#allocation4], 896
    $region121: #{tpu_custom_call.1} parent=1 // pred_fallthru
      _
    %7117 = vsyncpa [#allocation3], 1
    %7118 = vsyncpa [#allocation6], 1
    %7119 = vsyncpa [#allocation9], 1
    %7120 = vsyncpa [#allocation12], 1
    %7121 = vsyncpa [#allocation15], 1
    %7122 = vsyncpa [#allocation18], 1
    %7123 = vsyncpa [#allocation21], 1
    %7124 = vsyncpa [#allocation24], 1
    %7125 = vsyncpa [#allocation4], 1

</llo_original>
